<compile_context>
chip_gen: v6e
topology: v6e:2x2x1
jax: 0.10.0
libtpu: 0.0.40
codegen_flags: <defaults>
</compile_context>

<pallas_src>
import numpy as np
import jax
import jax.numpy as jnp
from jax.experimental import pallas as pl
from jax.experimental.pallas import tpu as pltpu

ROW_TILE = 256        # frame rows per grid step (multiple of 16 for bf16 tiles)
NUM_SPLITS = 2        # leading parallel axis (uses both TCs on v7x)
EPS_CLAMP = 1e-8      # matches torch.clamp(M**2 + P**2, min=1e-08) in TorchSTFT


# --------------------------------- kernel -----------------------------------

def _stft_loss_kernel(fh_ref, fy_ref, basis_hbm, out_ref,
                      basis_vmem, acc_abs, acc_sqd, acc_sqy):
    j = pl.program_id(1)
    last = pl.num_programs(1) - 1

    @pl.when(j == 0)
    def _init():
        # Grid-invariant basis: load once per split into single-buffered VMEM.
        pltpu.sync_copy(basis_hbm, basis_vmem)
        acc_abs[...] = jnp.zeros_like(acc_abs)
        acc_sqd[...] = jnp.zeros_like(acc_sqd)
        acc_sqy[...] = jnp.zeros_like(acc_sqy)

    basis = basis_vmem[...]                                   # [n_fft, 2*NFP] bf16
    # One MXU matmul per signal against the shared cos|sin basis (bf16 in, f32 acc).
    oh = jnp.dot(fh_ref[...], basis, preferred_element_type=jnp.float32)
    oy = jnp.dot(fy_ref[...], basis, preferred_element_type=jnp.float32)

    rows, two_nfp = oh.shape
    nfp = two_nfp // 2
    g = rows // 8

    re_h, im_h = oh[:, :nfp], oh[:, nfp:]
    re_y, im_y = oy[:, :nfp], oy[:, nfp:]

    p_h = jnp.maximum(re_h * re_h + im_h * im_h, EPS_CLAMP)
    p_y = jnp.maximum(re_y * re_y + im_y * im_y, EPS_CLAMP)
    s_h = jnp.sqrt(p_h)
    s_y = jnp.sqrt(p_y)

    # |log s_y - log s_h| == 0.5 * |log p_y - log p_h|  (0.5 applied on host)
    t_abs = jnp.abs(jnp.log(p_y) - jnp.log(p_h))
    t_sqd = (s_y - s_h) ** 2
    t_sqy = p_y                                               # = s_y**2 (clamped power)

    # Row-group reduce with plain VPU adds; keep lanes dense in the accumulators.
    acc_abs[...] += jnp.sum(t_abs.reshape(g, 8, nfp), axis=0)
    acc_sqd[...] += jnp.sum(t_sqd.reshape(g, 8, nfp), axis=0)
    acc_sqy[...] += jnp.sum(t_sqy.reshape(g, 8, nfp), axis=0)

    # ---- column-0 fixup ----------------------------------------------------
    # Column 0 of the paired layout combines DC (real section, col 0) with the
    # Nyquist bin (stored in the otherwise-zero imag-DC slot).  Add the two
    # bins properly and subtract the wrong combined term (exact, reuses p/s).
    dc_h, ny_h = re_h[:, 0:1], im_h[:, 0:1]
    dc_y, ny_y = re_y[:, 0:1], im_y[:, 0:1]
    pdc_h = jnp.maximum(dc_h * dc_h, EPS_CLAMP)
    pny_h = jnp.maximum(ny_h * ny_h, EPS_CLAMP)
    pdc_y = jnp.maximum(dc_y * dc_y, EPS_CLAMP)
    pny_y = jnp.maximum(ny_y * ny_y, EPS_CLAMP)
    pw_h, pw_y = p_h[:, 0:1], p_y[:, 0:1]
    sw_h, sw_y = s_h[:, 0:1], s_y[:, 0:1]
    sdc_h, sdc_y = jnp.sqrt(pdc_h), jnp.sqrt(pdc_y)
    sny_h, sny_y = jnp.sqrt(pny_h), jnp.sqrt(pny_y)

    c_abs = (jnp.abs(jnp.log(pdc_y) - jnp.log(pdc_h))
             + jnp.abs(jnp.log(pny_y) - jnp.log(pny_h))
             - jnp.abs(jnp.log(pw_y) - jnp.log(pw_h)))
    c_sqd = (sdc_y - sdc_h) ** 2 + (sny_y - sny_h) ** 2 - (sw_y - sw_h) ** 2
    c_sqy = pdc_y + pny_y - pw_y

    acc_abs[:, 0:1] += jnp.sum(c_abs.reshape(g, 8, 1), axis=0)
    acc_sqd[:, 0:1] += jnp.sum(c_sqd.reshape(g, 8, 1), axis=0)
    acc_sqy[:, 0:1] += jnp.sum(c_sqy.reshape(g, 8, 1), axis=0)

    # Final cross-lane reduce + packed lane-dense output, only on the last step.
    @pl.when(j == last)
    def _finalize():
        s_abs = jnp.sum(acc_abs[...])
        s_sqd = jnp.sum(acc_sqd[...])
        s_sqy = jnp.sum(acc_sqy[...])
        row_id = jax.lax.broadcasted_iota(jnp.int32, (8, 128), 0)
        packed = jnp.where(row_id == 0, s_abs,
                 jnp.where(row_id == 1, s_sqd,
                 jnp.where(row_id == 2, s_sqy, 0.0)))
        out_ref[0] = packed


# ----------------------------- host-side glue --------------------------------

def _hann_window(win_length):
    # torch.hann_window default is periodic=True
    n = np.arange(win_length, dtype=np.float64)
    return 0.5 - 0.5 * np.cos(2.0 * np.pi * n / win_length)


def _windowed_dft_basis(n_fft, win_length):
    """[n_fft, 2*NFP] bf16 basis: cos bins 0..NH-1 | (Nyquist-cos, -sin bins 1..NH-1)."""
    w = np.zeros(n_fft, dtype=np.float64)
    left = (n_fft - win_length) // 2                # torch.stft center-pads the window
    w[left:left + win_length] = _hann_window(win_length)

    nh = n_fft // 2                                 # "paired" bins 0..NH-1
    nfp = max(128, ((nh + 127) // 128) * 128)       # lane-aligned (== NH for n_fft >= 256)

    n = np.arange(n_fft, dtype=np.float64)[:, None]
    k = np.arange(nh, dtype=np.float64)[None, :]
    ang = 2.0 * np.pi * n * k / n_fft
    cos_b = w[:, None] * np.cos(ang)
    sin_b = -w[:, None] * np.sin(ang)
    nyq = w * np.cos(np.pi * np.arange(n_fft, dtype=np.float64))   # bin n_fft/2 (imag == 0)

    basis = np.zeros((n_fft, 2 * nfp), np.float32)
    basis[:, :nh] = cos_b
    basis[:, nfp] = nyq                             # imag-DC slot repurposed (sin(0) == 0)
    basis[:, nfp + 1:nfp + nh] = sin_b[:, 1:]
    return jnp.asarray(basis, jnp.bfloat16), nh, nfp


def _frames(x, n_fft, hop_length):
    # x: [B, T]; torch.stft(center=True, pad_mode='reflect')
    # TODO(synk): stream the padded waveform and build overlapping frames in-kernel
    # with pl.ds to avoid the ~4x framed-array HBM inflation (reviewer item).
    pad = n_fft // 2
    xp = jnp.pad(x, ((0, 0), (pad, pad)), mode="reflect")
    num_frames = 1 + (xp.shape[1] - n_fft) // hop_length
    idx = (jnp.arange(num_frames) * hop_length)[:, None] + jnp.arange(n_fft)[None, :]
    fr = xp[:, idx]                                           # [B, num_frames, n_fft]
    return fr.reshape(-1, n_fft).astype(jnp.bfloat16), num_frames


def stft_loss(y_hat, y, n_fft, hop_length, win_length,
              row_tile=ROW_TILE, num_splits=NUM_SPLITS):
    y_hat = jnp.asarray(y_hat, jnp.float32)
    y = jnp.asarray(y, jnp.float32)
    if y_hat.ndim == 3:
        y_hat = y_hat[:, 0, :]
    if y.ndim == 3:
        y = y[:, 0, :]

    basis, nh, nfp = _windowed_dft_basis(n_fft, win_length)
    n_freq = nh + 1

    fh, num_frames = _frames(y_hat, n_fft, hop_length)
    fy, _ = _frames(y, n_fft, hop_length)
    n_rows = fh.shape[0]

    n_tiles = -(-n_rows // row_tile)
    n_tiles = num_splits * (-(-n_tiles // num_splits))
    nj = n_tiles // num_splits
    n_rows_pad = n_tiles * row_tile

    fh = jnp.pad(fh, ((0, n_rows_pad - n_rows), (0, 0)))
    fy = jnp.pad(fy, ((0, n_rows_pad - n_rows), (0, 0)))

    # VMEM budget hint (frame double-buffers + single-buffered basis + accumulators).
    est = (2 * 2 * row_tile * n_fft * 2
           + n_fft * 2 * nfp * 2
           + 3 * 8 * nfp * 4
           + 2 * 8 * 128 * 4)
    vmem_limit = int(min(96 * 2**20, 32 * 2**20 + 2 * est))

    out = pl.pallas_call(
        _stft_loss_kernel,
        out_shape=jax.ShapeDtypeStruct((num_splits, 8, 128), jnp.float32),
        grid_spec=pltpu.PrefetchScalarGridSpec(
            num_scalar_prefetch=0,
            grid=(num_splits, nj),
            in_specs=[
                pl.BlockSpec((row_tile, n_fft), lambda c, j: (c * nj + j, 0)),
                pl.BlockSpec((row_tile, n_fft), lambda c, j: (c * nj + j, 0)),
                pl.BlockSpec(memory_space=pl.ANY),            # basis stays in HBM
            ],
            out_specs=pl.BlockSpec((1, 8, 128), lambda c, j: (c, 0, 0)),
            scratch_shapes=[
                pltpu.VMEM((n_fft, 2 * nfp), jnp.bfloat16),   # single-buffered basis
                pltpu.VMEM((8, nfp), jnp.float32),            # acc |log diff|
                pltpu.VMEM((8, nfp), jnp.float32),            # acc (s_y - s_hat)^2
                pltpu.VMEM((8, nfp), jnp.float32),            # acc s_y^2
            ],
        ),
        compiler_params=pltpu.CompilerParams(
            dimension_semantics=("parallel", "arbitrary"),
            vmem_limit_bytes=vmem_limit),
    )(fh, fy, basis)

    sum_abs = jnp.sum(out[:, 0, 0])
    sum_sqd = jnp.sum(out[:, 1, 0])
    sum_sqy = jnp.sum(out[:, 2, 0])

    # Padded rows/columns contribute 0 to sum_abs/sum_sqd and exactly eps each to
    # sum_sqy (known count) -> subtract on the host instead of masking in-kernel.
    pad_count = n_rows * (nfp - nh) + (n_rows_pad - n_rows) * (nfp + 1)
    sum_sqy = sum_sqy - jnp.float32(EPS_CLAMP * pad_count)

    n_elems = jnp.float32(y.shape[0] * n_freq * num_frames)
    loss_mag = 0.5 * sum_abs / n_elems                        # F.l1_loss(log y_M, log y_hat_M)
    loss_sc = jnp.sqrt(sum_sqd) / jnp.sqrt(sum_sqy)           # ||y_M - y_hat_M||_F / ||y_M||_F
    return loss_mag, loss_sc


# ---------------- pure-JAX reference (sanity check only) ---------------------

def _reference(y_hat, y, n_fft, hop_length, win_length):
    def spec(x):
        pad = n_fft // 2
        xp = jnp.pad(x, ((0, 0), (pad, pad)), mode="reflect")
        num_frames = 1 + (xp.shape[1] - n_fft) // hop_length
        idx = (jnp.arange(num_frames) * hop_length)[:, None] + jnp.arange(n_fft)[None, :]
        fr = xp[:, idx]
        w = np.zeros(n_fft, np.float64)
        left = (n_fft - win_length) // 2
        w[left:left + win_length] = _hann_window(win_length)
        fr = fr * jnp.asarray(w, jnp.float32)
        f = jnp.fft.rfft(fr, n=n_fft, axis=-1)
        return jnp.sqrt(jnp.maximum(jnp.real(f) ** 2 + jnp.imag(f) ** 2, EPS_CLAMP))

    s_hat = spec(y_hat)
    s_y = spec(y)
    loss_mag = jnp.mean(jnp.abs(jnp.log(s_y) - jnp.log(s_hat)))
    loss_sc = jnp.sqrt(jnp.sum((s_y - s_hat) ** 2)) / jnp.sqrt(jnp.sum(s_y ** 2))
    return loss_mag, loss_sc


if __name__ == "__main__":
    n_fft, hop_length, win_length = 128, 32, 96
    B, T = 2, 256
    key = jax.random.PRNGKey(0)
    k1, k2 = jax.random.split(key)
    y = jax.random.normal(k1, (B, T), jnp.float32)
    y_hat = y + 0.1 * jax.random.normal(k2, (B, T), jnp.float32)

    loss_mag, loss_sc = stft_loss(y_hat, y, n_fft, hop_length, win_length)
    jax.block_until_ready((loss_mag, loss_sc))

    ref_mag, ref_sc = _reference(y_hat, y, n_fft, hop_length, win_length)
    # bf16 MXU operands (per perf review) -> slightly looser tolerance than pure f32.
    assert np.allclose(float(loss_mag), float(ref_mag), rtol=3e-2, atol=3e-3), \
        (float(loss_mag), float(ref_mag))
    assert np.allclose(float(loss_sc), float(ref_sc), rtol=3e-2, atol=3e-3), \
        (float(loss_sc), float(ref_sc))
    print("KERNEL_OK")
</pallas_src>

<mosaic_0001>
module attributes {stable_mosaic.version = 11 : i64} {
  func.func @_stft_loss_kernel(%arg0: i32, %arg1: i32, %arg2: memref<256x128xbf16, #tpu.memory_space<vmem>>, %arg3: memref<256x128xbf16, #tpu.memory_space<vmem>>, %arg4: memref<128x256xbf16, #tpu.memory_space<any>>, %arg5: memref<1x8x128xf32, #tpu.memory_space<vmem>>, %arg6: memref<128x256xbf16, #tpu.memory_space<vmem>>, %arg7: memref<8x128xf32, #tpu.memory_space<vmem>>, %arg8: memref<8x128xf32, #tpu.memory_space<vmem>>, %arg9: memref<8x128xf32, #tpu.memory_space<vmem>>) attributes {dimension_semantics = [#tpu.dimension_semantics<parallel>, #tpu.dimension_semantics<arbitrary>], iteration_bounds = array<i64: 2, 1>, scalar_prefetch = 0 : i64, scratch_operands = 4 : i64, tpu.core_type = #tpu.core_type<tc>, window_params = [{transform_indices = @transform_0, window_bounds = array<i64: 256, 128>}, {transform_indices = @transform_1, window_bounds = array<i64: 256, 128>}, {}, {transform_indices = @transform_3, window_bounds = array<i64: 1, 8, 128>}]} {
    %c0_i32 = arith.constant 0 : i32
    %0 = arith.cmpi eq, %arg1, %c0_i32 : i32
    %1 = arith.extui %0 : i1 to i32
    %c0_i32_0 = arith.constant 0 : i32
    %2 = arith.cmpi ne, %1, %c0_i32_0 : i32
    scf.if %2 {
      "tpu.region"() ({
        %117 = tpu.sem_alloc : memref<!tpu.dma_semaphore, #tpu.memory_space<semaphore_mem>>
        tpu.enqueue_dma source(%arg4 : memref<128x256xbf16, #tpu.memory_space<any>>) target(%arg6 : memref<128x256xbf16, #tpu.memory_space<vmem>>) target_semaphore(%117 : memref<!tpu.dma_semaphore, #tpu.memory_space<semaphore_mem>>)
        tpu.wait_dma2 semaphore(%117 : memref<!tpu.dma_semaphore, #tpu.memory_space<semaphore_mem>>) src(%arg4 : memref<128x256xbf16, #tpu.memory_space<any>>) dst(%arg6 : memref<128x256xbf16, #tpu.memory_space<vmem>>)
        tpu.yield
      }) : () -> ()
      %cst_45 = arith.constant 0.000000e+00 : f32
      %111 = vector.broadcast %cst_45 : f32 to vector<8x128xf32>
      %c0_46 = arith.constant 0 : index
      %c0_47 = arith.constant 0 : index
      %112 = vector.load %arg7[%c0_46, %c0_47] : memref<8x128xf32, #tpu.memory_space<vmem>>, vector<8x128xf32>
      tpu.vector_store %arg7[%c0_46, %c0_47], %111 {strides = array<i32>} : memref<8x128xf32, #tpu.memory_space<vmem>>, vector<8x128xf32>,
      %cst_48 = arith.constant 0.000000e+00 : f32
      %113 = vector.broadcast %cst_48 : f32 to vector<8x128xf32>
      %c0_49 = arith.constant 0 : index
      %c0_50 = arith.constant 0 : index
      %114 = vector.load %arg8[%c0_49, %c0_50] : memref<8x128xf32, #tpu.memory_space<vmem>>, vector<8x128xf32>
      tpu.vector_store %arg8[%c0_49, %c0_50], %113 {strides = array<i32>} : memref<8x128xf32, #tpu.memory_space<vmem>>, vector<8x128xf32>,
      %cst_51 = arith.constant 0.000000e+00 : f32
      %115 = vector.broadcast %cst_51 : f32 to vector<8x128xf32>
      %c0_52 = arith.constant 0 : index
      %c0_53 = arith.constant 0 : index
      %116 = vector.load %arg9[%c0_52, %c0_53] : memref<8x128xf32, #tpu.memory_space<vmem>>, vector<8x128xf32>
      tpu.vector_store %arg9[%c0_52, %c0_53], %115 {strides = array<i32>} : memref<8x128xf32, #tpu.memory_space<vmem>>, vector<8x128xf32>,
    } else {
    }
    %c0 = arith.constant 0 : index
    %c0_1 = arith.constant 0 : index
    %3 = vector.load %arg6[%c0, %c0_1] : memref<128x256xbf16, #tpu.memory_space<vmem>>, vector<128x256xbf16>
    %c0_2 = arith.constant 0 : index
    %c0_3 = arith.constant 0 : index
    %4 = vector.load %arg2[%c0_2, %c0_3] : memref<256x128xbf16, #tpu.memory_space<vmem>>, vector<256x128xbf16>
    %cst = arith.constant dense<0.000000e+00> : vector<256x256xf32>
    %5 = tpu.matmul %4, %3, %cst {dimension_numbers = #tpu.dot_dimension_numbers<[1], [0], [0], [1], [0, 0, 1, 1], [], []>} : vector<256x128xbf16>, vector<128x256xbf16>, vector<256x256xf32> -> vector<256x256xf32>
    %c0_4 = arith.constant 0 : index
    %c0_5 = arith.constant 0 : index
    %6 = vector.load %arg3[%c0_4, %c0_5] : memref<256x128xbf16, #tpu.memory_space<vmem>>, vector<256x128xbf16>
    %cst_6 = arith.constant dense<0.000000e+00> : vector<256x256xf32>
    %7 = tpu.matmul %6, %3, %cst_6 {dimension_numbers = #tpu.dot_dimension_numbers<[1], [0], [0], [1], [0, 0, 1, 1], [], []>} : vector<256x128xbf16>, vector<128x256xbf16>, vector<256x256xf32> -> vector<256x256xf32>
    %8 = vector.extract_strided_slice %5 {offsets = [0, 0], sizes = [256, 128], strides = [1, 1]} : vector<256x256xf32> to vector<256x128xf32>
    %9 = vector.extract_strided_slice %5 {offsets = [0, 128], sizes = [256, 128], strides = [1, 1]} : vector<256x256xf32> to vector<256x128xf32>
    %10 = vector.extract_strided_slice %7 {offsets = [0, 0], sizes = [256, 128], strides = [1, 1]} : vector<256x256xf32> to vector<256x128xf32>
    %11 = vector.extract_strided_slice %7 {offsets = [0, 128], sizes = [256, 128], strides = [1, 1]} : vector<256x256xf32> to vector<256x128xf32>
    %12 = arith.mulf %8, %8 : vector<256x128xf32>
    %13 = arith.mulf %9, %9 : vector<256x128xf32>
    %14 = arith.addf %12, %13 : vector<256x128xf32>
    %cst_7 = arith.constant 9.99999993E-9 : f32
    %15 = vector.broadcast %cst_7 : f32 to vector<256x128xf32>
    %16 = arith.maximumf %14, %15 : vector<256x128xf32>
    %17 = arith.mulf %10, %10 : vector<256x128xf32>
    %18 = arith.mulf %11, %11 : vector<256x128xf32>
    %19 = arith.addf %17, %18 : vector<256x128xf32>
    %cst_8 = arith.constant 9.99999993E-9 : f32
    %20 = vector.broadcast %cst_8 : f32 to vector<256x128xf32>
    %21 = arith.maximumf %19, %20 : vector<256x128xf32>
    %22 = math.sqrt %16 : vector<256x128xf32>
    %23 = math.sqrt %21 : vector<256x128xf32>
    %24 = math.log %21 : vector<256x128xf32>
    %25 = math.log %16 : vector<256x128xf32>
    %26 = arith.subf %24, %25 : vector<256x128xf32>
    %27 = math.absf %26 : vector<256x128xf32>
    %28 = arith.subf %23, %22 : vector<256x128xf32>
    %29 = arith.mulf %28, %28 : vector<256x128xf32>
    %c0_9 = arith.constant 0 : index
    %c0_10 = arith.constant 0 : index
    %30 = vector.load %arg7[%c0_9, %c0_10] : memref<8x128xf32, #tpu.memory_space<vmem>>, vector<8x128xf32>
    %31 = vector.shape_cast %27 : vector<256x128xf32> to vector<32x8x128xf32>
    %cst_11 = arith.constant dense<0.000000e+00> : vector<8x128xf32>
    %32 = vector.multi_reduction <add>, %31, %cst_11 [0] : vector<32x8x128xf32> to vector<8x128xf32>
    %33 = arith.addf %30, %32 : vector<8x128xf32>
    %c0_12 = arith.constant 0 : index
    %c0_13 = arith.constant 0 : index
    %34 = vector.load %arg7[%c0_12, %c0_13] : memref<8x128xf32, #tpu.memory_space<vmem>>, vector<8x128xf32>
    tpu.vector_store %arg7[%c0_12, %c0_13], %33 {strides = array<i32>} : memref<8x128xf32, #tpu.memory_space<vmem>>, vector<8x128xf32>,
    %c0_14 = arith.constant 0 : index
    %c0_15 = arith.constant 0 : index
    %35 = vector.load %arg8[%c0_14, %c0_15] : memref<8x128xf32, #tpu.memory_space<vmem>>, vector<8x128xf32>
    %36 = vector.shape_cast %29 : vector<256x128xf32> to vector<32x8x128xf32>
    %cst_16 = arith.constant dense<0.000000e+00> : vector<8x128xf32>
    %37 = vector.multi_reduction <add>, %36, %cst_16 [0] : vector<32x8x128xf32> to vector<8x128xf32>
    %38 = arith.addf %35, %37 : vector<8x128xf32>
    %c0_17 = arith.constant 0 : index
    %c0_18 = arith.constant 0 : index
    %39 = vector.load %arg8[%c0_17, %c0_18] : memref<8x128xf32, #tpu.memory_space<vmem>>, vector<8x128xf32>
    tpu.vector_store %arg8[%c0_17, %c0_18], %38 {strides = array<i32>} : memref<8x128xf32, #tpu.memory_space<vmem>>, vector<8x128xf32>,
    %c0_19 = arith.constant 0 : index
    %c0_20 = arith.constant 0 : index
    %40 = vector.load %arg9[%c0_19, %c0_20] : memref<8x128xf32, #tpu.memory_space<vmem>>, vector<8x128xf32>
    %41 = vector.shape_cast %21 : vector<256x128xf32> to vector<32x8x128xf32>
    %cst_21 = arith.constant dense<0.000000e+00> : vector<8x128xf32>
    %42 = vector.multi_reduction <add>, %41, %cst_21 [0] : vector<32x8x128xf32> to vector<8x128xf32>
    %43 = arith.addf %40, %42 : vector<8x128xf32>
    %c0_22 = arith.constant 0 : index
    %c0_23 = arith.constant 0 : index
    %44 = vector.load %arg9[%c0_22, %c0_23] : memref<8x128xf32, #tpu.memory_space<vmem>>, vector<8x128xf32>
    tpu.vector_store %arg9[%c0_22, %c0_23], %43 {strides = array<i32>} : memref<8x128xf32, #tpu.memory_space<vmem>>, vector<8x128xf32>,
    %45 = vector.extract_strided_slice %8 {offsets = [0, 0], sizes = [256, 1], strides = [1, 1]} : vector<256x128xf32> to vector<256x1xf32>
    %46 = vector.extract_strided_slice %9 {offsets = [0, 0], sizes = [256, 1], strides = [1, 1]} : vector<256x128xf32> to vector<256x1xf32>
    %47 = vector.extract_strided_slice %10 {offsets = [0, 0], sizes = [256, 1], strides = [1, 1]} : vector<256x128xf32> to vector<256x1xf32>
    %48 = vector.extract_strided_slice %11 {offsets = [0, 0], sizes = [256, 1], strides = [1, 1]} : vector<256x128xf32> to vector<256x1xf32>
    %49 = arith.mulf %45, %45 : vector<256x1xf32>
    %cst_24 = arith.constant 9.99999993E-9 : f32
    %50 = vector.broadcast %cst_24 : f32 to vector<256x1xf32>
    %51 = arith.maximumf %49, %50 : vector<256x1xf32>
    %52 = arith.mulf %46, %46 : vector<256x1xf32>
    %cst_25 = arith.constant 9.99999993E-9 : f32
    %53 = vector.broadcast %cst_25 : f32 to vector<256x1xf32>
    %54 = arith.maximumf %52, %53 : vector<256x1xf32>
    %55 = arith.mulf %47, %47 : vector<256x1xf32>
    %cst_26 = arith.constant 9.99999993E-9 : f32
    %56 = vector.broadcast %cst_26 : f32 to vector<256x1xf32>
    %57 = arith.maximumf %55, %56 : vector<256x1xf32>
    %58 = arith.mulf %48, %48 : vector<256x1xf32>
    %cst_27 = arith.constant 9.99999993E-9 : f32
    %59 = vector.broadcast %cst_27 : f32 to vector<256x1xf32>
    %60 = arith.maximumf %58, %59 : vector<256x1xf32>
    %61 = vector.extract_strided_slice %16 {offsets = [0, 0], sizes = [256, 1], strides = [1, 1]} : vector<256x128xf32> to vector<256x1xf32>
    %62 = vector.extract_strided_slice %21 {offsets = [0, 0], sizes = [256, 1], strides = [1, 1]} : vector<256x128xf32> to vector<256x1xf32>
    %63 = vector.extract_strided_slice %22 {offsets = [0, 0], sizes = [256, 1], strides = [1, 1]} : vector<256x128xf32> to vector<256x1xf32>
    %64 = vector.extract_strided_slice %23 {offsets = [0, 0], sizes = [256, 1], strides = [1, 1]} : vector<256x128xf32> to vector<256x1xf32>
    %65 = math.sqrt %51 : vector<256x1xf32>
    %66 = math.sqrt %57 : vector<256x1xf32>
    %67 = math.sqrt %54 : vector<256x1xf32>
    %68 = math.sqrt %60 : vector<256x1xf32>
    %69 = math.log %57 : vector<256x1xf32>
    %70 = math.log %51 : vector<256x1xf32>
    %71 = arith.subf %69, %70 : vector<256x1xf32>
    %72 = math.absf %71 : vector<256x1xf32>
    %73 = math.log %60 : vector<256x1xf32>
    %74 = math.log %54 : vector<256x1xf32>
    %75 = arith.subf %73, %74 : vector<256x1xf32>
    %76 = math.absf %75 : vector<256x1xf32>
    %77 = arith.addf %72, %76 : vector<256x1xf32>
    %78 = math.log %62 : vector<256x1xf32>
    %79 = math.log %61 : vector<256x1xf32>
    %80 = arith.subf %78, %79 : vector<256x1xf32>
    %81 = math.absf %80 : vector<256x1xf32>
    %82 = arith.subf %77, %81 : vector<256x1xf32>
    %83 = arith.subf %66, %65 : vector<256x1xf32>
    %84 = arith.mulf %83, %83 : vector<256x1xf32>
    %85 = arith.subf %68, %67 : vector<256x1xf32>
    %86 = arith.mulf %85, %85 : vector<256x1xf32>
    %87 = arith.addf %84, %86 : vector<256x1xf32>
    %88 = arith.subf %64, %63 : vector<256x1xf32>
    %89 = arith.mulf %88, %88 : vector<256x1xf32>
    %90 = arith.subf %87, %89 : vector<256x1xf32>
    %91 = arith.addf %57, %60 : vector<256x1xf32>
    %92 = arith.subf %91, %62 : vector<256x1xf32>
    %c0_28 = arith.constant 0 : index
    %c0_29 = arith.constant 0 : index
    %93 = vector.load %arg7[%c0_28, %c0_29] : memref<8x128xf32, #tpu.memory_space<vmem>>, vector<8x1xf32>
    %94 = vector.shape_cast %82 : vector<256x1xf32> to vector<32x8x1xf32>
    %cst_30 = arith.constant dense<0.000000e+00> : vector<8x1xf32>
    %95 = vector.multi_reduction <add>, %94, %cst_30 [0] : vector<32x8x1xf32> to vector<8x1xf32>
    %96 = arith.addf %93, %95 : vector<8x1xf32>
    %c0_31 = arith.constant 0 : index
    %c0_32 = arith.constant 0 : index
    %97 = vector.load %arg7[%c0_31, %c0_32] : memref<8x128xf32, #tpu.memory_space<vmem>>, vector<8x1xf32>
    tpu.vector_store %arg7[%c0_31, %c0_32], %96 {strides = array<i32>} : memref<8x128xf32, #tpu.memory_space<vmem>>, vector<8x1xf32>,
    %c0_33 = arith.constant 0 : index
    %c0_34 = arith.constant 0 : index
    %98 = vector.load %arg8[%c0_33, %c0_34] : memref<8x128xf32, #tpu.memory_space<vmem>>, vector<8x1xf32>
    %99 = vector.shape_cast %90 : vector<256x1xf32> to vector<32x8x1xf32>
    %cst_35 = arith.constant dense<0.000000e+00> : vector<8x1xf32>
    %100 = vector.multi_reduction <add>, %99, %cst_35 [0] : vector<32x8x1xf32> to vector<8x1xf32>
    %101 = arith.addf %98, %100 : vector<8x1xf32>
    %c0_36 = arith.constant 0 : index
    %c0_37 = arith.constant 0 : index
    %102 = vector.load %arg8[%c0_36, %c0_37] : memref<8x128xf32, #tpu.memory_space<vmem>>, vector<8x1xf32>
    tpu.vector_store %arg8[%c0_36, %c0_37], %101 {strides = array<i32>} : memref<8x128xf32, #tpu.memory_space<vmem>>, vector<8x1xf32>,
    %c0_38 = arith.constant 0 : index
    %c0_39 = arith.constant 0 : index
    %103 = vector.load %arg9[%c0_38, %c0_39] : memref<8x128xf32, #tpu.memory_space<vmem>>, vector<8x1xf32>
    %104 = vector.shape_cast %92 : vector<256x1xf32> to vector<32x8x1xf32>
    %cst_40 = arith.constant dense<0.000000e+00> : vector<8x1xf32>
    %105 = vector.multi_reduction <add>, %104, %cst_40 [0] : vector<32x8x1xf32> to vector<8x1xf32>
    %106 = arith.addf %103, %105 : vector<8x1xf32>
    %c0_41 = arith.constant 0 : index
    %c0_42 = arith.constant 0 : index
    %107 = vector.load %arg9[%c0_41, %c0_42] : memref<8x128xf32, #tpu.memory_space<vmem>>, vector<8x1xf32>
    tpu.vector_store %arg9[%c0_41, %c0_42], %106 {strides = array<i32>} : memref<8x128xf32, #tpu.memory_space<vmem>>, vector<8x1xf32>,
    %c0_i32_43 = arith.constant 0 : i32
    %108 = arith.cmpi eq, %arg1, %c0_i32_43 : i32
    %109 = arith.extui %108 : i1 to i32
    %c0_i32_44 = arith.constant 0 : i32
    %110 = arith.cmpi ne, %109, %c0_i32_44 : i32
    scf.if %110 {
      %c0_45 = arith.constant 0 : index
      %c0_46 = arith.constant 0 : index
      %111 = vector.load %arg7[%c0_45, %c0_46] : memref<8x128xf32, #tpu.memory_space<vmem>>, vector<8x128xf32>
      %112 = vector.shape_cast %111 : vector<8x128xf32> to vector<1x8x128xf32>
      %cst_47 = arith.constant dense<0.000000e+00> : vector<1xf32>
      %113 = vector.multi_reduction <add>, %112, %cst_47 [1, 2] : vector<1x8x128xf32> to vector<1xf32>
      %114 = vector.shape_cast %113 : vector<1xf32> to vector<1x1x1xf32>
      %115 = vector.extract %114[0, 0, 0] : f32 from vector<1x1x1xf32>
      %c0_48 = arith.constant 0 : index
      %c0_49 = arith.constant 0 : index
      %116 = vector.load %arg8[%c0_48, %c0_49] : memref<8x128xf32, #tpu.memory_space<vmem>>, vector<8x128xf32>
      %117 = vector.shape_cast %116 : vector<8x128xf32> to vector<1x8x128xf32>
      %cst_50 = arith.constant dense<0.000000e+00> : vector<1xf32>
      %118 = vector.multi_reduction <add>, %117, %cst_50 [1, 2] : vector<1x8x128xf32> to vector<1xf32>
      %119 = vector.shape_cast %118 : vector<1xf32> to vector<1x1x1xf32>
      %120 = vector.extract %119[0, 0, 0] : f32 from vector<1x1x1xf32>
      %c0_51 = arith.constant 0 : index
      %c0_52 = arith.constant 0 : index
      %121 = vector.load %arg9[%c0_51, %c0_52] : memref<8x128xf32, #tpu.memory_space<vmem>>, vector<8x128xf32>
      %122 = vector.shape_cast %121 : vector<8x128xf32> to vector<1x8x128xf32>
      %cst_53 = arith.constant dense<0.000000e+00> : vector<1xf32>
      %123 = vector.multi_reduction <add>, %122, %cst_53 [1, 2] : vector<1x8x128xf32> to vector<1xf32>
      %124 = vector.shape_cast %123 : vector<1xf32> to vector<1x1x1xf32>
      %125 = vector.extract %124[0, 0, 0] : f32 from vector<1x1x1xf32>
      %126 = tpu.iota {dimensions = array<i32: 0>} : vector<8x128xi32>
      %c0_i32_54 = arith.constant 0 : i32
      %127 = vector.broadcast %c0_i32_54 : i32 to vector<8x128xi32>
      %128 = arith.cmpi eq, %126, %127 : vector<8x128xi32>
      %c1_i32 = arith.constant 1 : i32
      %129 = vector.broadcast %c1_i32 : i32 to vector<8x128xi32>
      %130 = arith.cmpi eq, %126, %129 : vector<8x128xi32>
      %c2_i32 = arith.constant 2 : i32
      %131 = vector.broadcast %c2_i32 : i32 to vector<8x128xi32>
      %132 = arith.cmpi eq, %126, %131 : vector<8x128xi32>
      %cst_55 = arith.constant 0.000000e+00 : f32
      %133 = vector.broadcast %125 : f32 to vector<8x128xf32>
      %134 = vector.broadcast %cst_55 : f32 to vector<8x128xf32>
      %135 = arith.select %132, %133, %134 : vector<8x128xi1>, vector<8x128xf32>
      %136 = vector.broadcast %120 : f32 to vector<8x128xf32>
      %137 = arith.select %130, %136, %135 : vector<8x128xi1>, vector<8x128xf32>
      %138 = vector.broadcast %115 : f32 to vector<8x128xf32>
      %139 = arith.select %128, %138, %137 : vector<8x128xi1>, vector<8x128xf32>
      %c0_56 = arith.constant 0 : index
      %c0_57 = arith.constant 0 : index
      %c0_58 = arith.constant 0 : index
      %140 = vector.load %arg5[%c0_56, %c0_57, %c0_58] : memref<1x8x128xf32, #tpu.memory_space<vmem>>, vector<1x8x128xf32>
      %141 = vector.shape_cast %140 : vector<1x8x128xf32> to vector<8x128xf32>
      %142 = vector.shape_cast %139 : vector<8x128xf32> to vector<1x8x128xf32>
      tpu.vector_store %arg5[%c0_56, %c0_57, %c0_58], %142 {strides = array<i32>} : memref<1x8x128xf32, #tpu.memory_space<vmem>>, vector<1x8x128xf32>,
    } else {
    }
    return
  }
  func.func @transform_0(%arg0: i32, %arg1: i32) -> (i32, i32) {
    %c1_i32 = arith.constant 1 : i32
    %0 = arith.muli %arg0, %c1_i32 : i32
    %1 = arith.addi %0, %arg1 : i32
    %c0_i32 = arith.constant 0 : i32
    %c0_i32_0 = arith.constant 0 : i32
    return %1, %c0_i32 : i32, i32
  }
  func.func @transform_1(%arg0: i32, %arg1: i32) -> (i32, i32) {
    %c1_i32 = arith.constant 1 : i32
    %0 = arith.muli %arg0, %c1_i32 : i32
    %1 = arith.addi %0, %arg1 : i32
    %c0_i32 = arith.constant 0 : i32
    %c0_i32_0 = arith.constant 0 : i32
    return %1, %c0_i32 : i32, i32
  }
  func.func @transform_3(%arg0: i32, %arg1: i32) -> (i32, i32, i32) {
    %c0_i32 = arith.constant 0 : i32
    %c0_i32_0 = arith.constant 0 : i32
    %c0_i32_1 = arith.constant 0 : i32
    return %arg0, %c0_i32, %c0_i32_0 : i32, i32, i32
  }
}

</mosaic_0001>

<llo_original>
// kernel: tpu_custom_call.1
$region0: #{tpu_custom_call.1}
  #allocation0 [shape = 'u32[]', space=smem, size = 0x4, offset = 0x4, fixed_abs, tag = 'smem constant byte address 0x4 - core index']
  #allocation1 [shape = 'u32[144,128]{1,0:T(1,128)}', space=vmem, size = 0x12000, scoped, tag = 'internal scratch']
  #allocation2 [shape = 'bf16[128,256]{1,0:T(8,128)(2,1)}', space=vmem, size = 0x10000, scoped, tag = 'scratch operand']
  #allocation3 [shape = 'f32[8,128]{1,0:T(8,128)}', space=vmem, size = 0x1000, scoped, tag = 'scratch operand']
  #allocation4 [shape = 'f32[8,128]{1,0:T(8,128)}', space=vmem, size = 0x1000, scoped, tag = 'scratch operand']
  #allocation5 [shape = 'f32[8,128]{1,0:T(8,128)}', space=vmem, size = 0x1000, scoped, tag = 'scratch operand']
  #allocation13 [shape = 's32[]', space=sflag, size = 0x4, offset = 0, fixed_abs, tag = 'sflag constant byte address 0x0 - dummy sync flag']
  #allocation14 [shape = 's32[]', space=sflag, size = 0x4, offset = 0, fixed_abs, tag = 'sflag constant byte address 0x0 - dummy sync flag']
  #allocation15 [shape = 'u32[]', space=smem, size = 0x4, offset = 0x44, fixed_abs, tag = 'smem constant byte address 0x44 - assertion arg 0']
  #allocation16 [shape = 'u32[]', space=smem, size = 0x4, offset = 0x48, fixed_abs, tag = 'smem constant byte address 0x48 - assertion arg 1']
  %s0 = inlined_call_operand.hbm [shape: bf16[512,128], index: 0, kind: input, shape index: {}]
  %s1 = inlined_call_operand.hbm [shape: bf16[512,128], index: 1, kind: input, shape index: {}]
  %s2 = inlined_call_operand.hbm [shape: bf16[128,256], index: 2, kind: input, shape index: {}]
  %s3 = inlined_call_operand.hbm [shape: f32[2,8,128], index: 3, kind: output, shape index: {}]
  %s4 = sld [smem:[#allocation0]]
  $region62: #{tpu_custom_call.1} parent=0
    _
  %s6 = ssub.s32 1, %s4
  %s7 = scalar_select 0, %s6, %s4
  $region1: #{tpu_custom_call.1} parent=0
    #allocation6 [shape = 'u8[131072]{0}', space=vmem, size = 0x20000, scoped, tag = 'input window, operand 0']
    #allocation7 [shape = 's32[2]{0}', space=sflag, size = 0x8, scoped, tag = 'scoped memory for tpu_custom_call.1']
    #allocation8 [shape = 's32[2]{0}', space=sflag, size = 0x8, scoped, tag = 'scoped memory for tpu_custom_call.1']
    #allocation9 [shape = 'u8[131072]{0}', space=vmem, size = 0x20000, scoped, tag = 'input window, operand 1']
    #allocation10 [shape = 's32[2]{0}', space=sflag, size = 0x8, scoped, tag = 'scoped memory for tpu_custom_call.1']
    #allocation11 [shape = 'u8[8192]{0}', space=vmem, size = 0x2000, scoped, tag = 'output window, operand 0']
    %8 = vsyncpa [#allocation7], 0
    %s9 = scalar_lea.sflag [#allocation7], 1
    %10 = vsyncpa %s9, 0
    %11 = vsyncpa [#allocation10], 0
    %s12 = scalar_lea.sflag [#allocation10], 1
    %13 = vsyncpa %s12, 0
    %14 = vsyncpa [#allocation8], 0
    %s15 = scalar_lea.sflag [#allocation8], 1
    %16 = vsyncpa %s15, 0
    loop: start=0, step=1, limit=4
    $region2: #{tpu_custom_call.1} parent=1 // loop_pre_header
      _
    $region3: #{tpu_custom_call.1} parent=1 // loop_header
      %s18 = sphi 0, %s22
      %p19 = scmp.ge.s32.totalorder %s18, 4
      %s25 = sphi 0, %s37
      %s26 = sphi 0, %s33
      %s27 = sphi 0, %s25
      %s28 = sphi 0, %s26
      %s29 = sphi 0, %s27
      %s30 = sphi 0, %s28
      %s42 = sphi 0, %s44
      %s45 = sphi 0, %s42
      %s46 = sphi 0, %s45
      %s62 = sphi 0, %s46
      %s70 = sphi 0, %s72
      %s73 = sphi 0, %s70
      %s74 = sphi 0, %s73
      %s90 = sphi 0, %s74
      %s96 = sphi 0, %s98
      %s99 = sphi 0, %s96
      %s100 = sphi 0, %s99
      %s116 = sphi 0, %s100
    $region4: #{tpu_custom_call.1} parent=1 // loop_header_branch
      %21 = sbr.rel (%p19) target = $region8
    $region5: #{tpu_custom_call.1} parent=1 // loop_body
      %s23 = ssub.s32 %s18, 1
      %s24 = ssub.s32 %s18, 2
      %s31 = sadd.s32 1, %s26
      %p32 = scmp.ge.s32.totalorder %s31, 1
      %s33 = scalar_select %p32, 0, %s31
      %s34 = sadd.s32 1, %s25
      %s35 = scalar_select %p32, %s34, %s25
      %p36 = scmp.ge.s32.totalorder %s35, 2
      %s37 = scalar_select %p36, 0, %s35
      %s38 = sadd.s32 %s25, %s26
      %s39 = sadd.s32 %s37, %s33
      %s40 = ssub.s32 %s38, %s39
      %p41 = scmp.eq.s32.totalorder %s40, 0
      %s43 = sadd.s32 %s42, 1
      %s44 = scalar_select %p41, %s42, %s43
      %p47 = pneg %p41
      %p48 = scmp.eq.s32.totalorder %s18, 1
      %p49 = por %p47, %p48
      %p50 = scmp.ne.s32.totalorder %s42, %s45
      %p51 = scmp.eq.s32.totalorder %s18, 0
      %p52 = por %p50, %p51
      %p53 = scmp.ne.s32.totalorder %s42, %s45
      %p54 = scmp.eq.s32.totalorder %s23, 1
      %p55 = por %p53, %p54
      %p56 = scmp.ne.s32.totalorder %s45, %s46
      %p57 = scmp.eq.s32.totalorder %s23, 0
      %p58 = por %p56, %p57
      %p59 = scmp.ne.s32.totalorder %s45, %s46
      %p60 = scmp.eq.s32.totalorder %s24, 1
      %p61 = por %p59, %p60
      %p63 = scmp.ne.s32.totalorder %s46, %s62
      %p64 = scmp.eq.s32.totalorder %s24, 0
      %p65 = por %p63, %p64
      %s66 = sadd.s32 %s25, %s26
      %s67 = sadd.s32 %s37, %s33
      %s68 = ssub.s32 %s66, %s67
      %p69 = scmp.eq.s32.totalorder %s68, 0
      %s71 = sadd.s32 %s70, 1
      %s72 = scalar_select %p69, %s70, %s71
      %p75 = pneg %p69
      %p76 = scmp.eq.s32.totalorder %s18, 1
      %p77 = por %p75, %p76
      %p78 = scmp.ne.s32.totalorder %s70, %s73
      %p79 = scmp.eq.s32.totalorder %s18, 0
      %p80 = por %p78, %p79
      %p81 = scmp.ne.s32.totalorder %s70, %s73
      %p82 = scmp.eq.s32.totalorder %s23, 1
      %p83 = por %p81, %p82
      %p84 = scmp.ne.s32.totalorder %s73, %s74
      %p85 = scmp.eq.s32.totalorder %s23, 0
      %p86 = por %p84, %p85
      %p87 = scmp.ne.s32.totalorder %s73, %s74
      %p88 = scmp.eq.s32.totalorder %s24, 1
      %p89 = por %p87, %p88
      %p91 = scmp.ne.s32.totalorder %s74, %s90
      %p92 = scmp.eq.s32.totalorder %s24, 0
      %p93 = por %p91, %p92
      %s94 = ssub.s32 %s25, %s37
      %p95 = scmp.eq.s32.totalorder %s94, 0
      %s97 = sadd.s32 %s96, 1
      %s98 = scalar_select %p95, %s96, %s97
      %p101 = pneg %p95
      %p102 = scmp.eq.s32.totalorder %s18, 1
      %p103 = por %p101, %p102
      %p104 = scmp.ne.s32.totalorder %s96, %s99
      %p105 = scmp.eq.s32.totalorder %s18, 0
      %p106 = por %p104, %p105
      %p107 = scmp.ne.s32.totalorder %s96, %s99
      %p108 = scmp.eq.s32.totalorder %s23, 1
      %p109 = por %p107, %p108
      %p110 = scmp.ne.s32.totalorder %s99, %s100
      %p111 = scmp.eq.s32.totalorder %s23, 0
      %p112 = por %p110, %p111
      %p113 = scmp.ne.s32.totalorder %s99, %s100
      %p114 = scmp.eq.s32.totalorder %s24, 1
      %p115 = por %p113, %p114
      %p117 = scmp.ne.s32.totalorder %s100, %s116
      %p118 = scmp.eq.s32.totalorder %s24, 0
      %p119 = por %p117, %p118
      %p120 = scmp.le.s32.totalorder 1, %s18
      %p121 = scmp.lt.s32.totalorder %s18, 3
      %p122 = pnand %p120, %p121
      %p123 = pneg %p122
      // Predicated region
      $region9: #{tpu_custom_call.1} parent=5 // pred_check
        _
      $region10: #{tpu_custom_call.1} parent=5 // pred_check_branch
        %125 = sbr.rel (%p122) target = $region12
      $region11: #{tpu_custom_call.1} parent=5 // pred_region
        %s126 = ssub.s32 %s18, 1
      $region12: #{tpu_custom_call.1} parent=5 // pred_fallthru
        _
      %p127 = scmp.lt.s32.totalorder %s18, 2
      // Predicated region
      $region13: #{tpu_custom_call.1} parent=5 // pred_check
        %p128 = pneg %p127
      $region14: #{tpu_custom_call.1} parent=5 // pred_check_branch
        %130 = sbr.rel (%p128) target = $region16
      $region15: #{tpu_custom_call.1} parent=5 // pred_region
        // Predicated region
        $region17: #{tpu_custom_call.1} parent=15 // pred_check
          %p131 = pneg %p52
        $region18: #{tpu_custom_call.1} parent=15 // pred_check_branch
          %133 = sbr.rel (%p131) target = $region20
        $region19: #{tpu_custom_call.1} parent=15 // pred_region
          %s134 = sand.u32 %s42, 1
          %s135 = scalar_lea.sflag [#allocation7], %s134
          %s136 = sand.u32 %s42, 1
          %s137 = smul.addr %s136, 128
          %s138 = scalar_lea.vmem [#allocation6], %s137
          %s139 = sadd.s32 %s25, %s26
          %s140 = smul.u32 32, %s139
          %s142 = ssub.s32 2048, 2048
          %143 = vsyncadd %s135, %s142
          %s144 = smul.addr %s140, 64
          %s145 = scalar_lea.hbm %s0, %s144
          %s146 = sshll.u32 %s138, 4
          %s147 = int_to_ptr.vmem [resolvable:$true] %s146
          %152 = dma.hbm_to_vmem [thread:$0]  %s145, 2048, %s147, %s135, 64, 64, 4
        $region20: #{tpu_custom_call.1} parent=15 // pred_fallthru
          _
        // Predicated region
        $region21: #{tpu_custom_call.1} parent=15 // pred_check
          %p153 = pneg %p80
        $region22: #{tpu_custom_call.1} parent=15 // pred_check_branch
          %155 = sbr.rel (%p153) target = $region24
        $region23: #{tpu_custom_call.1} parent=15 // pred_region
          %s156 = sand.u32 %s70, 1
          %s157 = scalar_lea.sflag [#allocation10], %s156
          %s158 = sand.u32 %s70, 1
          %s159 = smul.addr %s158, 128
          %s160 = scalar_lea.vmem [#allocation9], %s159
          %s161 = sadd.s32 %s25, %s26
          %s162 = smul.u32 32, %s161
          %s164 = ssub.s32 2048, 2048
          %165 = vsyncadd %s157, %s164
          %s166 = smul.addr %s162, 64
          %s167 = scalar_lea.hbm %s1, %s166
          %s168 = sshll.u32 %s160, 4
          %s169 = int_to_ptr.vmem [resolvable:$true] %s168
          %174 = dma.hbm_to_vmem [thread:$0]  %s167, 2048, %s169, %s157, 64, 64, 4
        $region24: #{tpu_custom_call.1} parent=15 // pred_fallthru
          _
      $region16: #{tpu_custom_call.1} parent=5 // pred_fallthru
        _
      %p175 = scmp.le.s32.totalorder 1, %s18
      %p176 = scmp.lt.s32.totalorder %s18, 3
      %p177 = pnand %p175, %p176
      %p178 = pneg %p177
      // Predicated region
      $region25: #{tpu_custom_call.1} parent=5 // pred_check
        _
      $region26: #{tpu_custom_call.1} parent=5 // pred_check_branch
        %180 = sbr.rel (%p177) target = $region28
      $region27: #{tpu_custom_call.1} parent=5 // pred_region
        %s181 = ssub.s32 %s18, 1
        %s182 = sand.u32 %s45, 1
        %s183 = scalar_lea.sflag [#allocation7], %s182
        %s184 = sand.u32 %s45, 1
        %s185 = smul.addr %s184, 128
        %s186 = scalar_lea.vmem [#allocation6], %s185
        // Predicated region
        $region29: #{tpu_custom_call.1} parent=27 // pred_check
          %p187 = pneg %p58
        $region30: #{tpu_custom_call.1} parent=27 // pred_check_branch
          %189 = sbr.rel (%p187) target = $region32
        $region31: #{tpu_custom_call.1} parent=27 // pred_region
          %190 = dma.done %s183, 2048
        $region32: #{tpu_custom_call.1} parent=27 // pred_fallthru
          _
        %s191 = sand.u32 %s73, 1
        %s192 = scalar_lea.sflag [#allocation10], %s191
        %s193 = sand.u32 %s73, 1
        %s194 = smul.addr %s193, 128
        %s195 = scalar_lea.vmem [#allocation9], %s194
        // Predicated region
        $region33: #{tpu_custom_call.1} parent=27 // pred_check
          %p196 = pneg %p86
        $region34: #{tpu_custom_call.1} parent=27 // pred_check_branch
          %198 = sbr.rel (%p196) target = $region36
        $region35: #{tpu_custom_call.1} parent=27 // pred_region
          %199 = dma.done %s192, 2048
        $region36: #{tpu_custom_call.1} parent=27 // pred_fallthru
          _
        %s200 = sand.u32 %s45, 1
        %s201 = scalar_lea.sflag [#allocation7], %s200
        %s202 = sand.u32 %s45, 1
        %s203 = smul.addr %s202, 128
        %s204 = scalar_lea.vmem [#allocation6], %s203
        %p205 = pneg %p58
        %p206 = pneg %p55
        %s207 = sand.u32 %s73, 1
        %s208 = scalar_lea.sflag [#allocation10], %s207
        %s209 = sand.u32 %s73, 1
        %s210 = smul.addr %s209, 128
        %s211 = scalar_lea.vmem [#allocation9], %s210
        %p212 = pneg %p86
        %p213 = pneg %p83
        %p214 = pneg %p112
        %p215 = pneg %p109
        %s216 = sand.u32 %s99, 1
        %s217 = scalar_lea.sflag [#allocation8], %s216
        %s218 = sand.u32 %s99, 1
        %s219 = smul.addr %s218, 8
        %s220 = scalar_lea.vmem [#allocation11], %s219
        %s221 = sadd.s32 %s27, %s28
        %s222 = smul.u32 32, %s221
        %s223 = sadd.s32 %s27, %s28
        %s224 = smul.u32 32, %s223
        %p226 = scmp.eq.s32.totalorder %s28, 0
        // Predicated region
        $region37: #{tpu_custom_call.1} parent=27 // pred_check
          %p227 = pneg %p226
        $region38: #{tpu_custom_call.1} parent=27 // pred_check_branch
          %229 = sbr.rel (%p227) target = $region40
        $region39: #{tpu_custom_call.1} parent=27 // pred_region
          $region41: #{tpu_custom_call.1} parent=39
            #allocation12 [shape = 's32[1]{0}', space=sflag, size = 0x4, scoped, tag = 'scoped memory for tpu_custom_call.1']
            // Predicated region
            $region42: #{tpu_custom_call.1} parent=41 // pred_check
              _
            $region43: #{tpu_custom_call.1} parent=41 // pred_check_branch
              %231 = sbr.rel target = $region45
            $region44: #{tpu_custom_call.1} parent=41 // pred_region
              %232 = sst [smem:[#allocation15]] [#allocation14]
              %233 = sst [smem:[#allocation16]] [#allocation13]
            $region45: #{tpu_custom_call.1} parent=41 // pred_fallthru
              _
            %235 = shalt.err (0)
            %s237 = sshll.u32 [#allocation2], 4
            %s238 = int_to_ptr.vmem [resolvable:$true] %s237
            %240 = dma.hbm_to_vmem [thread:$0]  %s2, 2048, %s238, [#allocation12]
            %s241 = smul.u32 4, 16
            %s242 = smul.u32 %s241, 2
            %s243 = sshll.u32 %s242, 4
            %244 = dma.done [#allocation12], %s243
          %245 = vst [vmem:[#allocation3] sm:$0xff] 0.0
          %246 = vst [vmem:[#allocation4] sm:$0xff] 0.0
          %247 = vst [vmem:[#allocation5] sm:$0xff] 0.0
        $region40: #{tpu_custom_call.1} parent=27 // pred_fallthru
          _
        %v248 = vld [vmem:[#allocation2] sm:$0xff]
        %v249 = vld [vmem:[#allocation2 + $0x8] sm:$0xff]
        %v250 = vld [vmem:[#allocation2 + $0x10] sm:$0xff]
        %v251 = vld [vmem:[#allocation2 + $0x18] sm:$0xff]
        %v252 = vld [vmem:[#allocation2 + $0x20] sm:$0xff]
        %v253 = vld [vmem:[#allocation2 + $0x28] sm:$0xff]
        %v254 = vld [vmem:[#allocation2 + $0x30] sm:$0xff]
        %v255 = vld [vmem:[#allocation2 + $0x38] sm:$0xff]
        %v256 = vld [vmem:[#allocation2 + $0x40] sm:$0xff]
        %v257 = vld [vmem:[#allocation2 + $0x48] sm:$0xff]
        %v258 = vld [vmem:[#allocation2 + $0x50] sm:$0xff]
        %v259 = vld [vmem:[#allocation2 + $0x58] sm:$0xff]
        %v260 = vld [vmem:[#allocation2 + $0x60] sm:$0xff]
        %v261 = vld [vmem:[#allocation2 + $0x68] sm:$0xff]
        %v262 = vld [vmem:[#allocation2 + $0x70] sm:$0xff]
        %v263 = vld [vmem:[#allocation2 + $0x78] sm:$0xff]
        %v264 = vld [vmem:[%s186] sm:$0xf]
        %v265 = vld [vmem:[%s186 + $0x4] sm:$0xf]
        %v266 = vld [vmem:[%s186 + $0x8] sm:$0xf]
        %v267 = vld [vmem:[%s186 + $0xc] sm:$0xf]
        %v268 = vld [vmem:[%s186 + $0x10] sm:$0xf]
        %v269 = vld [vmem:[%s186 + $0x14] sm:$0xf]
        %v270 = vld [vmem:[%s186 + $0x18] sm:$0xf]
        %v271 = vld [vmem:[%s186 + $0x1c] sm:$0xf]
        %v272 = vld [vmem:[%s186 + $0x20] sm:$0xf]
        %v273 = vld [vmem:[%s186 + $0x24] sm:$0xf]
        %v274 = vld [vmem:[%s186 + $0x28] sm:$0xf]
        %v275 = vld [vmem:[%s186 + $0x2c] sm:$0xf]
        %v276 = vld [vmem:[%s186 + $0x30] sm:$0xf]
        %v277 = vld [vmem:[%s186 + $0x34] sm:$0xf]
        %v278 = vld [vmem:[%s186 + $0x38] sm:$0xf]
        %v279 = vld [vmem:[%s186 + $0x3c] sm:$0xf]
        %v280 = vld [vmem:[%s186 + $0x40] sm:$0xf]
        %v281 = vld [vmem:[%s186 + $0x44] sm:$0xf]
        %v282 = vld [vmem:[%s186 + $0x48] sm:$0xf]
        %v283 = vld [vmem:[%s186 + $0x4c] sm:$0xf]
        %v284 = vld [vmem:[%s186 + $0x50] sm:$0xf]
        %v285 = vld [vmem:[%s186 + $0x54] sm:$0xf]
        %v286 = vld [vmem:[%s186 + $0x58] sm:$0xf]
        %v287 = vld [vmem:[%s186 + $0x5c] sm:$0xf]
        %v288 = vld [vmem:[%s186 + $0x60] sm:$0xf]
        %v289 = vld [vmem:[%s186 + $0x64] sm:$0xf]
        %v290 = vld [vmem:[%s186 + $0x68] sm:$0xf]
        %v291 = vld [vmem:[%s186 + $0x6c] sm:$0xf]
        %v292 = vld [vmem:[%s186 + $0x70] sm:$0xf]
        %v293 = vld [vmem:[%s186 + $0x74] sm:$0xf]
        %v294 = vld [vmem:[%s186 + $0x78] sm:$0xf]
        %v295 = vld [vmem:[%s186 + $0x7c] sm:$0xf]
        %v328 = vunpack.c.l.b16 %v264
        %v329 = vunpack.c.l.b16 %v265
        %v330 = vunpack.c.l.b16 %v266
        %v331 = vunpack.c.l.b16 %v267
        %v332 = vunpack.c.l.b16 %v268
        %v333 = vunpack.c.l.b16 %v269
        %v334 = vunpack.c.l.b16 %v270
        %v335 = vunpack.c.l.b16 %v271
        %v336 = vunpack.c.l.b16 %v272
        %v337 = vunpack.c.l.b16 %v273
        %v338 = vunpack.c.l.b16 %v274
        %v339 = vunpack.c.l.b16 %v275
        %v340 = vunpack.c.l.b16 %v276
        %v341 = vunpack.c.l.b16 %v277
        %v342 = vunpack.c.l.b16 %v278
        %v343 = vunpack.c.l.b16 %v279
        %v344 = vunpack.c.l.b16 %v280
        %v345 = vunpack.c.l.b16 %v281
        %v346 = vunpack.c.l.b16 %v282
        %v347 = vunpack.c.l.b16 %v283
        %v348 = vunpack.c.l.b16 %v284
        %v349 = vunpack.c.l.b16 %v285
        %v350 = vunpack.c.l.b16 %v286
        %v351 = vunpack.c.l.b16 %v287
        %v352 = vunpack.c.l.b16 %v288
        %v353 = vunpack.c.l.b16 %v289
        %v354 = vunpack.c.l.b16 %v290
        %v355 = vunpack.c.l.b16 %v291
        %v356 = vunpack.c.l.b16 %v292
        %v357 = vunpack.c.l.b16 %v293
        %v358 = vunpack.c.l.b16 %v294
        %v359 = vunpack.c.l.b16 %v295
        %v360 = vpack.c.b16 %v329, %v328
        %v361 = vpack.c.b16 %v331, %v330
        %v362 = vpack.c.b16 %v333, %v332
        %v363 = vpack.c.b16 %v335, %v334
        %v364 = vpack.c.b16 %v337, %v336
        %v365 = vpack.c.b16 %v339, %v338
        %v366 = vpack.c.b16 %v341, %v340
        %v367 = vpack.c.b16 %v343, %v342
        %v368 = vpack.c.b16 %v345, %v344
        %v369 = vpack.c.b16 %v347, %v346
        %v370 = vpack.c.b16 %v349, %v348
        %v371 = vpack.c.b16 %v351, %v350
        %v372 = vpack.c.b16 %v353, %v352
        %v373 = vpack.c.b16 %v355, %v354
        %v374 = vpack.c.b16 %v357, %v356
        %v375 = vpack.c.b16 %v359, %v358
        %v408 = vunpack.c.l.b16 %v248
        %v409 = vunpack.c.h.b16 %v248
        %v410 = vunpack.c.l.b16 %v249
        %v411 = vunpack.c.h.b16 %v249
        %v412 = vunpack.c.l.b16 %v250
        %v413 = vunpack.c.h.b16 %v250
        %v414 = vunpack.c.l.b16 %v251
        %v415 = vunpack.c.h.b16 %v251
        %v416 = vunpack.c.l.b16 %v252
        %v417 = vunpack.c.h.b16 %v252
        %v418 = vunpack.c.l.b16 %v253
        %v419 = vunpack.c.h.b16 %v253
        %v420 = vunpack.c.l.b16 %v254
        %v421 = vunpack.c.h.b16 %v254
        %v422 = vunpack.c.l.b16 %v255
        %v423 = vunpack.c.h.b16 %v255
        %v424 = vunpack.c.l.b16 %v256
        %v425 = vunpack.c.h.b16 %v256
        %v426 = vunpack.c.l.b16 %v257
        %v427 = vunpack.c.h.b16 %v257
        %v428 = vunpack.c.l.b16 %v258
        %v429 = vunpack.c.h.b16 %v258
        %v430 = vunpack.c.l.b16 %v259
        %v431 = vunpack.c.h.b16 %v259
        %v432 = vunpack.c.l.b16 %v260
        %v433 = vunpack.c.h.b16 %v260
        %v434 = vunpack.c.l.b16 %v261
        %v435 = vunpack.c.h.b16 %v261
        %v436 = vunpack.c.l.b16 %v262
        %v437 = vunpack.c.h.b16 %v262
        %v438 = vunpack.c.l.b16 %v263
        %v439 = vunpack.c.h.b16 %v263
        %v440 = vpack.c.b16 %v410, %v408
        %v441 = vpack.c.b16 %v411, %v409
        %v442 = vpack.c.b16 %v414, %v412
        %v443 = vpack.c.b16 %v415, %v413
        %v444 = vpack.c.b16 %v418, %v416
        %v445 = vpack.c.b16 %v419, %v417
        %v446 = vpack.c.b16 %v422, %v420
        %v447 = vpack.c.b16 %v423, %v421
        %v448 = vpack.c.b16 %v426, %v424
        %v449 = vpack.c.b16 %v427, %v425
        %v450 = vpack.c.b16 %v430, %v428
        %v451 = vpack.c.b16 %v431, %v429
        %v452 = vpack.c.b16 %v434, %v432
        %v453 = vpack.c.b16 %v435, %v433
        %v454 = vpack.c.b16 %v438, %v436
        %v455 = vpack.c.b16 %v439, %v437
        %472 = vmatprep.subr.bf16.mxu0 %v455
        %473 = vmatpush1.bf16.msra.mxu0 %v454
        %474 = vmatprep.subr.bf16.mxu0 %v453
        %475 = vmatpush1.bf16.msra.mxu0 %v452
        %476 = vmatprep.subr.bf16.mxu0 %v451
        %477 = vmatpush1.bf16.msra.mxu0 %v450
        %478 = vmatprep.subr.bf16.mxu0 %v449
        %479 = vmatpush1.bf16.msra.mxu0 %v448
        %480 = vmatprep.subr.bf16.mxu0 %v447
        %481 = vmatpush1.bf16.msra.mxu0 %v446
        %482 = vmatprep.subr.bf16.mxu0 %v445
        %483 = vmatpush1.bf16.msra.mxu0 %v444
        %484 = vmatprep.subr.bf16.mxu0 %v443
        %485 = vmatpush1.bf16.msra.mxu0 %v442
        %486 = vmatprep.subr.bf16.mxu0 %v441
        %487 = vmatpush1.bf16.msra.mxu0 %v440
        %488 = vmatprep.subr.bf16.mxu0 0
        %489 = vmatpush2.bf16.msra.mxu0 0
        %490 = vmatprep.subr.bf16.mxu0 0
        %491 = vmatpush2.bf16.msra.mxu0 0
        %492 = vmatprep.subr.bf16.mxu0 0
        %493 = vmatpush2.bf16.msra.mxu0 0
        %494 = vmatprep.subr.bf16.mxu0 0
        %495 = vmatpush2.bf16.msra.mxu0 0
        %496 = vmatprep.subr.bf16.mxu0 0
        %497 = vmatpush2.bf16.msra.mxu0 0
        %498 = vmatprep.subr.bf16.mxu0 0
        %499 = vmatpush2.bf16.msra.mxu0 0
        %500 = vmatprep.subr.bf16.mxu0 0
        %501 = vmatpush2.bf16.msra.mxu0 0
        %502 = vmatprep.subr.bf16.mxu0 0
        %503 = vmatpush2.bf16.msra.mxu0 0
        %504 = vmatprep.mubr.bf16.mxu0 0
        %505 = vmatmul.mubr.bf16.gmra.mxu0 %v360
        %v506 = vpop.f32.mrf.mxu0
        %v507 = vadd.f32 0.0, %v506
        %v508 = vpop.f32.mrf.mxu0
        %v509 = vadd.f32 0.0, %v508
        %v510 = vpop.f32.mrf.mxu0
        %v511 = vadd.f32 0.0, %v510
        %v512 = vpop.f32.mrf.mxu0
        %v513 = vadd.f32 0.0, %v512
        %514 = vmatprep.mubr.bf16.mxu0 0
        %515 = vmatmul.mubr.bf16.gmra.mxu0 %v361
        %v516 = vpop.f32.mrf.mxu0
        %v517 = vadd.f32 0.0, %v516
        %v518 = vpop.f32.mrf.mxu0
        %v519 = vadd.f32 0.0, %v518
        %v520 = vpop.f32.mrf.mxu0
        %v521 = vadd.f32 0.0, %v520
        %v522 = vpop.f32.mrf.mxu0
        %v523 = vadd.f32 0.0, %v522
        %524 = vmatprep.mubr.bf16.mxu0 0
        %525 = vmatmul.mubr.bf16.gmra.mxu0 %v362
        %v526 = vpop.f32.mrf.mxu0
        %v527 = vadd.f32 0.0, %v526
        %v528 = vpop.f32.mrf.mxu0
        %v529 = vadd.f32 0.0, %v528
        %v530 = vpop.f32.mrf.mxu0
        %v531 = vadd.f32 0.0, %v530
        %v532 = vpop.f32.mrf.mxu0
        %v533 = vadd.f32 0.0, %v532
        %534 = vmatprep.mubr.bf16.mxu0 0
        %535 = vmatmul.mubr.bf16.gmra.mxu0 %v363
        %v536 = vpop.f32.mrf.mxu0
        %v537 = vadd.f32 0.0, %v536
        %v538 = vpop.f32.mrf.mxu0
        %v539 = vadd.f32 0.0, %v538
        %v540 = vpop.f32.mrf.mxu0
        %v541 = vadd.f32 0.0, %v540
        %v542 = vpop.f32.mrf.mxu0
        %v543 = vadd.f32 0.0, %v542
        %544 = vmatprep.mubr.bf16.mxu0 0
        %545 = vmatmul.mubr.bf16.gmra.mxu0 %v364
        %v546 = vpop.f32.mrf.mxu0
        %v547 = vadd.f32 0.0, %v546
        %v548 = vpop.f32.mrf.mxu0
        %v549 = vadd.f32 0.0, %v548
        %v550 = vpop.f32.mrf.mxu0
        %v551 = vadd.f32 0.0, %v550
        %v552 = vpop.f32.mrf.mxu0
        %v553 = vadd.f32 0.0, %v552
        %554 = vmatprep.mubr.bf16.mxu0 0
        %555 = vmatmul.mubr.bf16.gmra.mxu0 %v365
        %v556 = vpop.f32.mrf.mxu0
        %v557 = vadd.f32 0.0, %v556
        %v558 = vpop.f32.mrf.mxu0
        %v559 = vadd.f32 0.0, %v558
        %v560 = vpop.f32.mrf.mxu0
        %v561 = vadd.f32 0.0, %v560
        %v562 = vpop.f32.mrf.mxu0
        %v563 = vadd.f32 0.0, %v562
        %564 = vmatprep.mubr.bf16.mxu0 0
        %565 = vmatmul.mubr.bf16.gmra.mxu0 %v366
        %v566 = vpop.f32.mrf.mxu0
        %v567 = vadd.f32 0.0, %v566
        %v568 = vpop.f32.mrf.mxu0
        %v569 = vadd.f32 0.0, %v568
        %v570 = vpop.f32.mrf.mxu0
        %v571 = vadd.f32 0.0, %v570
        %v572 = vpop.f32.mrf.mxu0
        %v573 = vadd.f32 0.0, %v572
        %574 = vmatprep.mubr.bf16.mxu0 0
        %575 = vmatmul.mubr.bf16.gmra.mxu0 %v367
        %v576 = vpop.f32.mrf.mxu0
        %v577 = vadd.f32 0.0, %v576
        %v578 = vpop.f32.mrf.mxu0
        %v579 = vadd.f32 0.0, %v578
        %v580 = vpop.f32.mrf.mxu0
        %v581 = vadd.f32 0.0, %v580
        %v582 = vpop.f32.mrf.mxu0
        %v583 = vadd.f32 0.0, %v582
        %584 = vmatprep.mubr.bf16.mxu0 0
        %585 = vmatmul.mubr.bf16.gmra.mxu0 %v368
        %v586 = vpop.f32.mrf.mxu0
        %v587 = vadd.f32 0.0, %v586
        %v588 = vpop.f32.mrf.mxu0
        %v589 = vadd.f32 0.0, %v588
        %v590 = vpop.f32.mrf.mxu0
        %v591 = vadd.f32 0.0, %v590
        %v592 = vpop.f32.mrf.mxu0
        %v593 = vadd.f32 0.0, %v592
        %594 = vmatprep.mubr.bf16.mxu0 0
        %595 = vmatmul.mubr.bf16.gmra.mxu0 %v369
        %v596 = vpop.f32.mrf.mxu0
        %v597 = vadd.f32 0.0, %v596
        %v598 = vpop.f32.mrf.mxu0
        %v599 = vadd.f32 0.0, %v598
        %v600 = vpop.f32.mrf.mxu0
        %v601 = vadd.f32 0.0, %v600
        %v602 = vpop.f32.mrf.mxu0
        %v603 = vadd.f32 0.0, %v602
        %604 = vmatprep.mubr.bf16.mxu0 0
        %605 = vmatmul.mubr.bf16.gmra.mxu0 %v370
        %v606 = vpop.f32.mrf.mxu0
        %v607 = vadd.f32 0.0, %v606
        %v608 = vpop.f32.mrf.mxu0
        %v609 = vadd.f32 0.0, %v608
        %v610 = vpop.f32.mrf.mxu0
        %v611 = vadd.f32 0.0, %v610
        %v612 = vpop.f32.mrf.mxu0
        %v613 = vadd.f32 0.0, %v612
        %614 = vmatprep.mubr.bf16.mxu0 0
        %615 = vmatmul.mubr.bf16.gmra.mxu0 %v371
        %v616 = vpop.f32.mrf.mxu0
        %v617 = vadd.f32 0.0, %v616
        %v618 = vpop.f32.mrf.mxu0
        %v619 = vadd.f32 0.0, %v618
        %v620 = vpop.f32.mrf.mxu0
        %v621 = vadd.f32 0.0, %v620
        %v622 = vpop.f32.mrf.mxu0
        %v623 = vadd.f32 0.0, %v622
        %624 = vmatprep.mubr.bf16.mxu0 0
        %625 = vmatmul.mubr.bf16.gmra.mxu0 %v372
        %v626 = vpop.f32.mrf.mxu0
        %v627 = vadd.f32 0.0, %v626
        %v628 = vpop.f32.mrf.mxu0
        %v629 = vadd.f32 0.0, %v628
        %v630 = vpop.f32.mrf.mxu0
        %v631 = vadd.f32 0.0, %v630
        %v632 = vpop.f32.mrf.mxu0
        %v633 = vadd.f32 0.0, %v632
        %634 = vmatprep.mubr.bf16.mxu0 0
        %635 = vmatmul.mubr.bf16.gmra.mxu0 %v373
        %v636 = vpop.f32.mrf.mxu0
        %v637 = vadd.f32 0.0, %v636
        %v638 = vpop.f32.mrf.mxu0
        %v639 = vadd.f32 0.0, %v638
        %v640 = vpop.f32.mrf.mxu0
        %v641 = vadd.f32 0.0, %v640
        %v642 = vpop.f32.mrf.mxu0
        %v643 = vadd.f32 0.0, %v642
        %644 = vmatprep.mubr.bf16.mxu0 0
        %645 = vmatmul.mubr.bf16.gmra.mxu0 %v374
        %v646 = vpop.f32.mrf.mxu0
        %v647 = vadd.f32 0.0, %v646
        %v648 = vpop.f32.mrf.mxu0
        %v649 = vadd.f32 0.0, %v648
        %v650 = vpop.f32.mrf.mxu0
        %v651 = vadd.f32 0.0, %v650
        %v652 = vpop.f32.mrf.mxu0
        %v653 = vadd.f32 0.0, %v652
        %654 = vmatprep.mubr.bf16.mxu0 0
        %655 = vmatmul.mubr.bf16.gmra.mxu0 %v375
        %v656 = vpop.f32.mrf.mxu0
        %v657 = vadd.f32 0.0, %v656
        %v658 = vpop.f32.mrf.mxu0
        %v659 = vadd.f32 0.0, %v658
        %v660 = vpop.f32.mrf.mxu0
        %v661 = vadd.f32 0.0, %v660
        %v662 = vpop.f32.mrf.mxu0
        %v663 = vadd.f32 0.0, %v662
        %664 = vdwg.mxu0
        %v665 = vld [vmem:[%s195] sm:$0xf]
        %v666 = vld [vmem:[%s195 + $0x4] sm:$0xf]
        %v667 = vld [vmem:[%s195 + $0x8] sm:$0xf]
        %v668 = vld [vmem:[%s195 + $0xc] sm:$0xf]
        %v669 = vld [vmem:[%s195 + $0x10] sm:$0xf]
        %v670 = vld [vmem:[%s195 + $0x14] sm:$0xf]
        %v671 = vld [vmem:[%s195 + $0x18] sm:$0xf]
        %v672 = vld [vmem:[%s195 + $0x1c] sm:$0xf]
        %v673 = vld [vmem:[%s195 + $0x20] sm:$0xf]
        %v674 = vld [vmem:[%s195 + $0x24] sm:$0xf]
        %v675 = vld [vmem:[%s195 + $0x28] sm:$0xf]
        %v676 = vld [vmem:[%s195 + $0x2c] sm:$0xf]
        %v677 = vld [vmem:[%s195 + $0x30] sm:$0xf]
        %v678 = vld [vmem:[%s195 + $0x34] sm:$0xf]
        %v679 = vld [vmem:[%s195 + $0x38] sm:$0xf]
        %v680 = vld [vmem:[%s195 + $0x3c] sm:$0xf]
        %v681 = vld [vmem:[%s195 + $0x40] sm:$0xf]
        %v682 = vld [vmem:[%s195 + $0x44] sm:$0xf]
        %v683 = vld [vmem:[%s195 + $0x48] sm:$0xf]
        %v684 = vld [vmem:[%s195 + $0x4c] sm:$0xf]
        %v685 = vld [vmem:[%s195 + $0x50] sm:$0xf]
        %v686 = vld [vmem:[%s195 + $0x54] sm:$0xf]
        %v687 = vld [vmem:[%s195 + $0x58] sm:$0xf]
        %v688 = vld [vmem:[%s195 + $0x5c] sm:$0xf]
        %v689 = vld [vmem:[%s195 + $0x60] sm:$0xf]
        %v690 = vld [vmem:[%s195 + $0x64] sm:$0xf]
        %v691 = vld [vmem:[%s195 + $0x68] sm:$0xf]
        %v692 = vld [vmem:[%s195 + $0x6c] sm:$0xf]
        %v693 = vld [vmem:[%s195 + $0x70] sm:$0xf]
        %v694 = vld [vmem:[%s195 + $0x74] sm:$0xf]
        %v695 = vld [vmem:[%s195 + $0x78] sm:$0xf]
        %v696 = vld [vmem:[%s195 + $0x7c] sm:$0xf]
        %v729 = vunpack.c.l.b16 %v665
        %v730 = vunpack.c.l.b16 %v666
        %v731 = vunpack.c.l.b16 %v667
        %v732 = vunpack.c.l.b16 %v668
        %v733 = vunpack.c.l.b16 %v669
        %v734 = vunpack.c.l.b16 %v670
        %v735 = vunpack.c.l.b16 %v671
        %v736 = vunpack.c.l.b16 %v672
        %v737 = vunpack.c.l.b16 %v673
        %v738 = vunpack.c.l.b16 %v674
        %v739 = vunpack.c.l.b16 %v675
        %v740 = vunpack.c.l.b16 %v676
        %v741 = vunpack.c.l.b16 %v677
        %v742 = vunpack.c.l.b16 %v678
        %v743 = vunpack.c.l.b16 %v679
        %v744 = vunpack.c.l.b16 %v680
        %v745 = vunpack.c.l.b16 %v681
        %v746 = vunpack.c.l.b16 %v682
        %v747 = vunpack.c.l.b16 %v683
        %v748 = vunpack.c.l.b16 %v684
        %v749 = vunpack.c.l.b16 %v685
        %v750 = vunpack.c.l.b16 %v686
        %v751 = vunpack.c.l.b16 %v687
        %v752 = vunpack.c.l.b16 %v688
        %v753 = vunpack.c.l.b16 %v689
        %v754 = vunpack.c.l.b16 %v690
        %v755 = vunpack.c.l.b16 %v691
        %v756 = vunpack.c.l.b16 %v692
        %v757 = vunpack.c.l.b16 %v693
        %v758 = vunpack.c.l.b16 %v694
        %v759 = vunpack.c.l.b16 %v695
        %v760 = vunpack.c.l.b16 %v696
        %v761 = vpack.c.b16 %v730, %v729
        %v762 = vpack.c.b16 %v732, %v731
        %v763 = vpack.c.b16 %v734, %v733
        %v764 = vpack.c.b16 %v736, %v735
        %v765 = vpack.c.b16 %v738, %v737
        %v766 = vpack.c.b16 %v740, %v739
        %v767 = vpack.c.b16 %v742, %v741
        %v768 = vpack.c.b16 %v744, %v743
        %v769 = vpack.c.b16 %v746, %v745
        %v770 = vpack.c.b16 %v748, %v747
        %v771 = vpack.c.b16 %v750, %v749
        %v772 = vpack.c.b16 %v752, %v751
        %v773 = vpack.c.b16 %v754, %v753
        %v774 = vpack.c.b16 %v756, %v755
        %v775 = vpack.c.b16 %v758, %v757
        %v776 = vpack.c.b16 %v760, %v759
        %793 = vmatprep.subr.bf16.mxu0 %v455
        %794 = vmatpush1.bf16.msra.mxu0 %v454
        %795 = vmatprep.subr.bf16.mxu0 %v453
        %796 = vmatpush1.bf16.msra.mxu0 %v452
        %797 = vmatprep.subr.bf16.mxu0 %v451
        %798 = vmatpush1.bf16.msra.mxu0 %v450
        %799 = vmatprep.subr.bf16.mxu0 %v449
        %800 = vmatpush1.bf16.msra.mxu0 %v448
        %801 = vmatprep.subr.bf16.mxu0 %v447
        %802 = vmatpush1.bf16.msra.mxu0 %v446
        %803 = vmatprep.subr.bf16.mxu0 %v445
        %804 = vmatpush1.bf16.msra.mxu0 %v444
        %805 = vmatprep.subr.bf16.mxu0 %v443
        %806 = vmatpush1.bf16.msra.mxu0 %v442
        %807 = vmatprep.subr.bf16.mxu0 %v441
        %808 = vmatpush1.bf16.msra.mxu0 %v440
        %809 = vmatprep.subr.bf16.mxu0 0
        %810 = vmatpush2.bf16.msra.mxu0 0
        %811 = vmatprep.subr.bf16.mxu0 0
        %812 = vmatpush2.bf16.msra.mxu0 0
        %813 = vmatprep.subr.bf16.mxu0 0
        %814 = vmatpush2.bf16.msra.mxu0 0
        %815 = vmatprep.subr.bf16.mxu0 0
        %816 = vmatpush2.bf16.msra.mxu0 0
        %817 = vmatprep.subr.bf16.mxu0 0
        %818 = vmatpush2.bf16.msra.mxu0 0
        %819 = vmatprep.subr.bf16.mxu0 0
        %820 = vmatpush2.bf16.msra.mxu0 0
        %821 = vmatprep.subr.bf16.mxu0 0
        %822 = vmatpush2.bf16.msra.mxu0 0
        %823 = vmatprep.subr.bf16.mxu0 0
        %824 = vmatpush2.bf16.msra.mxu0 0
        %825 = vmatprep.mubr.bf16.mxu0 0
        %826 = vmatmul.mubr.bf16.gmra.mxu0 %v761
        %v827 = vpop.f32.mrf.mxu0
        %v828 = vadd.f32 0.0, %v827
        %v829 = vpop.f32.mrf.mxu0
        %v830 = vadd.f32 0.0, %v829
        %v831 = vpop.f32.mrf.mxu0
        %v832 = vadd.f32 0.0, %v831
        %v833 = vpop.f32.mrf.mxu0
        %v834 = vadd.f32 0.0, %v833
        %835 = vmatprep.mubr.bf16.mxu0 0
        %836 = vmatmul.mubr.bf16.gmra.mxu0 %v762
        %v837 = vpop.f32.mrf.mxu0
        %v838 = vadd.f32 0.0, %v837
        %v839 = vpop.f32.mrf.mxu0
        %v840 = vadd.f32 0.0, %v839
        %v841 = vpop.f32.mrf.mxu0
        %v842 = vadd.f32 0.0, %v841
        %v843 = vpop.f32.mrf.mxu0
        %v844 = vadd.f32 0.0, %v843
        %845 = vmatprep.mubr.bf16.mxu0 0
        %846 = vmatmul.mubr.bf16.gmra.mxu0 %v763
        %v847 = vpop.f32.mrf.mxu0
        %v848 = vadd.f32 0.0, %v847
        %v849 = vpop.f32.mrf.mxu0
        %v850 = vadd.f32 0.0, %v849
        %v851 = vpop.f32.mrf.mxu0
        %v852 = vadd.f32 0.0, %v851
        %v853 = vpop.f32.mrf.mxu0
        %v854 = vadd.f32 0.0, %v853
        %855 = vmatprep.mubr.bf16.mxu0 0
        %856 = vmatmul.mubr.bf16.gmra.mxu0 %v764
        %v857 = vpop.f32.mrf.mxu0
        %v858 = vadd.f32 0.0, %v857
        %v859 = vpop.f32.mrf.mxu0
        %v860 = vadd.f32 0.0, %v859
        %v861 = vpop.f32.mrf.mxu0
        %v862 = vadd.f32 0.0, %v861
        %v863 = vpop.f32.mrf.mxu0
        %v864 = vadd.f32 0.0, %v863
        %865 = vmatprep.mubr.bf16.mxu0 0
        %866 = vmatmul.mubr.bf16.gmra.mxu0 %v765
        %v867 = vpop.f32.mrf.mxu0
        %v868 = vadd.f32 0.0, %v867
        %v869 = vpop.f32.mrf.mxu0
        %v870 = vadd.f32 0.0, %v869
        %v871 = vpop.f32.mrf.mxu0
        %v872 = vadd.f32 0.0, %v871
        %v873 = vpop.f32.mrf.mxu0
        %v874 = vadd.f32 0.0, %v873
        %875 = vmatprep.mubr.bf16.mxu0 0
        %876 = vmatmul.mubr.bf16.gmra.mxu0 %v766
        %v877 = vpop.f32.mrf.mxu0
        %v878 = vadd.f32 0.0, %v877
        %v879 = vpop.f32.mrf.mxu0
        %v880 = vadd.f32 0.0, %v879
        %v881 = vpop.f32.mrf.mxu0
        %v882 = vadd.f32 0.0, %v881
        %v883 = vpop.f32.mrf.mxu0
        %v884 = vadd.f32 0.0, %v883
        %885 = vmatprep.mubr.bf16.mxu0 0
        %886 = vmatmul.mubr.bf16.gmra.mxu0 %v767
        %v887 = vpop.f32.mrf.mxu0
        %v888 = vadd.f32 0.0, %v887
        %v889 = vpop.f32.mrf.mxu0
        %v890 = vadd.f32 0.0, %v889
        %v891 = vpop.f32.mrf.mxu0
        %v892 = vadd.f32 0.0, %v891
        %v893 = vpop.f32.mrf.mxu0
        %v894 = vadd.f32 0.0, %v893
        %895 = vmatprep.mubr.bf16.mxu0 0
        %896 = vmatmul.mubr.bf16.gmra.mxu0 %v768
        %v897 = vpop.f32.mrf.mxu0
        %v898 = vadd.f32 0.0, %v897
        %v899 = vpop.f32.mrf.mxu0
        %v900 = vadd.f32 0.0, %v899
        %v901 = vpop.f32.mrf.mxu0
        %v902 = vadd.f32 0.0, %v901
        %v903 = vpop.f32.mrf.mxu0
        %v904 = vadd.f32 0.0, %v903
        %905 = vmatprep.mubr.bf16.mxu0 0
        %906 = vmatmul.mubr.bf16.gmra.mxu0 %v769
        %v907 = vpop.f32.mrf.mxu0
        %v908 = vadd.f32 0.0, %v907
        %v909 = vpop.f32.mrf.mxu0
        %v910 = vadd.f32 0.0, %v909
        %v911 = vpop.f32.mrf.mxu0
        %v912 = vadd.f32 0.0, %v911
        %v913 = vpop.f32.mrf.mxu0
        %v914 = vadd.f32 0.0, %v913
        %915 = vmatprep.mubr.bf16.mxu0 0
        %916 = vmatmul.mubr.bf16.gmra.mxu0 %v770
        %v917 = vpop.f32.mrf.mxu0
        %v918 = vadd.f32 0.0, %v917
        %v919 = vpop.f32.mrf.mxu0
        %v920 = vadd.f32 0.0, %v919
        %v921 = vpop.f32.mrf.mxu0
        %v922 = vadd.f32 0.0, %v921
        %v923 = vpop.f32.mrf.mxu0
        %v924 = vadd.f32 0.0, %v923
        %925 = vmatprep.mubr.bf16.mxu0 0
        %926 = vmatmul.mubr.bf16.gmra.mxu0 %v771
        %v927 = vpop.f32.mrf.mxu0
        %v928 = vadd.f32 0.0, %v927
        %v929 = vpop.f32.mrf.mxu0
        %v930 = vadd.f32 0.0, %v929
        %v931 = vpop.f32.mrf.mxu0
        %v932 = vadd.f32 0.0, %v931
        %v933 = vpop.f32.mrf.mxu0
        %v934 = vadd.f32 0.0, %v933
        %935 = vmatprep.mubr.bf16.mxu0 0
        %936 = vmatmul.mubr.bf16.gmra.mxu0 %v772
        %v937 = vpop.f32.mrf.mxu0
        %v938 = vadd.f32 0.0, %v937
        %v939 = vpop.f32.mrf.mxu0
        %v940 = vadd.f32 0.0, %v939
        %v941 = vpop.f32.mrf.mxu0
        %v942 = vadd.f32 0.0, %v941
        %v943 = vpop.f32.mrf.mxu0
        %v944 = vadd.f32 0.0, %v943
        %945 = vmatprep.mubr.bf16.mxu0 0
        %946 = vmatmul.mubr.bf16.gmra.mxu0 %v773
        %v947 = vpop.f32.mrf.mxu0
        %v948 = vadd.f32 0.0, %v947
        %v949 = vpop.f32.mrf.mxu0
        %v950 = vadd.f32 0.0, %v949
        %v951 = vpop.f32.mrf.mxu0
        %v952 = vadd.f32 0.0, %v951
        %v953 = vpop.f32.mrf.mxu0
        %v954 = vadd.f32 0.0, %v953
        %955 = vmatprep.mubr.bf16.mxu0 0
        %956 = vmatmul.mubr.bf16.gmra.mxu0 %v774
        %v957 = vpop.f32.mrf.mxu0
        %v958 = vadd.f32 0.0, %v957
        %v959 = vpop.f32.mrf.mxu0
        %v960 = vadd.f32 0.0, %v959
        %v961 = vpop.f32.mrf.mxu0
        %v962 = vadd.f32 0.0, %v961
        %v963 = vpop.f32.mrf.mxu0
        %v964 = vadd.f32 0.0, %v963
        %965 = vmatprep.mubr.bf16.mxu0 0
        %966 = vmatmul.mubr.bf16.gmra.mxu0 %v775
        %v967 = vpop.f32.mrf.mxu0
        %v968 = vadd.f32 0.0, %v967
        %v969 = vpop.f32.mrf.mxu0
        %v970 = vadd.f32 0.0, %v969
        %v971 = vpop.f32.mrf.mxu0
        %v972 = vadd.f32 0.0, %v971
        %v973 = vpop.f32.mrf.mxu0
        %v974 = vadd.f32 0.0, %v973
        %975 = vmatprep.mubr.bf16.mxu0 0
        %976 = vmatmul.mubr.bf16.gmra.mxu0 %v776
        %v977 = vpop.f32.mrf.mxu0
        %v978 = vadd.f32 0.0, %v977
        %v979 = vpop.f32.mrf.mxu0
        %v980 = vadd.f32 0.0, %v979
        %v981 = vpop.f32.mrf.mxu0
        %v982 = vadd.f32 0.0, %v981
        %v983 = vpop.f32.mrf.mxu0
        %v984 = vadd.f32 0.0, %v983
        %985 = vdwg.mxu0
        %v986 = vmul.f32 %v507, %v507
        %v987 = vmul.f32 %v511, %v511
        %v988 = vmul.f32 %v517, %v517
        %v989 = vmul.f32 %v521, %v521
        %v990 = vmul.f32 %v527, %v527
        %v991 = vmul.f32 %v531, %v531
        %v992 = vmul.f32 %v537, %v537
        %v993 = vmul.f32 %v541, %v541
        %v994 = vmul.f32 %v547, %v547
        %v995 = vmul.f32 %v551, %v551
        %v996 = vmul.f32 %v557, %v557
        %v997 = vmul.f32 %v561, %v561
        %v998 = vmul.f32 %v567, %v567
        %v999 = vmul.f32 %v571, %v571
        %v1000 = vmul.f32 %v577, %v577
        %v1001 = vmul.f32 %v581, %v581
        %v1002 = vmul.f32 %v587, %v587
        %v1003 = vmul.f32 %v591, %v591
        %v1004 = vmul.f32 %v597, %v597
        %v1005 = vmul.f32 %v601, %v601
        %v1006 = vmul.f32 %v607, %v607
        %v1007 = vmul.f32 %v611, %v611
        %v1008 = vmul.f32 %v617, %v617
        %v1009 = vmul.f32 %v621, %v621
        %v1010 = vmul.f32 %v627, %v627
        %v1011 = vmul.f32 %v631, %v631
        %v1012 = vmul.f32 %v637, %v637
        %v1013 = vmul.f32 %v641, %v641
        %v1014 = vmul.f32 %v647, %v647
        %v1015 = vmul.f32 %v651, %v651
        %v1016 = vmul.f32 %v657, %v657
        %v1017 = vmul.f32 %v661, %v661
        %v1018 = vmul.f32 %v509, %v509
        %v1019 = vmul.f32 %v513, %v513
        %v1020 = vmul.f32 %v519, %v519
        %v1021 = vmul.f32 %v523, %v523
        %v1022 = vmul.f32 %v529, %v529
        %v1023 = vmul.f32 %v533, %v533
        %v1024 = vmul.f32 %v539, %v539
        %v1025 = vmul.f32 %v543, %v543
        %v1026 = vmul.f32 %v549, %v549
        %v1027 = vmul.f32 %v553, %v553
        %v1028 = vmul.f32 %v559, %v559
        %v1029 = vmul.f32 %v563, %v563
        %v1030 = vmul.f32 %v569, %v569
        %v1031 = vmul.f32 %v573, %v573
        %v1032 = vmul.f32 %v579, %v579
        %v1033 = vmul.f32 %v583, %v583
        %v1034 = vmul.f32 %v589, %v589
        %v1035 = vmul.f32 %v593, %v593
        %v1036 = vmul.f32 %v599, %v599
        %v1037 = vmul.f32 %v603, %v603
        %v1038 = vmul.f32 %v609, %v609
        %v1039 = vmul.f32 %v613, %v613
        %v1040 = vmul.f32 %v619, %v619
        %v1041 = vmul.f32 %v623, %v623
        %v1042 = vmul.f32 %v629, %v629
        %v1043 = vmul.f32 %v633, %v633
        %v1044 = vmul.f32 %v639, %v639
        %v1045 = vmul.f32 %v643, %v643
        %v1046 = vmul.f32 %v649, %v649
        %v1047 = vmul.f32 %v653, %v653
        %v1048 = vmul.f32 %v659, %v659
        %v1049 = vmul.f32 %v663, %v663
        %v1050 = vadd.f32 %v986, %v1018
        %v1051 = vadd.f32 %v987, %v1019
        %v1052 = vadd.f32 %v988, %v1020
        %v1053 = vadd.f32 %v989, %v1021
        %v1054 = vadd.f32 %v990, %v1022
        %v1055 = vadd.f32 %v991, %v1023
        %v1056 = vadd.f32 %v992, %v1024
        %v1057 = vadd.f32 %v993, %v1025
        %v1058 = vadd.f32 %v994, %v1026
        %v1059 = vadd.f32 %v995, %v1027
        %v1060 = vadd.f32 %v996, %v1028
        %v1061 = vadd.f32 %v997, %v1029
        %v1062 = vadd.f32 %v998, %v1030
        %v1063 = vadd.f32 %v999, %v1031
        %v1064 = vadd.f32 %v1000, %v1032
        %v1065 = vadd.f32 %v1001, %v1033
        %v1066 = vadd.f32 %v1002, %v1034
        %v1067 = vadd.f32 %v1003, %v1035
        %v1068 = vadd.f32 %v1004, %v1036
        %v1069 = vadd.f32 %v1005, %v1037
        %v1070 = vadd.f32 %v1006, %v1038
        %v1071 = vadd.f32 %v1007, %v1039
        %v1072 = vadd.f32 %v1008, %v1040
        %v1073 = vadd.f32 %v1009, %v1041
        %v1074 = vadd.f32 %v1010, %v1042
        %v1075 = vadd.f32 %v1011, %v1043
        %v1076 = vadd.f32 %v1012, %v1044
        %v1077 = vadd.f32 %v1013, %v1045
        %v1078 = vadd.f32 %v1014, %v1046
        %v1079 = vadd.f32 %v1015, %v1047
        %v1080 = vadd.f32 %v1016, %v1048
        %v1081 = vadd.f32 %v1017, %v1049
        %v1082 = vmax.f32 %v1050, 1e-08
        %v1083 = vmax.f32 %v1051, 1e-08
        %v1084 = vmax.f32 %v1052, 1e-08
        %v1085 = vmax.f32 %v1053, 1e-08
        %v1086 = vmax.f32 %v1054, 1e-08
        %v1087 = vmax.f32 %v1055, 1e-08
        %v1088 = vmax.f32 %v1056, 1e-08
        %v1089 = vmax.f32 %v1057, 1e-08
        %v1090 = vmax.f32 %v1058, 1e-08
        %v1091 = vmax.f32 %v1059, 1e-08
        %v1092 = vmax.f32 %v1060, 1e-08
        %v1093 = vmax.f32 %v1061, 1e-08
        %v1094 = vmax.f32 %v1062, 1e-08
        %v1095 = vmax.f32 %v1063, 1e-08
        %v1096 = vmax.f32 %v1064, 1e-08
        %v1097 = vmax.f32 %v1065, 1e-08
        %v1098 = vmax.f32 %v1066, 1e-08
        %v1099 = vmax.f32 %v1067, 1e-08
        %v1100 = vmax.f32 %v1068, 1e-08
        %v1101 = vmax.f32 %v1069, 1e-08
        %v1102 = vmax.f32 %v1070, 1e-08
        %v1103 = vmax.f32 %v1071, 1e-08
        %v1104 = vmax.f32 %v1072, 1e-08
        %v1105 = vmax.f32 %v1073, 1e-08
        %v1106 = vmax.f32 %v1074, 1e-08
        %v1107 = vmax.f32 %v1075, 1e-08
        %v1108 = vmax.f32 %v1076, 1e-08
        %v1109 = vmax.f32 %v1077, 1e-08
        %v1110 = vmax.f32 %v1078, 1e-08
        %v1111 = vmax.f32 %v1079, 1e-08
        %v1112 = vmax.f32 %v1080, 1e-08
        %v1113 = vmax.f32 %v1081, 1e-08
        %v1114 = vmul.f32 %v828, %v828
        %v1115 = vmul.f32 %v832, %v832
        %v1116 = vmul.f32 %v838, %v838
        %v1117 = vmul.f32 %v842, %v842
        %v1118 = vmul.f32 %v848, %v848
        %v1119 = vmul.f32 %v852, %v852
        %v1120 = vmul.f32 %v858, %v858
        %v1121 = vmul.f32 %v862, %v862
        %v1122 = vmul.f32 %v868, %v868
        %v1123 = vmul.f32 %v872, %v872
        %v1124 = vmul.f32 %v878, %v878
        %v1125 = vmul.f32 %v882, %v882
        %v1126 = vmul.f32 %v888, %v888
        %v1127 = vmul.f32 %v892, %v892
        %v1128 = vmul.f32 %v898, %v898
        %v1129 = vmul.f32 %v902, %v902
        %v1130 = vmul.f32 %v908, %v908
        %v1131 = vmul.f32 %v912, %v912
        %v1132 = vmul.f32 %v918, %v918
        %v1133 = vmul.f32 %v922, %v922
        %v1134 = vmul.f32 %v928, %v928
        %v1135 = vmul.f32 %v932, %v932
        %v1136 = vmul.f32 %v938, %v938
        %v1137 = vmul.f32 %v942, %v942
        %v1138 = vmul.f32 %v948, %v948
        %v1139 = vmul.f32 %v952, %v952
        %v1140 = vmul.f32 %v958, %v958
        %v1141 = vmul.f32 %v962, %v962
        %v1142 = vmul.f32 %v968, %v968
        %v1143 = vmul.f32 %v972, %v972
        %v1144 = vmul.f32 %v978, %v978
        %v1145 = vmul.f32 %v982, %v982
        %v1146 = vmul.f32 %v830, %v830
        %v1147 = vmul.f32 %v834, %v834
        %v1148 = vmul.f32 %v840, %v840
        %v1149 = vmul.f32 %v844, %v844
        %v1150 = vmul.f32 %v850, %v850
        %v1151 = vmul.f32 %v854, %v854
        %v1152 = vmul.f32 %v860, %v860
        %v1153 = vmul.f32 %v864, %v864
        %v1154 = vmul.f32 %v870, %v870
        %v1155 = vmul.f32 %v874, %v874
        %v1156 = vmul.f32 %v880, %v880
        %v1157 = vmul.f32 %v884, %v884
        %v1158 = vmul.f32 %v890, %v890
        %v1159 = vmul.f32 %v894, %v894
        %v1160 = vmul.f32 %v900, %v900
        %v1161 = vmul.f32 %v904, %v904
        %v1162 = vmul.f32 %v910, %v910
        %v1163 = vmul.f32 %v914, %v914
        %v1164 = vmul.f32 %v920, %v920
        %v1165 = vmul.f32 %v924, %v924
        %v1166 = vmul.f32 %v930, %v930
        %v1167 = vmul.f32 %v934, %v934
        %v1168 = vmul.f32 %v940, %v940
        %v1169 = vmul.f32 %v944, %v944
        %v1170 = vmul.f32 %v950, %v950
        %v1171 = vmul.f32 %v954, %v954
        %v1172 = vmul.f32 %v960, %v960
        %v1173 = vmul.f32 %v964, %v964
        %v1174 = vmul.f32 %v970, %v970
        %v1175 = vmul.f32 %v974, %v974
        %v1176 = vmul.f32 %v980, %v980
        %v1177 = vmul.f32 %v984, %v984
        %v1178 = vadd.f32 %v1114, %v1146
        %v1179 = vadd.f32 %v1115, %v1147
        %v1180 = vadd.f32 %v1116, %v1148
        %v1181 = vadd.f32 %v1117, %v1149
        %v1182 = vadd.f32 %v1118, %v1150
        %v1183 = vadd.f32 %v1119, %v1151
        %v1184 = vadd.f32 %v1120, %v1152
        %v1185 = vadd.f32 %v1121, %v1153
        %v1186 = vadd.f32 %v1122, %v1154
        %v1187 = vadd.f32 %v1123, %v1155
        %v1188 = vadd.f32 %v1124, %v1156
        %v1189 = vadd.f32 %v1125, %v1157
        %v1190 = vadd.f32 %v1126, %v1158
        %v1191 = vadd.f32 %v1127, %v1159
        %v1192 = vadd.f32 %v1128, %v1160
        %v1193 = vadd.f32 %v1129, %v1161
        %v1194 = vadd.f32 %v1130, %v1162
        %v1195 = vadd.f32 %v1131, %v1163
        %v1196 = vadd.f32 %v1132, %v1164
        %v1197 = vadd.f32 %v1133, %v1165
        %v1198 = vadd.f32 %v1134, %v1166
        %v1199 = vadd.f32 %v1135, %v1167
        %v1200 = vadd.f32 %v1136, %v1168
        %v1201 = vadd.f32 %v1137, %v1169
        %v1202 = vadd.f32 %v1138, %v1170
        %v1203 = vadd.f32 %v1139, %v1171
        %v1204 = vadd.f32 %v1140, %v1172
        %v1205 = vadd.f32 %v1141, %v1173
        %v1206 = vadd.f32 %v1142, %v1174
        %v1207 = vadd.f32 %v1143, %v1175
        %v1208 = vadd.f32 %v1144, %v1176
        %v1209 = vadd.f32 %v1145, %v1177
        %v1210 = vmax.f32 %v1178, 1e-08
        %v1211 = vmax.f32 %v1179, 1e-08
        %v1212 = vmax.f32 %v1180, 1e-08
        %v1213 = vmax.f32 %v1181, 1e-08
        %v1214 = vmax.f32 %v1182, 1e-08
        %v1215 = vmax.f32 %v1183, 1e-08
        %v1216 = vmax.f32 %v1184, 1e-08
        %v1217 = vmax.f32 %v1185, 1e-08
        %v1218 = vmax.f32 %v1186, 1e-08
        %v1219 = vmax.f32 %v1187, 1e-08
        %v1220 = vmax.f32 %v1188, 1e-08
        %v1221 = vmax.f32 %v1189, 1e-08
        %v1222 = vmax.f32 %v1190, 1e-08
        %v1223 = vmax.f32 %v1191, 1e-08
        %v1224 = vmax.f32 %v1192, 1e-08
        %v1225 = vmax.f32 %v1193, 1e-08
        %v1226 = vmax.f32 %v1194, 1e-08
        %v1227 = vmax.f32 %v1195, 1e-08
        %v1228 = vmax.f32 %v1196, 1e-08
        %v1229 = vmax.f32 %v1197, 1e-08
        %v1230 = vmax.f32 %v1198, 1e-08
        %v1231 = vmax.f32 %v1199, 1e-08
        %v1232 = vmax.f32 %v1200, 1e-08
        %v1233 = vmax.f32 %v1201, 1e-08
        %v1234 = vmax.f32 %v1202, 1e-08
        %v1235 = vmax.f32 %v1203, 1e-08
        %v1236 = vmax.f32 %v1204, 1e-08
        %v1237 = vmax.f32 %v1205, 1e-08
        %v1238 = vmax.f32 %v1206, 1e-08
        %v1239 = vmax.f32 %v1207, 1e-08
        %v1240 = vmax.f32 %v1208, 1e-08
        %v1241 = vmax.f32 %v1209, 1e-08
        %v1242 = vrsqrt.pop %v1082
        %v1243 = vmul.f32 %v1082, %v1242
        %vm1244 = vcmp.eq.f32.partialorder %v1082, inf
        %v1245 = vsel %vm1244, %v1082, %v1243
        %vm1246 = vcmp.eq.f32.partialorder %v1082, 0.0
        %v1247 = vand.u32 %v1082, 2147483648
        %v1248 = vsel %vm1246, %v1247, %v1245
        %v1249 = vrsqrt.pop %v1083
        %v1250 = vmul.f32 %v1083, %v1249
        %vm1251 = vcmp.eq.f32.partialorder %v1083, inf
        %v1252 = vsel %vm1251, %v1083, %v1250
        %vm1253 = vcmp.eq.f32.partialorder %v1083, 0.0
        %v1254 = vand.u32 %v1083, 2147483648
        %v1255 = vsel %vm1253, %v1254, %v1252
        %v1256 = vrsqrt.pop %v1084
        %v1257 = vmul.f32 %v1084, %v1256
        %vm1258 = vcmp.eq.f32.partialorder %v1084, inf
        %v1259 = vsel %vm1258, %v1084, %v1257
        %vm1260 = vcmp.eq.f32.partialorder %v1084, 0.0
        %v1261 = vand.u32 %v1084, 2147483648
        %v1262 = vsel %vm1260, %v1261, %v1259
        %v1263 = vrsqrt.pop %v1085
        %v1264 = vmul.f32 %v1085, %v1263
        %vm1265 = vcmp.eq.f32.partialorder %v1085, inf
        %v1266 = vsel %vm1265, %v1085, %v1264
        %vm1267 = vcmp.eq.f32.partialorder %v1085, 0.0
        %v1268 = vand.u32 %v1085, 2147483648
        %v1269 = vsel %vm1267, %v1268, %v1266
        %v1270 = vrsqrt.pop %v1086
        %v1271 = vmul.f32 %v1086, %v1270
        %vm1272 = vcmp.eq.f32.partialorder %v1086, inf
        %v1273 = vsel %vm1272, %v1086, %v1271
        %vm1274 = vcmp.eq.f32.partialorder %v1086, 0.0
        %v1275 = vand.u32 %v1086, 2147483648
        %v1276 = vsel %vm1274, %v1275, %v1273
        %v1277 = vrsqrt.pop %v1087
        %v1278 = vmul.f32 %v1087, %v1277
        %vm1279 = vcmp.eq.f32.partialorder %v1087, inf
        %v1280 = vsel %vm1279, %v1087, %v1278
        %vm1281 = vcmp.eq.f32.partialorder %v1087, 0.0
        %v1282 = vand.u32 %v1087, 2147483648
        %v1283 = vsel %vm1281, %v1282, %v1280
        %v1284 = vrsqrt.pop %v1088
        %v1285 = vmul.f32 %v1088, %v1284
        %vm1286 = vcmp.eq.f32.partialorder %v1088, inf
        %v1287 = vsel %vm1286, %v1088, %v1285
        %vm1288 = vcmp.eq.f32.partialorder %v1088, 0.0
        %v1289 = vand.u32 %v1088, 2147483648
        %v1290 = vsel %vm1288, %v1289, %v1287
        %v1291 = vrsqrt.pop %v1089
        %v1292 = vmul.f32 %v1089, %v1291
        %vm1293 = vcmp.eq.f32.partialorder %v1089, inf
        %v1294 = vsel %vm1293, %v1089, %v1292
        %vm1295 = vcmp.eq.f32.partialorder %v1089, 0.0
        %v1296 = vand.u32 %v1089, 2147483648
        %v1297 = vsel %vm1295, %v1296, %v1294
        %v1298 = vrsqrt.pop %v1090
        %v1299 = vmul.f32 %v1090, %v1298
        %vm1300 = vcmp.eq.f32.partialorder %v1090, inf
        %v1301 = vsel %vm1300, %v1090, %v1299
        %vm1302 = vcmp.eq.f32.partialorder %v1090, 0.0
        %v1303 = vand.u32 %v1090, 2147483648
        %v1304 = vsel %vm1302, %v1303, %v1301
        %v1305 = vrsqrt.pop %v1091
        %v1306 = vmul.f32 %v1091, %v1305
        %vm1307 = vcmp.eq.f32.partialorder %v1091, inf
        %v1308 = vsel %vm1307, %v1091, %v1306
        %vm1309 = vcmp.eq.f32.partialorder %v1091, 0.0
        %v1310 = vand.u32 %v1091, 2147483648
        %v1311 = vsel %vm1309, %v1310, %v1308
        %v1312 = vrsqrt.pop %v1092
        %v1313 = vmul.f32 %v1092, %v1312
        %vm1314 = vcmp.eq.f32.partialorder %v1092, inf
        %v1315 = vsel %vm1314, %v1092, %v1313
        %vm1316 = vcmp.eq.f32.partialorder %v1092, 0.0
        %v1317 = vand.u32 %v1092, 2147483648
        %v1318 = vsel %vm1316, %v1317, %v1315
        %v1319 = vrsqrt.pop %v1093
        %v1320 = vmul.f32 %v1093, %v1319
        %vm1321 = vcmp.eq.f32.partialorder %v1093, inf
        %v1322 = vsel %vm1321, %v1093, %v1320
        %vm1323 = vcmp.eq.f32.partialorder %v1093, 0.0
        %v1324 = vand.u32 %v1093, 2147483648
        %v1325 = vsel %vm1323, %v1324, %v1322
        %v1326 = vrsqrt.pop %v1094
        %v1327 = vmul.f32 %v1094, %v1326
        %vm1328 = vcmp.eq.f32.partialorder %v1094, inf
        %v1329 = vsel %vm1328, %v1094, %v1327
        %vm1330 = vcmp.eq.f32.partialorder %v1094, 0.0
        %v1331 = vand.u32 %v1094, 2147483648
        %v1332 = vsel %vm1330, %v1331, %v1329
        %v1333 = vrsqrt.pop %v1095
        %v1334 = vmul.f32 %v1095, %v1333
        %vm1335 = vcmp.eq.f32.partialorder %v1095, inf
        %v1336 = vsel %vm1335, %v1095, %v1334
        %vm1337 = vcmp.eq.f32.partialorder %v1095, 0.0
        %v1338 = vand.u32 %v1095, 2147483648
        %v1339 = vsel %vm1337, %v1338, %v1336
        %v1340 = vrsqrt.pop %v1096
        %v1341 = vmul.f32 %v1096, %v1340
        %vm1342 = vcmp.eq.f32.partialorder %v1096, inf
        %v1343 = vsel %vm1342, %v1096, %v1341
        %vm1344 = vcmp.eq.f32.partialorder %v1096, 0.0
        %v1345 = vand.u32 %v1096, 2147483648
        %v1346 = vsel %vm1344, %v1345, %v1343
        %v1347 = vrsqrt.pop %v1097
        %v1348 = vmul.f32 %v1097, %v1347
        %vm1349 = vcmp.eq.f32.partialorder %v1097, inf
        %v1350 = vsel %vm1349, %v1097, %v1348
        %vm1351 = vcmp.eq.f32.partialorder %v1097, 0.0
        %v1352 = vand.u32 %v1097, 2147483648
        %v1353 = vsel %vm1351, %v1352, %v1350
        %v1354 = vrsqrt.pop %v1098
        %v1355 = vmul.f32 %v1098, %v1354
        %vm1356 = vcmp.eq.f32.partialorder %v1098, inf
        %v1357 = vsel %vm1356, %v1098, %v1355
        %vm1358 = vcmp.eq.f32.partialorder %v1098, 0.0
        %v1359 = vand.u32 %v1098, 2147483648
        %v1360 = vsel %vm1358, %v1359, %v1357
        %v1361 = vrsqrt.pop %v1099
        %v1362 = vmul.f32 %v1099, %v1361
        %vm1363 = vcmp.eq.f32.partialorder %v1099, inf
        %v1364 = vsel %vm1363, %v1099, %v1362
        %vm1365 = vcmp.eq.f32.partialorder %v1099, 0.0
        %v1366 = vand.u32 %v1099, 2147483648
        %v1367 = vsel %vm1365, %v1366, %v1364
        %v1368 = vrsqrt.pop %v1100
        %v1369 = vmul.f32 %v1100, %v1368
        %vm1370 = vcmp.eq.f32.partialorder %v1100, inf
        %v1371 = vsel %vm1370, %v1100, %v1369
        %vm1372 = vcmp.eq.f32.partialorder %v1100, 0.0
        %v1373 = vand.u32 %v1100, 2147483648
        %v1374 = vsel %vm1372, %v1373, %v1371
        %v1375 = vrsqrt.pop %v1101
        %v1376 = vmul.f32 %v1101, %v1375
        %vm1377 = vcmp.eq.f32.partialorder %v1101, inf
        %v1378 = vsel %vm1377, %v1101, %v1376
        %vm1379 = vcmp.eq.f32.partialorder %v1101, 0.0
        %v1380 = vand.u32 %v1101, 2147483648
        %v1381 = vsel %vm1379, %v1380, %v1378
        %v1382 = vrsqrt.pop %v1102
        %v1383 = vmul.f32 %v1102, %v1382
        %vm1384 = vcmp.eq.f32.partialorder %v1102, inf
        %v1385 = vsel %vm1384, %v1102, %v1383
        %vm1386 = vcmp.eq.f32.partialorder %v1102, 0.0
        %v1387 = vand.u32 %v1102, 2147483648
        %v1388 = vsel %vm1386, %v1387, %v1385
        %v1389 = vrsqrt.pop %v1103
        %v1390 = vmul.f32 %v1103, %v1389
        %vm1391 = vcmp.eq.f32.partialorder %v1103, inf
        %v1392 = vsel %vm1391, %v1103, %v1390
        %vm1393 = vcmp.eq.f32.partialorder %v1103, 0.0
        %v1394 = vand.u32 %v1103, 2147483648
        %v1395 = vsel %vm1393, %v1394, %v1392
        %v1396 = vrsqrt.pop %v1104
        %v1397 = vmul.f32 %v1104, %v1396
        %vm1398 = vcmp.eq.f32.partialorder %v1104, inf
        %v1399 = vsel %vm1398, %v1104, %v1397
        %vm1400 = vcmp.eq.f32.partialorder %v1104, 0.0
        %v1401 = vand.u32 %v1104, 2147483648
        %v1402 = vsel %vm1400, %v1401, %v1399
        %v1403 = vrsqrt.pop %v1105
        %v1404 = vmul.f32 %v1105, %v1403
        %vm1405 = vcmp.eq.f32.partialorder %v1105, inf
        %v1406 = vsel %vm1405, %v1105, %v1404
        %vm1407 = vcmp.eq.f32.partialorder %v1105, 0.0
        %v1408 = vand.u32 %v1105, 2147483648
        %v1409 = vsel %vm1407, %v1408, %v1406
        %v1410 = vrsqrt.pop %v1106
        %v1411 = vmul.f32 %v1106, %v1410
        %vm1412 = vcmp.eq.f32.partialorder %v1106, inf
        %v1413 = vsel %vm1412, %v1106, %v1411
        %vm1414 = vcmp.eq.f32.partialorder %v1106, 0.0
        %v1415 = vand.u32 %v1106, 2147483648
        %v1416 = vsel %vm1414, %v1415, %v1413
        %v1417 = vrsqrt.pop %v1107
        %v1418 = vmul.f32 %v1107, %v1417
        %vm1419 = vcmp.eq.f32.partialorder %v1107, inf
        %v1420 = vsel %vm1419, %v1107, %v1418
        %vm1421 = vcmp.eq.f32.partialorder %v1107, 0.0
        %v1422 = vand.u32 %v1107, 2147483648
        %v1423 = vsel %vm1421, %v1422, %v1420
        %v1424 = vrsqrt.pop %v1108
        %v1425 = vmul.f32 %v1108, %v1424
        %vm1426 = vcmp.eq.f32.partialorder %v1108, inf
        %v1427 = vsel %vm1426, %v1108, %v1425
        %vm1428 = vcmp.eq.f32.partialorder %v1108, 0.0
        %v1429 = vand.u32 %v1108, 2147483648
        %v1430 = vsel %vm1428, %v1429, %v1427
        %v1431 = vrsqrt.pop %v1109
        %v1432 = vmul.f32 %v1109, %v1431
        %vm1433 = vcmp.eq.f32.partialorder %v1109, inf
        %v1434 = vsel %vm1433, %v1109, %v1432
        %vm1435 = vcmp.eq.f32.partialorder %v1109, 0.0
        %v1436 = vand.u32 %v1109, 2147483648
        %v1437 = vsel %vm1435, %v1436, %v1434
        %v1438 = vrsqrt.pop %v1110
        %v1439 = vmul.f32 %v1110, %v1438
        %vm1440 = vcmp.eq.f32.partialorder %v1110, inf
        %v1441 = vsel %vm1440, %v1110, %v1439
        %vm1442 = vcmp.eq.f32.partialorder %v1110, 0.0
        %v1443 = vand.u32 %v1110, 2147483648
        %v1444 = vsel %vm1442, %v1443, %v1441
        %v1445 = vrsqrt.pop %v1111
        %v1446 = vmul.f32 %v1111, %v1445
        %vm1447 = vcmp.eq.f32.partialorder %v1111, inf
        %v1448 = vsel %vm1447, %v1111, %v1446
        %vm1449 = vcmp.eq.f32.partialorder %v1111, 0.0
        %v1450 = vand.u32 %v1111, 2147483648
        %v1451 = vsel %vm1449, %v1450, %v1448
        %v1452 = vrsqrt.pop %v1112
        %v1453 = vmul.f32 %v1112, %v1452
        %vm1454 = vcmp.eq.f32.partialorder %v1112, inf
        %v1455 = vsel %vm1454, %v1112, %v1453
        %vm1456 = vcmp.eq.f32.partialorder %v1112, 0.0
        %v1457 = vand.u32 %v1112, 2147483648
        %v1458 = vsel %vm1456, %v1457, %v1455
        %v1459 = vrsqrt.pop %v1113
        %v1460 = vmul.f32 %v1113, %v1459
        %vm1461 = vcmp.eq.f32.partialorder %v1113, inf
        %v1462 = vsel %vm1461, %v1113, %v1460
        %vm1463 = vcmp.eq.f32.partialorder %v1113, 0.0
        %v1464 = vand.u32 %v1113, 2147483648
        %v1465 = vsel %vm1463, %v1464, %v1462
        %v1466 = vrsqrt.pop %v1210
        %v1467 = vmul.f32 %v1210, %v1466
        %vm1468 = vcmp.eq.f32.partialorder %v1210, inf
        %v1469 = vsel %vm1468, %v1210, %v1467
        %vm1470 = vcmp.eq.f32.partialorder %v1210, 0.0
        %v1471 = vand.u32 %v1210, 2147483648
        %v1472 = vsel %vm1470, %v1471, %v1469
        %v1473 = vrsqrt.pop %v1211
        %v1474 = vmul.f32 %v1211, %v1473
        %vm1475 = vcmp.eq.f32.partialorder %v1211, inf
        %v1476 = vsel %vm1475, %v1211, %v1474
        %vm1477 = vcmp.eq.f32.partialorder %v1211, 0.0
        %v1478 = vand.u32 %v1211, 2147483648
        %v1479 = vsel %vm1477, %v1478, %v1476
        %v1480 = vrsqrt.pop %v1212
        %v1481 = vmul.f32 %v1212, %v1480
        %vm1482 = vcmp.eq.f32.partialorder %v1212, inf
        %v1483 = vsel %vm1482, %v1212, %v1481
        %vm1484 = vcmp.eq.f32.partialorder %v1212, 0.0
        %v1485 = vand.u32 %v1212, 2147483648
        %v1486 = vsel %vm1484, %v1485, %v1483
        %v1487 = vrsqrt.pop %v1213
        %v1488 = vmul.f32 %v1213, %v1487
        %vm1489 = vcmp.eq.f32.partialorder %v1213, inf
        %v1490 = vsel %vm1489, %v1213, %v1488
        %vm1491 = vcmp.eq.f32.partialorder %v1213, 0.0
        %v1492 = vand.u32 %v1213, 2147483648
        %v1493 = vsel %vm1491, %v1492, %v1490
        %v1494 = vrsqrt.pop %v1214
        %v1495 = vmul.f32 %v1214, %v1494
        %vm1496 = vcmp.eq.f32.partialorder %v1214, inf
        %v1497 = vsel %vm1496, %v1214, %v1495
        %vm1498 = vcmp.eq.f32.partialorder %v1214, 0.0
        %v1499 = vand.u32 %v1214, 2147483648
        %v1500 = vsel %vm1498, %v1499, %v1497
        %v1501 = vrsqrt.pop %v1215
        %v1502 = vmul.f32 %v1215, %v1501
        %vm1503 = vcmp.eq.f32.partialorder %v1215, inf
        %v1504 = vsel %vm1503, %v1215, %v1502
        %vm1505 = vcmp.eq.f32.partialorder %v1215, 0.0
        %v1506 = vand.u32 %v1215, 2147483648
        %v1507 = vsel %vm1505, %v1506, %v1504
        %v1508 = vrsqrt.pop %v1216
        %v1509 = vmul.f32 %v1216, %v1508
        %vm1510 = vcmp.eq.f32.partialorder %v1216, inf
        %v1511 = vsel %vm1510, %v1216, %v1509
        %vm1512 = vcmp.eq.f32.partialorder %v1216, 0.0
        %v1513 = vand.u32 %v1216, 2147483648
        %v1514 = vsel %vm1512, %v1513, %v1511
        %v1515 = vrsqrt.pop %v1217
        %v1516 = vmul.f32 %v1217, %v1515
        %vm1517 = vcmp.eq.f32.partialorder %v1217, inf
        %v1518 = vsel %vm1517, %v1217, %v1516
        %vm1519 = vcmp.eq.f32.partialorder %v1217, 0.0
        %v1520 = vand.u32 %v1217, 2147483648
        %v1521 = vsel %vm1519, %v1520, %v1518
        %v1522 = vrsqrt.pop %v1218
        %v1523 = vmul.f32 %v1218, %v1522
        %vm1524 = vcmp.eq.f32.partialorder %v1218, inf
        %v1525 = vsel %vm1524, %v1218, %v1523
        %vm1526 = vcmp.eq.f32.partialorder %v1218, 0.0
        %v1527 = vand.u32 %v1218, 2147483648
        %v1528 = vsel %vm1526, %v1527, %v1525
        %v1529 = vrsqrt.pop %v1219
        %v1530 = vmul.f32 %v1219, %v1529
        %vm1531 = vcmp.eq.f32.partialorder %v1219, inf
        %v1532 = vsel %vm1531, %v1219, %v1530
        %vm1533 = vcmp.eq.f32.partialorder %v1219, 0.0
        %v1534 = vand.u32 %v1219, 2147483648
        %v1535 = vsel %vm1533, %v1534, %v1532
        %v1536 = vrsqrt.pop %v1220
        %v1537 = vmul.f32 %v1220, %v1536
        %vm1538 = vcmp.eq.f32.partialorder %v1220, inf
        %v1539 = vsel %vm1538, %v1220, %v1537
        %vm1540 = vcmp.eq.f32.partialorder %v1220, 0.0
        %v1541 = vand.u32 %v1220, 2147483648
        %v1542 = vsel %vm1540, %v1541, %v1539
        %v1543 = vrsqrt.pop %v1221
        %v1544 = vmul.f32 %v1221, %v1543
        %vm1545 = vcmp.eq.f32.partialorder %v1221, inf
        %v1546 = vsel %vm1545, %v1221, %v1544
        %vm1547 = vcmp.eq.f32.partialorder %v1221, 0.0
        %v1548 = vand.u32 %v1221, 2147483648
        %v1549 = vsel %vm1547, %v1548, %v1546
        %v1550 = vrsqrt.pop %v1222
        %v1551 = vmul.f32 %v1222, %v1550
        %vm1552 = vcmp.eq.f32.partialorder %v1222, inf
        %v1553 = vsel %vm1552, %v1222, %v1551
        %vm1554 = vcmp.eq.f32.partialorder %v1222, 0.0
        %v1555 = vand.u32 %v1222, 2147483648
        %v1556 = vsel %vm1554, %v1555, %v1553
        %v1557 = vrsqrt.pop %v1223
        %v1558 = vmul.f32 %v1223, %v1557
        %vm1559 = vcmp.eq.f32.partialorder %v1223, inf
        %v1560 = vsel %vm1559, %v1223, %v1558
        %vm1561 = vcmp.eq.f32.partialorder %v1223, 0.0
        %v1562 = vand.u32 %v1223, 2147483648
        %v1563 = vsel %vm1561, %v1562, %v1560
        %v1564 = vrsqrt.pop %v1224
        %v1565 = vmul.f32 %v1224, %v1564
        %vm1566 = vcmp.eq.f32.partialorder %v1224, inf
        %v1567 = vsel %vm1566, %v1224, %v1565
        %vm1568 = vcmp.eq.f32.partialorder %v1224, 0.0
        %v1569 = vand.u32 %v1224, 2147483648
        %v1570 = vsel %vm1568, %v1569, %v1567
        %v1571 = vrsqrt.pop %v1225
        %v1572 = vmul.f32 %v1225, %v1571
        %vm1573 = vcmp.eq.f32.partialorder %v1225, inf
        %v1574 = vsel %vm1573, %v1225, %v1572
        %vm1575 = vcmp.eq.f32.partialorder %v1225, 0.0
        %v1576 = vand.u32 %v1225, 2147483648
        %v1577 = vsel %vm1575, %v1576, %v1574
        %v1578 = vrsqrt.pop %v1226
        %v1579 = vmul.f32 %v1226, %v1578
        %vm1580 = vcmp.eq.f32.partialorder %v1226, inf
        %v1581 = vsel %vm1580, %v1226, %v1579
        %vm1582 = vcmp.eq.f32.partialorder %v1226, 0.0
        %v1583 = vand.u32 %v1226, 2147483648
        %v1584 = vsel %vm1582, %v1583, %v1581
        %v1585 = vrsqrt.pop %v1227
        %v1586 = vmul.f32 %v1227, %v1585
        %vm1587 = vcmp.eq.f32.partialorder %v1227, inf
        %v1588 = vsel %vm1587, %v1227, %v1586
        %vm1589 = vcmp.eq.f32.partialorder %v1227, 0.0
        %v1590 = vand.u32 %v1227, 2147483648
        %v1591 = vsel %vm1589, %v1590, %v1588
        %v1592 = vrsqrt.pop %v1228
        %v1593 = vmul.f32 %v1228, %v1592
        %vm1594 = vcmp.eq.f32.partialorder %v1228, inf
        %v1595 = vsel %vm1594, %v1228, %v1593
        %vm1596 = vcmp.eq.f32.partialorder %v1228, 0.0
        %v1597 = vand.u32 %v1228, 2147483648
        %v1598 = vsel %vm1596, %v1597, %v1595
        %v1599 = vrsqrt.pop %v1229
        %v1600 = vmul.f32 %v1229, %v1599
        %vm1601 = vcmp.eq.f32.partialorder %v1229, inf
        %v1602 = vsel %vm1601, %v1229, %v1600
        %vm1603 = vcmp.eq.f32.partialorder %v1229, 0.0
        %v1604 = vand.u32 %v1229, 2147483648
        %v1605 = vsel %vm1603, %v1604, %v1602
        %v1606 = vrsqrt.pop %v1230
        %v1607 = vmul.f32 %v1230, %v1606
        %vm1608 = vcmp.eq.f32.partialorder %v1230, inf
        %v1609 = vsel %vm1608, %v1230, %v1607
        %vm1610 = vcmp.eq.f32.partialorder %v1230, 0.0
        %v1611 = vand.u32 %v1230, 2147483648
        %v1612 = vsel %vm1610, %v1611, %v1609
        %v1613 = vrsqrt.pop %v1231
        %v1614 = vmul.f32 %v1231, %v1613
        %vm1615 = vcmp.eq.f32.partialorder %v1231, inf
        %v1616 = vsel %vm1615, %v1231, %v1614
        %vm1617 = vcmp.eq.f32.partialorder %v1231, 0.0
        %v1618 = vand.u32 %v1231, 2147483648
        %v1619 = vsel %vm1617, %v1618, %v1616
        %v1620 = vrsqrt.pop %v1232
        %v1621 = vmul.f32 %v1232, %v1620
        %vm1622 = vcmp.eq.f32.partialorder %v1232, inf
        %v1623 = vsel %vm1622, %v1232, %v1621
        %vm1624 = vcmp.eq.f32.partialorder %v1232, 0.0
        %v1625 = vand.u32 %v1232, 2147483648
        %v1626 = vsel %vm1624, %v1625, %v1623
        %v1627 = vrsqrt.pop %v1233
        %v1628 = vmul.f32 %v1233, %v1627
        %vm1629 = vcmp.eq.f32.partialorder %v1233, inf
        %v1630 = vsel %vm1629, %v1233, %v1628
        %vm1631 = vcmp.eq.f32.partialorder %v1233, 0.0
        %v1632 = vand.u32 %v1233, 2147483648
        %v1633 = vsel %vm1631, %v1632, %v1630
        %v1634 = vrsqrt.pop %v1234
        %v1635 = vmul.f32 %v1234, %v1634
        %vm1636 = vcmp.eq.f32.partialorder %v1234, inf
        %v1637 = vsel %vm1636, %v1234, %v1635
        %vm1638 = vcmp.eq.f32.partialorder %v1234, 0.0
        %v1639 = vand.u32 %v1234, 2147483648
        %v1640 = vsel %vm1638, %v1639, %v1637
        %v1641 = vrsqrt.pop %v1235
        %v1642 = vmul.f32 %v1235, %v1641
        %vm1643 = vcmp.eq.f32.partialorder %v1235, inf
        %v1644 = vsel %vm1643, %v1235, %v1642
        %vm1645 = vcmp.eq.f32.partialorder %v1235, 0.0
        %v1646 = vand.u32 %v1235, 2147483648
        %v1647 = vsel %vm1645, %v1646, %v1644
        %v1648 = vrsqrt.pop %v1236
        %v1649 = vmul.f32 %v1236, %v1648
        %vm1650 = vcmp.eq.f32.partialorder %v1236, inf
        %v1651 = vsel %vm1650, %v1236, %v1649
        %vm1652 = vcmp.eq.f32.partialorder %v1236, 0.0
        %v1653 = vand.u32 %v1236, 2147483648
        %v1654 = vsel %vm1652, %v1653, %v1651
        %v1655 = vrsqrt.pop %v1237
        %v1656 = vmul.f32 %v1237, %v1655
        %vm1657 = vcmp.eq.f32.partialorder %v1237, inf
        %v1658 = vsel %vm1657, %v1237, %v1656
        %vm1659 = vcmp.eq.f32.partialorder %v1237, 0.0
        %v1660 = vand.u32 %v1237, 2147483648
        %v1661 = vsel %vm1659, %v1660, %v1658
        %v1662 = vrsqrt.pop %v1238
        %v1663 = vmul.f32 %v1238, %v1662
        %vm1664 = vcmp.eq.f32.partialorder %v1238, inf
        %v1665 = vsel %vm1664, %v1238, %v1663
        %vm1666 = vcmp.eq.f32.partialorder %v1238, 0.0
        %v1667 = vand.u32 %v1238, 2147483648
        %v1668 = vsel %vm1666, %v1667, %v1665
        %v1669 = vrsqrt.pop %v1239
        %v1670 = vmul.f32 %v1239, %v1669
        %vm1671 = vcmp.eq.f32.partialorder %v1239, inf
        %v1672 = vsel %vm1671, %v1239, %v1670
        %vm1673 = vcmp.eq.f32.partialorder %v1239, 0.0
        %v1674 = vand.u32 %v1239, 2147483648
        %v1675 = vsel %vm1673, %v1674, %v1672
        %v1676 = vrsqrt.pop %v1240
        %v1677 = vmul.f32 %v1240, %v1676
        %vm1678 = vcmp.eq.f32.partialorder %v1240, inf
        %v1679 = vsel %vm1678, %v1240, %v1677
        %vm1680 = vcmp.eq.f32.partialorder %v1240, 0.0
        %v1681 = vand.u32 %v1240, 2147483648
        %v1682 = vsel %vm1680, %v1681, %v1679
        %v1683 = vrsqrt.pop %v1241
        %v1684 = vmul.f32 %v1241, %v1683
        %vm1685 = vcmp.eq.f32.partialorder %v1241, inf
        %v1686 = vsel %vm1685, %v1241, %v1684
        %vm1687 = vcmp.eq.f32.partialorder %v1241, 0.0
        %v1688 = vand.u32 %v1241, 2147483648
        %v1689 = vsel %vm1687, %v1688, %v1686
        %v1690 = vlog2.pop %v1210
        %v1691 = vmul.f32 %v1690, 0.6931472
        %v1692 = vlog2.pop %v1211
        %v1693 = vmul.f32 %v1692, 0.6931472
        %v1694 = vlog2.pop %v1212
        %v1695 = vmul.f32 %v1694, 0.6931472
        %v1696 = vlog2.pop %v1213
        %v1697 = vmul.f32 %v1696, 0.6931472
        %v1698 = vlog2.pop %v1214
        %v1699 = vmul.f32 %v1698, 0.6931472
        %v1700 = vlog2.pop %v1215
        %v1701 = vmul.f32 %v1700, 0.6931472
        %v1702 = vlog2.pop %v1216
        %v1703 = vmul.f32 %v1702, 0.6931472
        %v1704 = vlog2.pop %v1217
        %v1705 = vmul.f32 %v1704, 0.6931472
        %v1706 = vlog2.pop %v1218
        %v1707 = vmul.f32 %v1706, 0.6931472
        %v1708 = vlog2.pop %v1219
        %v1709 = vmul.f32 %v1708, 0.6931472
        %v1710 = vlog2.pop %v1220
        %v1711 = vmul.f32 %v1710, 0.6931472
        %v1712 = vlog2.pop %v1221
        %v1713 = vmul.f32 %v1712, 0.6931472
        %v1714 = vlog2.pop %v1222
        %v1715 = vmul.f32 %v1714, 0.6931472
        %v1716 = vlog2.pop %v1223
        %v1717 = vmul.f32 %v1716, 0.6931472
        %v1718 = vlog2.pop %v1224
        %v1719 = vmul.f32 %v1718, 0.6931472
        %v1720 = vlog2.pop %v1225
        %v1721 = vmul.f32 %v1720, 0.6931472
        %v1722 = vlog2.pop %v1226
        %v1723 = vmul.f32 %v1722, 0.6931472
        %v1724 = vlog2.pop %v1227
        %v1725 = vmul.f32 %v1724, 0.6931472
        %v1726 = vlog2.pop %v1228
        %v1727 = vmul.f32 %v1726, 0.6931472
        %v1728 = vlog2.pop %v1229
        %v1729 = vmul.f32 %v1728, 0.6931472
        %v1730 = vlog2.pop %v1230
        %v1731 = vmul.f32 %v1730, 0.6931472
        %v1732 = vlog2.pop %v1231
        %v1733 = vmul.f32 %v1732, 0.6931472
        %v1734 = vlog2.pop %v1232
        %v1735 = vmul.f32 %v1734, 0.6931472
        %v1736 = vlog2.pop %v1233
        %v1737 = vmul.f32 %v1736, 0.6931472
        %v1738 = vlog2.pop %v1234
        %v1739 = vmul.f32 %v1738, 0.6931472
        %v1740 = vlog2.pop %v1235
        %v1741 = vmul.f32 %v1740, 0.6931472
        %v1742 = vlog2.pop %v1236
        %v1743 = vmul.f32 %v1742, 0.6931472
        %v1744 = vlog2.pop %v1237
        %v1745 = vmul.f32 %v1744, 0.6931472
        %v1746 = vlog2.pop %v1238
        %v1747 = vmul.f32 %v1746, 0.6931472
        %v1748 = vlog2.pop %v1239
        %v1749 = vmul.f32 %v1748, 0.6931472
        %v1750 = vlog2.pop %v1240
        %v1751 = vmul.f32 %v1750, 0.6931472
        %v1752 = vlog2.pop %v1241
        %v1753 = vmul.f32 %v1752, 0.6931472
        %v1754 = vlog2.pop %v1082
        %v1755 = vmul.f32 %v1754, 0.6931472
        %v1756 = vlog2.pop %v1083
        %v1757 = vmul.f32 %v1756, 0.6931472
        %v1758 = vlog2.pop %v1084
        %v1759 = vmul.f32 %v1758, 0.6931472
        %v1760 = vlog2.pop %v1085
        %v1761 = vmul.f32 %v1760, 0.6931472
        %v1762 = vlog2.pop %v1086
        %v1763 = vmul.f32 %v1762, 0.6931472
        %v1764 = vlog2.pop %v1087
        %v1765 = vmul.f32 %v1764, 0.6931472
        %v1766 = vlog2.pop %v1088
        %v1767 = vmul.f32 %v1766, 0.6931472
        %v1768 = vlog2.pop %v1089
        %v1769 = vmul.f32 %v1768, 0.6931472
        %v1770 = vlog2.pop %v1090
        %v1771 = vmul.f32 %v1770, 0.6931472
        %v1772 = vlog2.pop %v1091
        %v1773 = vmul.f32 %v1772, 0.6931472
        %v1774 = vlog2.pop %v1092
        %v1775 = vmul.f32 %v1774, 0.6931472
        %v1776 = vlog2.pop %v1093
        %v1777 = vmul.f32 %v1776, 0.6931472
        %v1778 = vlog2.pop %v1094
        %v1779 = vmul.f32 %v1778, 0.6931472
        %v1780 = vlog2.pop %v1095
        %v1781 = vmul.f32 %v1780, 0.6931472
        %v1782 = vlog2.pop %v1096
        %v1783 = vmul.f32 %v1782, 0.6931472
        %v1784 = vlog2.pop %v1097
        %v1785 = vmul.f32 %v1784, 0.6931472
        %v1786 = vlog2.pop %v1098
        %v1787 = vmul.f32 %v1786, 0.6931472
        %v1788 = vlog2.pop %v1099
        %v1789 = vmul.f32 %v1788, 0.6931472
        %v1790 = vlog2.pop %v1100
        %v1791 = vmul.f32 %v1790, 0.6931472
        %v1792 = vlog2.pop %v1101
        %v1793 = vmul.f32 %v1792, 0.6931472
        %v1794 = vlog2.pop %v1102
        %v1795 = vmul.f32 %v1794, 0.6931472
        %v1796 = vlog2.pop %v1103
        %v1797 = vmul.f32 %v1796, 0.6931472
        %v1798 = vlog2.pop %v1104
        %v1799 = vmul.f32 %v1798, 0.6931472
        %v1800 = vlog2.pop %v1105
        %v1801 = vmul.f32 %v1800, 0.6931472
        %v1802 = vlog2.pop %v1106
        %v1803 = vmul.f32 %v1802, 0.6931472
        %v1804 = vlog2.pop %v1107
        %v1805 = vmul.f32 %v1804, 0.6931472
        %v1806 = vlog2.pop %v1108
        %v1807 = vmul.f32 %v1806, 0.6931472
        %v1808 = vlog2.pop %v1109
        %v1809 = vmul.f32 %v1808, 0.6931472
        %v1810 = vlog2.pop %v1110
        %v1811 = vmul.f32 %v1810, 0.6931472
        %v1812 = vlog2.pop %v1111
        %v1813 = vmul.f32 %v1812, 0.6931472
        %v1814 = vlog2.pop %v1112
        %v1815 = vmul.f32 %v1814, 0.6931472
        %v1816 = vlog2.pop %v1113
        %v1817 = vmul.f32 %v1816, 0.6931472
        %v1818 = vsub.f32 %v1691, %v1755
        %v1819 = vsub.f32 %v1693, %v1757
        %v1820 = vsub.f32 %v1695, %v1759
        %v1821 = vsub.f32 %v1697, %v1761
        %v1822 = vsub.f32 %v1699, %v1763
        %v1823 = vsub.f32 %v1701, %v1765
        %v1824 = vsub.f32 %v1703, %v1767
        %v1825 = vsub.f32 %v1705, %v1769
        %v1826 = vsub.f32 %v1707, %v1771
        %v1827 = vsub.f32 %v1709, %v1773
        %v1828 = vsub.f32 %v1711, %v1775
        %v1829 = vsub.f32 %v1713, %v1777
        %v1830 = vsub.f32 %v1715, %v1779
        %v1831 = vsub.f32 %v1717, %v1781
        %v1832 = vsub.f32 %v1719, %v1783
        %v1833 = vsub.f32 %v1721, %v1785
        %v1834 = vsub.f32 %v1723, %v1787
        %v1835 = vsub.f32 %v1725, %v1789
        %v1836 = vsub.f32 %v1727, %v1791
        %v1837 = vsub.f32 %v1729, %v1793
        %v1838 = vsub.f32 %v1731, %v1795
        %v1839 = vsub.f32 %v1733, %v1797
        %v1840 = vsub.f32 %v1735, %v1799
        %v1841 = vsub.f32 %v1737, %v1801
        %v1842 = vsub.f32 %v1739, %v1803
        %v1843 = vsub.f32 %v1741, %v1805
        %v1844 = vsub.f32 %v1743, %v1807
        %v1845 = vsub.f32 %v1745, %v1809
        %v1846 = vsub.f32 %v1747, %v1811
        %v1847 = vsub.f32 %v1749, %v1813
        %v1848 = vsub.f32 %v1751, %v1815
        %v1849 = vsub.f32 %v1753, %v1817
        %v1850 = vand.u32 2147483647, %v1818
        %v1851 = vand.u32 2147483647, %v1819
        %v1852 = vand.u32 2147483647, %v1820
        %v1853 = vand.u32 2147483647, %v1821
        %v1854 = vand.u32 2147483647, %v1822
        %v1855 = vand.u32 2147483647, %v1823
        %v1856 = vand.u32 2147483647, %v1824
        %v1857 = vand.u32 2147483647, %v1825
        %v1858 = vand.u32 2147483647, %v1826
        %v1859 = vand.u32 2147483647, %v1827
        %v1860 = vand.u32 2147483647, %v1828
        %v1861 = vand.u32 2147483647, %v1829
        %v1862 = vand.u32 2147483647, %v1830
        %v1863 = vand.u32 2147483647, %v1831
        %v1864 = vand.u32 2147483647, %v1832
        %v1865 = vand.u32 2147483647, %v1833
        %v1866 = vand.u32 2147483647, %v1834
        %v1867 = vand.u32 2147483647, %v1835
        %v1868 = vand.u32 2147483647, %v1836
        %v1869 = vand.u32 2147483647, %v1837
        %v1870 = vand.u32 2147483647, %v1838
        %v1871 = vand.u32 2147483647, %v1839
        %v1872 = vand.u32 2147483647, %v1840
        %v1873 = vand.u32 2147483647, %v1841
        %v1874 = vand.u32 2147483647, %v1842
        %v1875 = vand.u32 2147483647, %v1843
        %v1876 = vand.u32 2147483647, %v1844
        %v1877 = vand.u32 2147483647, %v1845
        %v1878 = vand.u32 2147483647, %v1846
        %v1879 = vand.u32 2147483647, %v1847
        %v1880 = vand.u32 2147483647, %v1848
        %v1881 = vand.u32 2147483647, %v1849
        %v1882 = vsub.f32 %v1472, %v1248
        %v1883 = vsub.f32 %v1479, %v1255
        %v1884 = vsub.f32 %v1486, %v1262
        %v1885 = vsub.f32 %v1493, %v1269
        %v1886 = vsub.f32 %v1500, %v1276
        %v1887 = vsub.f32 %v1507, %v1283
        %v1888 = vsub.f32 %v1514, %v1290
        %v1889 = vsub.f32 %v1521, %v1297
        %v1890 = vsub.f32 %v1528, %v1304
        %v1891 = vsub.f32 %v1535, %v1311
        %v1892 = vsub.f32 %v1542, %v1318
        %v1893 = vsub.f32 %v1549, %v1325
        %v1894 = vsub.f32 %v1556, %v1332
        %v1895 = vsub.f32 %v1563, %v1339
        %v1896 = vsub.f32 %v1570, %v1346
        %v1897 = vsub.f32 %v1577, %v1353
        %v1898 = vsub.f32 %v1584, %v1360
        %v1899 = vsub.f32 %v1591, %v1367
        %v1900 = vsub.f32 %v1598, %v1374
        %v1901 = vsub.f32 %v1605, %v1381
        %v1902 = vsub.f32 %v1612, %v1388
        %v1903 = vsub.f32 %v1619, %v1395
        %v1904 = vsub.f32 %v1626, %v1402
        %v1905 = vsub.f32 %v1633, %v1409
        %v1906 = vsub.f32 %v1640, %v1416
        %v1907 = vsub.f32 %v1647, %v1423
        %v1908 = vsub.f32 %v1654, %v1430
        %v1909 = vsub.f32 %v1661, %v1437
        %v1910 = vsub.f32 %v1668, %v1444
        %v1911 = vsub.f32 %v1675, %v1451
        %v1912 = vsub.f32 %v1682, %v1458
        %v1913 = vsub.f32 %v1689, %v1465
        %v1914 = vmul.f32 %v1882, %v1882
        %v1915 = vmul.f32 %v1883, %v1883
        %v1916 = vmul.f32 %v1884, %v1884
        %v1917 = vmul.f32 %v1885, %v1885
        %v1918 = vmul.f32 %v1886, %v1886
        %v1919 = vmul.f32 %v1887, %v1887
        %v1920 = vmul.f32 %v1888, %v1888
        %v1921 = vmul.f32 %v1889, %v1889
        %v1922 = vmul.f32 %v1890, %v1890
        %v1923 = vmul.f32 %v1891, %v1891
        %v1924 = vmul.f32 %v1892, %v1892
        %v1925 = vmul.f32 %v1893, %v1893
        %v1926 = vmul.f32 %v1894, %v1894
        %v1927 = vmul.f32 %v1895, %v1895
        %v1928 = vmul.f32 %v1896, %v1896
        %v1929 = vmul.f32 %v1897, %v1897
        %v1930 = vmul.f32 %v1898, %v1898
        %v1931 = vmul.f32 %v1899, %v1899
        %v1932 = vmul.f32 %v1900, %v1900
        %v1933 = vmul.f32 %v1901, %v1901
        %v1934 = vmul.f32 %v1902, %v1902
        %v1935 = vmul.f32 %v1903, %v1903
        %v1936 = vmul.f32 %v1904, %v1904
        %v1937 = vmul.f32 %v1905, %v1905
        %v1938 = vmul.f32 %v1906, %v1906
        %v1939 = vmul.f32 %v1907, %v1907
        %v1940 = vmul.f32 %v1908, %v1908
        %v1941 = vmul.f32 %v1909, %v1909
        %v1942 = vmul.f32 %v1910, %v1910
        %v1943 = vmul.f32 %v1911, %v1911
        %v1944 = vmul.f32 %v1912, %v1912
        %v1945 = vmul.f32 %v1913, %v1913
        %v1946 = vld [vmem:[#allocation3] sm:$0xff]
        %v1947 = vadd.f32 %v1850, %v1851
        %v1948 = vadd.f32 %v1947, %v1852
        %v1949 = vadd.f32 %v1948, %v1853
        %v1950 = vadd.f32 %v1949, %v1854
        %v1951 = vadd.f32 %v1950, %v1855
        %v1952 = vadd.f32 %v1951, %v1856
        %v1953 = vadd.f32 %v1952, %v1857
        %v1954 = vadd.f32 %v1953, %v1858
        %v1955 = vadd.f32 %v1954, %v1859
        %v1956 = vadd.f32 %v1955, %v1860
        %v1957 = vadd.f32 %v1956, %v1861
        %v1958 = vadd.f32 %v1957, %v1862
        %v1959 = vadd.f32 %v1958, %v1863
        %v1960 = vadd.f32 %v1959, %v1864
        %v1961 = vadd.f32 %v1960, %v1865
        %v1962 = vadd.f32 %v1961, %v1866
        %v1963 = vadd.f32 %v1962, %v1867
        %v1964 = vadd.f32 %v1963, %v1868
        %v1965 = vadd.f32 %v1964, %v1869
        %v1966 = vadd.f32 %v1965, %v1870
        %v1967 = vadd.f32 %v1966, %v1871
        %v1968 = vadd.f32 %v1967, %v1872
        %v1969 = vadd.f32 %v1968, %v1873
        %v1970 = vadd.f32 %v1969, %v1874
        %v1971 = vadd.f32 %v1970, %v1875
        %v1972 = vadd.f32 %v1971, %v1876
        %v1973 = vadd.f32 %v1972, %v1877
        %v1974 = vadd.f32 %v1973, %v1878
        %v1975 = vadd.f32 %v1974, %v1879
        %v1976 = vadd.f32 %v1975, %v1880
        %v1977 = vadd.f32 %v1976, %v1881
        %v1978 = vadd.f32 %v1946, %v1977
        %1979 = vst [vmem:[#allocation3] sm:$0xff] %v1978
        %v1980 = vld [vmem:[#allocation4] sm:$0xff]
        %v1981 = vadd.f32 %v1914, %v1915
        %v1982 = vadd.f32 %v1981, %v1916
        %v1983 = vadd.f32 %v1982, %v1917
        %v1984 = vadd.f32 %v1983, %v1918
        %v1985 = vadd.f32 %v1984, %v1919
        %v1986 = vadd.f32 %v1985, %v1920
        %v1987 = vadd.f32 %v1986, %v1921
        %v1988 = vadd.f32 %v1987, %v1922
        %v1989 = vadd.f32 %v1988, %v1923
        %v1990 = vadd.f32 %v1989, %v1924
        %v1991 = vadd.f32 %v1990, %v1925
        %v1992 = vadd.f32 %v1991, %v1926
        %v1993 = vadd.f32 %v1992, %v1927
        %v1994 = vadd.f32 %v1993, %v1928
        %v1995 = vadd.f32 %v1994, %v1929
        %v1996 = vadd.f32 %v1995, %v1930
        %v1997 = vadd.f32 %v1996, %v1931
        %v1998 = vadd.f32 %v1997, %v1932
        %v1999 = vadd.f32 %v1998, %v1933
        %v2000 = vadd.f32 %v1999, %v1934
        %v2001 = vadd.f32 %v2000, %v1935
        %v2002 = vadd.f32 %v2001, %v1936
        %v2003 = vadd.f32 %v2002, %v1937
        %v2004 = vadd.f32 %v2003, %v1938
        %v2005 = vadd.f32 %v2004, %v1939
        %v2006 = vadd.f32 %v2005, %v1940
        %v2007 = vadd.f32 %v2006, %v1941
        %v2008 = vadd.f32 %v2007, %v1942
        %v2009 = vadd.f32 %v2008, %v1943
        %v2010 = vadd.f32 %v2009, %v1944
        %v2011 = vadd.f32 %v2010, %v1945
        %v2012 = vadd.f32 %v1980, %v2011
        %2013 = vst [vmem:[#allocation4] sm:$0xff] %v2012
        %v2014 = vld [vmem:[#allocation5] sm:$0xff]
        %v2015 = vadd.f32 %v1210, %v1211
        %v2016 = vadd.f32 %v2015, %v1212
        %v2017 = vadd.f32 %v2016, %v1213
        %v2018 = vadd.f32 %v2017, %v1214
        %v2019 = vadd.f32 %v2018, %v1215
        %v2020 = vadd.f32 %v2019, %v1216
        %v2021 = vadd.f32 %v2020, %v1217
        %v2022 = vadd.f32 %v2021, %v1218
        %v2023 = vadd.f32 %v2022, %v1219
        %v2024 = vadd.f32 %v2023, %v1220
        %v2025 = vadd.f32 %v2024, %v1221
        %v2026 = vadd.f32 %v2025, %v1222
        %v2027 = vadd.f32 %v2026, %v1223
        %v2028 = vadd.f32 %v2027, %v1224
        %v2029 = vadd.f32 %v2028, %v1225
        %v2030 = vadd.f32 %v2029, %v1226
        %v2031 = vadd.f32 %v2030, %v1227
        %v2032 = vadd.f32 %v2031, %v1228
        %v2033 = vadd.f32 %v2032, %v1229
        %v2034 = vadd.f32 %v2033, %v1230
        %v2035 = vadd.f32 %v2034, %v1231
        %v2036 = vadd.f32 %v2035, %v1232
        %v2037 = vadd.f32 %v2036, %v1233
        %v2038 = vadd.f32 %v2037, %v1234
        %v2039 = vadd.f32 %v2038, %v1235
        %v2040 = vadd.f32 %v2039, %v1236
        %v2041 = vadd.f32 %v2040, %v1237
        %v2042 = vadd.f32 %v2041, %v1238
        %v2043 = vadd.f32 %v2042, %v1239
        %v2044 = vadd.f32 %v2043, %v1240
        %v2045 = vadd.f32 %v2044, %v1241
        %v2046 = vadd.f32 %v2014, %v2045
        %2047 = vst [vmem:[#allocation5] sm:$0xff] %v2046
        %v2048 = vmax.f32 %v986, 1e-08
        %v2049 = vmax.f32 %v987, 1e-08
        %v2050 = vmax.f32 %v988, 1e-08
        %v2051 = vmax.f32 %v989, 1e-08
        %v2052 = vmax.f32 %v990, 1e-08
        %v2053 = vmax.f32 %v991, 1e-08
        %v2054 = vmax.f32 %v992, 1e-08
        %v2055 = vmax.f32 %v993, 1e-08
        %v2056 = vmax.f32 %v994, 1e-08
        %v2057 = vmax.f32 %v995, 1e-08
        %v2058 = vmax.f32 %v996, 1e-08
        %v2059 = vmax.f32 %v997, 1e-08
        %v2060 = vmax.f32 %v998, 1e-08
        %v2061 = vmax.f32 %v999, 1e-08
        %v2062 = vmax.f32 %v1000, 1e-08
        %v2063 = vmax.f32 %v1001, 1e-08
        %v2064 = vmax.f32 %v1002, 1e-08
        %v2065 = vmax.f32 %v1003, 1e-08
        %v2066 = vmax.f32 %v1004, 1e-08
        %v2067 = vmax.f32 %v1005, 1e-08
        %v2068 = vmax.f32 %v1006, 1e-08
        %v2069 = vmax.f32 %v1007, 1e-08
        %v2070 = vmax.f32 %v1008, 1e-08
        %v2071 = vmax.f32 %v1009, 1e-08
        %v2072 = vmax.f32 %v1010, 1e-08
        %v2073 = vmax.f32 %v1011, 1e-08
        %v2074 = vmax.f32 %v1012, 1e-08
        %v2075 = vmax.f32 %v1013, 1e-08
        %v2076 = vmax.f32 %v1014, 1e-08
        %v2077 = vmax.f32 %v1015, 1e-08
        %v2078 = vmax.f32 %v1016, 1e-08
        %v2079 = vmax.f32 %v1017, 1e-08
        %v2080 = vmax.f32 %v1018, 1e-08
        %v2081 = vmax.f32 %v1019, 1e-08
        %v2082 = vmax.f32 %v1020, 1e-08
        %v2083 = vmax.f32 %v1021, 1e-08
        %v2084 = vmax.f32 %v1022, 1e-08
        %v2085 = vmax.f32 %v1023, 1e-08
        %v2086 = vmax.f32 %v1024, 1e-08
        %v2087 = vmax.f32 %v1025, 1e-08
        %v2088 = vmax.f32 %v1026, 1e-08
        %v2089 = vmax.f32 %v1027, 1e-08
        %v2090 = vmax.f32 %v1028, 1e-08
        %v2091 = vmax.f32 %v1029, 1e-08
        %v2092 = vmax.f32 %v1030, 1e-08
        %v2093 = vmax.f32 %v1031, 1e-08
        %v2094 = vmax.f32 %v1032, 1e-08
        %v2095 = vmax.f32 %v1033, 1e-08
        %v2096 = vmax.f32 %v1034, 1e-08
        %v2097 = vmax.f32 %v1035, 1e-08
        %v2098 = vmax.f32 %v1036, 1e-08
        %v2099 = vmax.f32 %v1037, 1e-08
        %v2100 = vmax.f32 %v1038, 1e-08
        %v2101 = vmax.f32 %v1039, 1e-08
        %v2102 = vmax.f32 %v1040, 1e-08
        %v2103 = vmax.f32 %v1041, 1e-08
        %v2104 = vmax.f32 %v1042, 1e-08
        %v2105 = vmax.f32 %v1043, 1e-08
        %v2106 = vmax.f32 %v1044, 1e-08
        %v2107 = vmax.f32 %v1045, 1e-08
        %v2108 = vmax.f32 %v1046, 1e-08
        %v2109 = vmax.f32 %v1047, 1e-08
        %v2110 = vmax.f32 %v1048, 1e-08
        %v2111 = vmax.f32 %v1049, 1e-08
        %v2112 = vmax.f32 %v1114, 1e-08
        %v2113 = vmax.f32 %v1115, 1e-08
        %v2114 = vmax.f32 %v1116, 1e-08
        %v2115 = vmax.f32 %v1117, 1e-08
        %v2116 = vmax.f32 %v1118, 1e-08
        %v2117 = vmax.f32 %v1119, 1e-08
        %v2118 = vmax.f32 %v1120, 1e-08
        %v2119 = vmax.f32 %v1121, 1e-08
        %v2120 = vmax.f32 %v1122, 1e-08
        %v2121 = vmax.f32 %v1123, 1e-08
        %v2122 = vmax.f32 %v1124, 1e-08
        %v2123 = vmax.f32 %v1125, 1e-08
        %v2124 = vmax.f32 %v1126, 1e-08
        %v2125 = vmax.f32 %v1127, 1e-08
        %v2126 = vmax.f32 %v1128, 1e-08
        %v2127 = vmax.f32 %v1129, 1e-08
        %v2128 = vmax.f32 %v1130, 1e-08
        %v2129 = vmax.f32 %v1131, 1e-08
        %v2130 = vmax.f32 %v1132, 1e-08
        %v2131 = vmax.f32 %v1133, 1e-08
        %v2132 = vmax.f32 %v1134, 1e-08
        %v2133 = vmax.f32 %v1135, 1e-08
        %v2134 = vmax.f32 %v1136, 1e-08
        %v2135 = vmax.f32 %v1137, 1e-08
        %v2136 = vmax.f32 %v1138, 1e-08
        %v2137 = vmax.f32 %v1139, 1e-08
        %v2138 = vmax.f32 %v1140, 1e-08
        %v2139 = vmax.f32 %v1141, 1e-08
        %v2140 = vmax.f32 %v1142, 1e-08
        %v2141 = vmax.f32 %v1143, 1e-08
        %v2142 = vmax.f32 %v1144, 1e-08
        %v2143 = vmax.f32 %v1145, 1e-08
        %v2144 = vmax.f32 %v1146, 1e-08
        %v2145 = vmax.f32 %v1147, 1e-08
        %v2146 = vmax.f32 %v1148, 1e-08
        %v2147 = vmax.f32 %v1149, 1e-08
        %v2148 = vmax.f32 %v1150, 1e-08
        %v2149 = vmax.f32 %v1151, 1e-08
        %v2150 = vmax.f32 %v1152, 1e-08
        %v2151 = vmax.f32 %v1153, 1e-08
        %v2152 = vmax.f32 %v1154, 1e-08
        %v2153 = vmax.f32 %v1155, 1e-08
        %v2154 = vmax.f32 %v1156, 1e-08
        %v2155 = vmax.f32 %v1157, 1e-08
        %v2156 = vmax.f32 %v1158, 1e-08
        %v2157 = vmax.f32 %v1159, 1e-08
        %v2158 = vmax.f32 %v1160, 1e-08
        %v2159 = vmax.f32 %v1161, 1e-08
        %v2160 = vmax.f32 %v1162, 1e-08
        %v2161 = vmax.f32 %v1163, 1e-08
        %v2162 = vmax.f32 %v1164, 1e-08
        %v2163 = vmax.f32 %v1165, 1e-08
        %v2164 = vmax.f32 %v1166, 1e-08
        %v2165 = vmax.f32 %v1167, 1e-08
        %v2166 = vmax.f32 %v1168, 1e-08
        %v2167 = vmax.f32 %v1169, 1e-08
        %v2168 = vmax.f32 %v1170, 1e-08
        %v2169 = vmax.f32 %v1171, 1e-08
        %v2170 = vmax.f32 %v1172, 1e-08
        %v2171 = vmax.f32 %v1173, 1e-08
        %v2172 = vmax.f32 %v1174, 1e-08
        %v2173 = vmax.f32 %v1175, 1e-08
        %v2174 = vmax.f32 %v1176, 1e-08
        %v2175 = vmax.f32 %v1177, 1e-08
        %v2176 = vrsqrt.pop %v2048
        %v2177 = vmul.f32 %v2048, %v2176
        %vm2178 = vcmp.eq.f32.partialorder %v2048, inf
        %v2179 = vsel %vm2178, %v2048, %v2177
        %vm2180 = vcmp.eq.f32.partialorder %v2048, 0.0
        %v2181 = vand.u32 %v2048, 2147483648
        %v2182 = vsel %vm2180, %v2181, %v2179
        %v2183 = vrsqrt.pop %v2049
        %v2184 = vmul.f32 %v2049, %v2183
        %vm2185 = vcmp.eq.f32.partialorder %v2049, inf
        %v2186 = vsel %vm2185, %v2049, %v2184
        %vm2187 = vcmp.eq.f32.partialorder %v2049, 0.0
        %v2188 = vand.u32 %v2049, 2147483648
        %v2189 = vsel %vm2187, %v2188, %v2186
        %v2190 = vrsqrt.pop %v2050
        %v2191 = vmul.f32 %v2050, %v2190
        %vm2192 = vcmp.eq.f32.partialorder %v2050, inf
        %v2193 = vsel %vm2192, %v2050, %v2191
        %vm2194 = vcmp.eq.f32.partialorder %v2050, 0.0
        %v2195 = vand.u32 %v2050, 2147483648
        %v2196 = vsel %vm2194, %v2195, %v2193
        %v2197 = vrsqrt.pop %v2051
        %v2198 = vmul.f32 %v2051, %v2197
        %vm2199 = vcmp.eq.f32.partialorder %v2051, inf
        %v2200 = vsel %vm2199, %v2051, %v2198
        %vm2201 = vcmp.eq.f32.partialorder %v2051, 0.0
        %v2202 = vand.u32 %v2051, 2147483648
        %v2203 = vsel %vm2201, %v2202, %v2200
        %v2204 = vrsqrt.pop %v2052
        %v2205 = vmul.f32 %v2052, %v2204
        %vm2206 = vcmp.eq.f32.partialorder %v2052, inf
        %v2207 = vsel %vm2206, %v2052, %v2205
        %vm2208 = vcmp.eq.f32.partialorder %v2052, 0.0
        %v2209 = vand.u32 %v2052, 2147483648
        %v2210 = vsel %vm2208, %v2209, %v2207
        %v2211 = vrsqrt.pop %v2053
        %v2212 = vmul.f32 %v2053, %v2211
        %vm2213 = vcmp.eq.f32.partialorder %v2053, inf
        %v2214 = vsel %vm2213, %v2053, %v2212
        %vm2215 = vcmp.eq.f32.partialorder %v2053, 0.0
        %v2216 = vand.u32 %v2053, 2147483648
        %v2217 = vsel %vm2215, %v2216, %v2214
        %v2218 = vrsqrt.pop %v2054
        %v2219 = vmul.f32 %v2054, %v2218
        %vm2220 = vcmp.eq.f32.partialorder %v2054, inf
        %v2221 = vsel %vm2220, %v2054, %v2219
        %vm2222 = vcmp.eq.f32.partialorder %v2054, 0.0
        %v2223 = vand.u32 %v2054, 2147483648
        %v2224 = vsel %vm2222, %v2223, %v2221
        %v2225 = vrsqrt.pop %v2055
        %v2226 = vmul.f32 %v2055, %v2225
        %vm2227 = vcmp.eq.f32.partialorder %v2055, inf
        %v2228 = vsel %vm2227, %v2055, %v2226
        %vm2229 = vcmp.eq.f32.partialorder %v2055, 0.0
        %v2230 = vand.u32 %v2055, 2147483648
        %v2231 = vsel %vm2229, %v2230, %v2228
        %v2232 = vrsqrt.pop %v2056
        %v2233 = vmul.f32 %v2056, %v2232
        %vm2234 = vcmp.eq.f32.partialorder %v2056, inf
        %v2235 = vsel %vm2234, %v2056, %v2233
        %vm2236 = vcmp.eq.f32.partialorder %v2056, 0.0
        %v2237 = vand.u32 %v2056, 2147483648
        %v2238 = vsel %vm2236, %v2237, %v2235
        %v2239 = vrsqrt.pop %v2057
        %v2240 = vmul.f32 %v2057, %v2239
        %vm2241 = vcmp.eq.f32.partialorder %v2057, inf
        %v2242 = vsel %vm2241, %v2057, %v2240
        %vm2243 = vcmp.eq.f32.partialorder %v2057, 0.0
        %v2244 = vand.u32 %v2057, 2147483648
        %v2245 = vsel %vm2243, %v2244, %v2242
        %v2246 = vrsqrt.pop %v2058
        %v2247 = vmul.f32 %v2058, %v2246
        %vm2248 = vcmp.eq.f32.partialorder %v2058, inf
        %v2249 = vsel %vm2248, %v2058, %v2247
        %vm2250 = vcmp.eq.f32.partialorder %v2058, 0.0
        %v2251 = vand.u32 %v2058, 2147483648
        %v2252 = vsel %vm2250, %v2251, %v2249
        %v2253 = vrsqrt.pop %v2059
        %v2254 = vmul.f32 %v2059, %v2253
        %vm2255 = vcmp.eq.f32.partialorder %v2059, inf
        %v2256 = vsel %vm2255, %v2059, %v2254
        %vm2257 = vcmp.eq.f32.partialorder %v2059, 0.0
        %v2258 = vand.u32 %v2059, 2147483648
        %v2259 = vsel %vm2257, %v2258, %v2256
        %v2260 = vrsqrt.pop %v2060
        %v2261 = vmul.f32 %v2060, %v2260
        %vm2262 = vcmp.eq.f32.partialorder %v2060, inf
        %v2263 = vsel %vm2262, %v2060, %v2261
        %vm2264 = vcmp.eq.f32.partialorder %v2060, 0.0
        %v2265 = vand.u32 %v2060, 2147483648
        %v2266 = vsel %vm2264, %v2265, %v2263
        %v2267 = vrsqrt.pop %v2061
        %v2268 = vmul.f32 %v2061, %v2267
        %vm2269 = vcmp.eq.f32.partialorder %v2061, inf
        %v2270 = vsel %vm2269, %v2061, %v2268
        %vm2271 = vcmp.eq.f32.partialorder %v2061, 0.0
        %v2272 = vand.u32 %v2061, 2147483648
        %v2273 = vsel %vm2271, %v2272, %v2270
        %v2274 = vrsqrt.pop %v2062
        %v2275 = vmul.f32 %v2062, %v2274
        %vm2276 = vcmp.eq.f32.partialorder %v2062, inf
        %v2277 = vsel %vm2276, %v2062, %v2275
        %vm2278 = vcmp.eq.f32.partialorder %v2062, 0.0
        %v2279 = vand.u32 %v2062, 2147483648
        %v2280 = vsel %vm2278, %v2279, %v2277
        %v2281 = vrsqrt.pop %v2063
        %v2282 = vmul.f32 %v2063, %v2281
        %vm2283 = vcmp.eq.f32.partialorder %v2063, inf
        %v2284 = vsel %vm2283, %v2063, %v2282
        %vm2285 = vcmp.eq.f32.partialorder %v2063, 0.0
        %v2286 = vand.u32 %v2063, 2147483648
        %v2287 = vsel %vm2285, %v2286, %v2284
        %v2288 = vrsqrt.pop %v2064
        %v2289 = vmul.f32 %v2064, %v2288
        %vm2290 = vcmp.eq.f32.partialorder %v2064, inf
        %v2291 = vsel %vm2290, %v2064, %v2289
        %vm2292 = vcmp.eq.f32.partialorder %v2064, 0.0
        %v2293 = vand.u32 %v2064, 2147483648
        %v2294 = vsel %vm2292, %v2293, %v2291
        %v2295 = vrsqrt.pop %v2065
        %v2296 = vmul.f32 %v2065, %v2295
        %vm2297 = vcmp.eq.f32.partialorder %v2065, inf
        %v2298 = vsel %vm2297, %v2065, %v2296
        %vm2299 = vcmp.eq.f32.partialorder %v2065, 0.0
        %v2300 = vand.u32 %v2065, 2147483648
        %v2301 = vsel %vm2299, %v2300, %v2298
        %v2302 = vrsqrt.pop %v2066
        %v2303 = vmul.f32 %v2066, %v2302
        %vm2304 = vcmp.eq.f32.partialorder %v2066, inf
        %v2305 = vsel %vm2304, %v2066, %v2303
        %vm2306 = vcmp.eq.f32.partialorder %v2066, 0.0
        %v2307 = vand.u32 %v2066, 2147483648
        %v2308 = vsel %vm2306, %v2307, %v2305
        %v2309 = vrsqrt.pop %v2067
        %v2310 = vmul.f32 %v2067, %v2309
        %vm2311 = vcmp.eq.f32.partialorder %v2067, inf
        %v2312 = vsel %vm2311, %v2067, %v2310
        %vm2313 = vcmp.eq.f32.partialorder %v2067, 0.0
        %v2314 = vand.u32 %v2067, 2147483648
        %v2315 = vsel %vm2313, %v2314, %v2312
        %v2316 = vrsqrt.pop %v2068
        %v2317 = vmul.f32 %v2068, %v2316
        %vm2318 = vcmp.eq.f32.partialorder %v2068, inf
        %v2319 = vsel %vm2318, %v2068, %v2317
        %vm2320 = vcmp.eq.f32.partialorder %v2068, 0.0
        %v2321 = vand.u32 %v2068, 2147483648
        %v2322 = vsel %vm2320, %v2321, %v2319
        %v2323 = vrsqrt.pop %v2069
        %v2324 = vmul.f32 %v2069, %v2323
        %vm2325 = vcmp.eq.f32.partialorder %v2069, inf
        %v2326 = vsel %vm2325, %v2069, %v2324
        %vm2327 = vcmp.eq.f32.partialorder %v2069, 0.0
        %v2328 = vand.u32 %v2069, 2147483648
        %v2329 = vsel %vm2327, %v2328, %v2326
        %v2330 = vrsqrt.pop %v2070
        %v2331 = vmul.f32 %v2070, %v2330
        %vm2332 = vcmp.eq.f32.partialorder %v2070, inf
        %v2333 = vsel %vm2332, %v2070, %v2331
        %vm2334 = vcmp.eq.f32.partialorder %v2070, 0.0
        %v2335 = vand.u32 %v2070, 2147483648
        %v2336 = vsel %vm2334, %v2335, %v2333
        %v2337 = vrsqrt.pop %v2071
        %v2338 = vmul.f32 %v2071, %v2337
        %vm2339 = vcmp.eq.f32.partialorder %v2071, inf
        %v2340 = vsel %vm2339, %v2071, %v2338
        %vm2341 = vcmp.eq.f32.partialorder %v2071, 0.0
        %v2342 = vand.u32 %v2071, 2147483648
        %v2343 = vsel %vm2341, %v2342, %v2340
        %v2344 = vrsqrt.pop %v2072
        %v2345 = vmul.f32 %v2072, %v2344
        %vm2346 = vcmp.eq.f32.partialorder %v2072, inf
        %v2347 = vsel %vm2346, %v2072, %v2345
        %vm2348 = vcmp.eq.f32.partialorder %v2072, 0.0
        %v2349 = vand.u32 %v2072, 2147483648
        %v2350 = vsel %vm2348, %v2349, %v2347
        %v2351 = vrsqrt.pop %v2073
        %v2352 = vmul.f32 %v2073, %v2351
        %vm2353 = vcmp.eq.f32.partialorder %v2073, inf
        %v2354 = vsel %vm2353, %v2073, %v2352
        %vm2355 = vcmp.eq.f32.partialorder %v2073, 0.0
        %v2356 = vand.u32 %v2073, 2147483648
        %v2357 = vsel %vm2355, %v2356, %v2354
        %v2358 = vrsqrt.pop %v2074
        %v2359 = vmul.f32 %v2074, %v2358
        %vm2360 = vcmp.eq.f32.partialorder %v2074, inf
        %v2361 = vsel %vm2360, %v2074, %v2359
        %vm2362 = vcmp.eq.f32.partialorder %v2074, 0.0
        %v2363 = vand.u32 %v2074, 2147483648
        %v2364 = vsel %vm2362, %v2363, %v2361
        %v2365 = vrsqrt.pop %v2075
        %v2366 = vmul.f32 %v2075, %v2365
        %vm2367 = vcmp.eq.f32.partialorder %v2075, inf
        %v2368 = vsel %vm2367, %v2075, %v2366
        %vm2369 = vcmp.eq.f32.partialorder %v2075, 0.0
        %v2370 = vand.u32 %v2075, 2147483648
        %v2371 = vsel %vm2369, %v2370, %v2368
        %v2372 = vrsqrt.pop %v2076
        %v2373 = vmul.f32 %v2076, %v2372
        %vm2374 = vcmp.eq.f32.partialorder %v2076, inf
        %v2375 = vsel %vm2374, %v2076, %v2373
        %vm2376 = vcmp.eq.f32.partialorder %v2076, 0.0
        %v2377 = vand.u32 %v2076, 2147483648
        %v2378 = vsel %vm2376, %v2377, %v2375
        %v2379 = vrsqrt.pop %v2077
        %v2380 = vmul.f32 %v2077, %v2379
        %vm2381 = vcmp.eq.f32.partialorder %v2077, inf
        %v2382 = vsel %vm2381, %v2077, %v2380
        %vm2383 = vcmp.eq.f32.partialorder %v2077, 0.0
        %v2384 = vand.u32 %v2077, 2147483648
        %v2385 = vsel %vm2383, %v2384, %v2382
        %v2386 = vrsqrt.pop %v2078
        %v2387 = vmul.f32 %v2078, %v2386
        %vm2388 = vcmp.eq.f32.partialorder %v2078, inf
        %v2389 = vsel %vm2388, %v2078, %v2387
        %vm2390 = vcmp.eq.f32.partialorder %v2078, 0.0
        %v2391 = vand.u32 %v2078, 2147483648
        %v2392 = vsel %vm2390, %v2391, %v2389
        %v2393 = vrsqrt.pop %v2079
        %v2394 = vmul.f32 %v2079, %v2393
        %vm2395 = vcmp.eq.f32.partialorder %v2079, inf
        %v2396 = vsel %vm2395, %v2079, %v2394
        %vm2397 = vcmp.eq.f32.partialorder %v2079, 0.0
        %v2398 = vand.u32 %v2079, 2147483648
        %v2399 = vsel %vm2397, %v2398, %v2396
        %v2400 = vrsqrt.pop %v2112
        %v2401 = vmul.f32 %v2112, %v2400
        %vm2402 = vcmp.eq.f32.partialorder %v2112, inf
        %v2403 = vsel %vm2402, %v2112, %v2401
        %vm2404 = vcmp.eq.f32.partialorder %v2112, 0.0
        %v2405 = vand.u32 %v2112, 2147483648
        %v2406 = vsel %vm2404, %v2405, %v2403
        %v2407 = vrsqrt.pop %v2113
        %v2408 = vmul.f32 %v2113, %v2407
        %vm2409 = vcmp.eq.f32.partialorder %v2113, inf
        %v2410 = vsel %vm2409, %v2113, %v2408
        %vm2411 = vcmp.eq.f32.partialorder %v2113, 0.0
        %v2412 = vand.u32 %v2113, 2147483648
        %v2413 = vsel %vm2411, %v2412, %v2410
        %v2414 = vrsqrt.pop %v2114
        %v2415 = vmul.f32 %v2114, %v2414
        %vm2416 = vcmp.eq.f32.partialorder %v2114, inf
        %v2417 = vsel %vm2416, %v2114, %v2415
        %vm2418 = vcmp.eq.f32.partialorder %v2114, 0.0
        %v2419 = vand.u32 %v2114, 2147483648
        %v2420 = vsel %vm2418, %v2419, %v2417
        %v2421 = vrsqrt.pop %v2115
        %v2422 = vmul.f32 %v2115, %v2421
        %vm2423 = vcmp.eq.f32.partialorder %v2115, inf
        %v2424 = vsel %vm2423, %v2115, %v2422
        %vm2425 = vcmp.eq.f32.partialorder %v2115, 0.0
        %v2426 = vand.u32 %v2115, 2147483648
        %v2427 = vsel %vm2425, %v2426, %v2424
        %v2428 = vrsqrt.pop %v2116
        %v2429 = vmul.f32 %v2116, %v2428
        %vm2430 = vcmp.eq.f32.partialorder %v2116, inf
        %v2431 = vsel %vm2430, %v2116, %v2429
        %vm2432 = vcmp.eq.f32.partialorder %v2116, 0.0
        %v2433 = vand.u32 %v2116, 2147483648
        %v2434 = vsel %vm2432, %v2433, %v2431
        %v2435 = vrsqrt.pop %v2117
        %v2436 = vmul.f32 %v2117, %v2435
        %vm2437 = vcmp.eq.f32.partialorder %v2117, inf
        %v2438 = vsel %vm2437, %v2117, %v2436
        %vm2439 = vcmp.eq.f32.partialorder %v2117, 0.0
        %v2440 = vand.u32 %v2117, 2147483648
        %v2441 = vsel %vm2439, %v2440, %v2438
        %v2442 = vrsqrt.pop %v2118
        %v2443 = vmul.f32 %v2118, %v2442
        %vm2444 = vcmp.eq.f32.partialorder %v2118, inf
        %v2445 = vsel %vm2444, %v2118, %v2443
        %vm2446 = vcmp.eq.f32.partialorder %v2118, 0.0
        %v2447 = vand.u32 %v2118, 2147483648
        %v2448 = vsel %vm2446, %v2447, %v2445
        %v2449 = vrsqrt.pop %v2119
        %v2450 = vmul.f32 %v2119, %v2449
        %vm2451 = vcmp.eq.f32.partialorder %v2119, inf
        %v2452 = vsel %vm2451, %v2119, %v2450
        %vm2453 = vcmp.eq.f32.partialorder %v2119, 0.0
        %v2454 = vand.u32 %v2119, 2147483648
        %v2455 = vsel %vm2453, %v2454, %v2452
        %v2456 = vrsqrt.pop %v2120
        %v2457 = vmul.f32 %v2120, %v2456
        %vm2458 = vcmp.eq.f32.partialorder %v2120, inf
        %v2459 = vsel %vm2458, %v2120, %v2457
        %vm2460 = vcmp.eq.f32.partialorder %v2120, 0.0
        %v2461 = vand.u32 %v2120, 2147483648
        %v2462 = vsel %vm2460, %v2461, %v2459
        %v2463 = vrsqrt.pop %v2121
        %v2464 = vmul.f32 %v2121, %v2463
        %vm2465 = vcmp.eq.f32.partialorder %v2121, inf
        %v2466 = vsel %vm2465, %v2121, %v2464
        %vm2467 = vcmp.eq.f32.partialorder %v2121, 0.0
        %v2468 = vand.u32 %v2121, 2147483648
        %v2469 = vsel %vm2467, %v2468, %v2466
        %v2470 = vrsqrt.pop %v2122
        %v2471 = vmul.f32 %v2122, %v2470
        %vm2472 = vcmp.eq.f32.partialorder %v2122, inf
        %v2473 = vsel %vm2472, %v2122, %v2471
        %vm2474 = vcmp.eq.f32.partialorder %v2122, 0.0
        %v2475 = vand.u32 %v2122, 2147483648
        %v2476 = vsel %vm2474, %v2475, %v2473
        %v2477 = vrsqrt.pop %v2123
        %v2478 = vmul.f32 %v2123, %v2477
        %vm2479 = vcmp.eq.f32.partialorder %v2123, inf
        %v2480 = vsel %vm2479, %v2123, %v2478
        %vm2481 = vcmp.eq.f32.partialorder %v2123, 0.0
        %v2482 = vand.u32 %v2123, 2147483648
        %v2483 = vsel %vm2481, %v2482, %v2480
        %v2484 = vrsqrt.pop %v2124
        %v2485 = vmul.f32 %v2124, %v2484
        %vm2486 = vcmp.eq.f32.partialorder %v2124, inf
        %v2487 = vsel %vm2486, %v2124, %v2485
        %vm2488 = vcmp.eq.f32.partialorder %v2124, 0.0
        %v2489 = vand.u32 %v2124, 2147483648
        %v2490 = vsel %vm2488, %v2489, %v2487
        %v2491 = vrsqrt.pop %v2125
        %v2492 = vmul.f32 %v2125, %v2491
        %vm2493 = vcmp.eq.f32.partialorder %v2125, inf
        %v2494 = vsel %vm2493, %v2125, %v2492
        %vm2495 = vcmp.eq.f32.partialorder %v2125, 0.0
        %v2496 = vand.u32 %v2125, 2147483648
        %v2497 = vsel %vm2495, %v2496, %v2494
        %v2498 = vrsqrt.pop %v2126
        %v2499 = vmul.f32 %v2126, %v2498
        %vm2500 = vcmp.eq.f32.partialorder %v2126, inf
        %v2501 = vsel %vm2500, %v2126, %v2499
        %vm2502 = vcmp.eq.f32.partialorder %v2126, 0.0
        %v2503 = vand.u32 %v2126, 2147483648
        %v2504 = vsel %vm2502, %v2503, %v2501
        %v2505 = vrsqrt.pop %v2127
        %v2506 = vmul.f32 %v2127, %v2505
        %vm2507 = vcmp.eq.f32.partialorder %v2127, inf
        %v2508 = vsel %vm2507, %v2127, %v2506
        %vm2509 = vcmp.eq.f32.partialorder %v2127, 0.0
        %v2510 = vand.u32 %v2127, 2147483648
        %v2511 = vsel %vm2509, %v2510, %v2508
        %v2512 = vrsqrt.pop %v2128
        %v2513 = vmul.f32 %v2128, %v2512
        %vm2514 = vcmp.eq.f32.partialorder %v2128, inf
        %v2515 = vsel %vm2514, %v2128, %v2513
        %vm2516 = vcmp.eq.f32.partialorder %v2128, 0.0
        %v2517 = vand.u32 %v2128, 2147483648
        %v2518 = vsel %vm2516, %v2517, %v2515
        %v2519 = vrsqrt.pop %v2129
        %v2520 = vmul.f32 %v2129, %v2519
        %vm2521 = vcmp.eq.f32.partialorder %v2129, inf
        %v2522 = vsel %vm2521, %v2129, %v2520
        %vm2523 = vcmp.eq.f32.partialorder %v2129, 0.0
        %v2524 = vand.u32 %v2129, 2147483648
        %v2525 = vsel %vm2523, %v2524, %v2522
        %v2526 = vrsqrt.pop %v2130
        %v2527 = vmul.f32 %v2130, %v2526
        %vm2528 = vcmp.eq.f32.partialorder %v2130, inf
        %v2529 = vsel %vm2528, %v2130, %v2527
        %vm2530 = vcmp.eq.f32.partialorder %v2130, 0.0
        %v2531 = vand.u32 %v2130, 2147483648
        %v2532 = vsel %vm2530, %v2531, %v2529
        %v2533 = vrsqrt.pop %v2131
        %v2534 = vmul.f32 %v2131, %v2533
        %vm2535 = vcmp.eq.f32.partialorder %v2131, inf
        %v2536 = vsel %vm2535, %v2131, %v2534
        %vm2537 = vcmp.eq.f32.partialorder %v2131, 0.0
        %v2538 = vand.u32 %v2131, 2147483648
        %v2539 = vsel %vm2537, %v2538, %v2536
        %v2540 = vrsqrt.pop %v2132
        %v2541 = vmul.f32 %v2132, %v2540
        %vm2542 = vcmp.eq.f32.partialorder %v2132, inf
        %v2543 = vsel %vm2542, %v2132, %v2541
        %vm2544 = vcmp.eq.f32.partialorder %v2132, 0.0
        %v2545 = vand.u32 %v2132, 2147483648
        %v2546 = vsel %vm2544, %v2545, %v2543
        %v2547 = vrsqrt.pop %v2133
        %v2548 = vmul.f32 %v2133, %v2547
        %vm2549 = vcmp.eq.f32.partialorder %v2133, inf
        %v2550 = vsel %vm2549, %v2133, %v2548
        %vm2551 = vcmp.eq.f32.partialorder %v2133, 0.0
        %v2552 = vand.u32 %v2133, 2147483648
        %v2553 = vsel %vm2551, %v2552, %v2550
        %v2554 = vrsqrt.pop %v2134
        %v2555 = vmul.f32 %v2134, %v2554
        %vm2556 = vcmp.eq.f32.partialorder %v2134, inf
        %v2557 = vsel %vm2556, %v2134, %v2555
        %vm2558 = vcmp.eq.f32.partialorder %v2134, 0.0
        %v2559 = vand.u32 %v2134, 2147483648
        %v2560 = vsel %vm2558, %v2559, %v2557
        %v2561 = vrsqrt.pop %v2135
        %v2562 = vmul.f32 %v2135, %v2561
        %vm2563 = vcmp.eq.f32.partialorder %v2135, inf
        %v2564 = vsel %vm2563, %v2135, %v2562
        %vm2565 = vcmp.eq.f32.partialorder %v2135, 0.0
        %v2566 = vand.u32 %v2135, 2147483648
        %v2567 = vsel %vm2565, %v2566, %v2564
        %v2568 = vrsqrt.pop %v2136
        %v2569 = vmul.f32 %v2136, %v2568
        %vm2570 = vcmp.eq.f32.partialorder %v2136, inf
        %v2571 = vsel %vm2570, %v2136, %v2569
        %vm2572 = vcmp.eq.f32.partialorder %v2136, 0.0
        %v2573 = vand.u32 %v2136, 2147483648
        %v2574 = vsel %vm2572, %v2573, %v2571
        %v2575 = vrsqrt.pop %v2137
        %v2576 = vmul.f32 %v2137, %v2575
        %vm2577 = vcmp.eq.f32.partialorder %v2137, inf
        %v2578 = vsel %vm2577, %v2137, %v2576
        %vm2579 = vcmp.eq.f32.partialorder %v2137, 0.0
        %v2580 = vand.u32 %v2137, 2147483648
        %v2581 = vsel %vm2579, %v2580, %v2578
        %v2582 = vrsqrt.pop %v2138
        %v2583 = vmul.f32 %v2138, %v2582
        %vm2584 = vcmp.eq.f32.partialorder %v2138, inf
        %v2585 = vsel %vm2584, %v2138, %v2583
        %vm2586 = vcmp.eq.f32.partialorder %v2138, 0.0
        %v2587 = vand.u32 %v2138, 2147483648
        %v2588 = vsel %vm2586, %v2587, %v2585
        %v2589 = vrsqrt.pop %v2139
        %v2590 = vmul.f32 %v2139, %v2589
        %vm2591 = vcmp.eq.f32.partialorder %v2139, inf
        %v2592 = vsel %vm2591, %v2139, %v2590
        %vm2593 = vcmp.eq.f32.partialorder %v2139, 0.0
        %v2594 = vand.u32 %v2139, 2147483648
        %v2595 = vsel %vm2593, %v2594, %v2592
        %v2596 = vrsqrt.pop %v2140
        %v2597 = vmul.f32 %v2140, %v2596
        %vm2598 = vcmp.eq.f32.partialorder %v2140, inf
        %v2599 = vsel %vm2598, %v2140, %v2597
        %vm2600 = vcmp.eq.f32.partialorder %v2140, 0.0
        %v2601 = vand.u32 %v2140, 2147483648
        %v2602 = vsel %vm2600, %v2601, %v2599
        %v2603 = vrsqrt.pop %v2141
        %v2604 = vmul.f32 %v2141, %v2603
        %vm2605 = vcmp.eq.f32.partialorder %v2141, inf
        %v2606 = vsel %vm2605, %v2141, %v2604
        %vm2607 = vcmp.eq.f32.partialorder %v2141, 0.0
        %v2608 = vand.u32 %v2141, 2147483648
        %v2609 = vsel %vm2607, %v2608, %v2606
        %v2610 = vrsqrt.pop %v2142
        %v2611 = vmul.f32 %v2142, %v2610
        %vm2612 = vcmp.eq.f32.partialorder %v2142, inf
        %v2613 = vsel %vm2612, %v2142, %v2611
        %vm2614 = vcmp.eq.f32.partialorder %v2142, 0.0
        %v2615 = vand.u32 %v2142, 2147483648
        %v2616 = vsel %vm2614, %v2615, %v2613
        %v2617 = vrsqrt.pop %v2143
        %v2618 = vmul.f32 %v2143, %v2617
        %vm2619 = vcmp.eq.f32.partialorder %v2143, inf
        %v2620 = vsel %vm2619, %v2143, %v2618
        %vm2621 = vcmp.eq.f32.partialorder %v2143, 0.0
        %v2622 = vand.u32 %v2143, 2147483648
        %v2623 = vsel %vm2621, %v2622, %v2620
        %v2624 = vrsqrt.pop %v2080
        %v2625 = vmul.f32 %v2080, %v2624
        %vm2626 = vcmp.eq.f32.partialorder %v2080, inf
        %v2627 = vsel %vm2626, %v2080, %v2625
        %vm2628 = vcmp.eq.f32.partialorder %v2080, 0.0
        %v2629 = vand.u32 %v2080, 2147483648
        %v2630 = vsel %vm2628, %v2629, %v2627
        %v2631 = vrsqrt.pop %v2081
        %v2632 = vmul.f32 %v2081, %v2631
        %vm2633 = vcmp.eq.f32.partialorder %v2081, inf
        %v2634 = vsel %vm2633, %v2081, %v2632
        %vm2635 = vcmp.eq.f32.partialorder %v2081, 0.0
        %v2636 = vand.u32 %v2081, 2147483648
        %v2637 = vsel %vm2635, %v2636, %v2634
        %v2638 = vrsqrt.pop %v2082
        %v2639 = vmul.f32 %v2082, %v2638
        %vm2640 = vcmp.eq.f32.partialorder %v2082, inf
        %v2641 = vsel %vm2640, %v2082, %v2639
        %vm2642 = vcmp.eq.f32.partialorder %v2082, 0.0
        %v2643 = vand.u32 %v2082, 2147483648
        %v2644 = vsel %vm2642, %v2643, %v2641
        %v2645 = vrsqrt.pop %v2083
        %v2646 = vmul.f32 %v2083, %v2645
        %vm2647 = vcmp.eq.f32.partialorder %v2083, inf
        %v2648 = vsel %vm2647, %v2083, %v2646
        %vm2649 = vcmp.eq.f32.partialorder %v2083, 0.0
        %v2650 = vand.u32 %v2083, 2147483648
        %v2651 = vsel %vm2649, %v2650, %v2648
        %v2652 = vrsqrt.pop %v2084
        %v2653 = vmul.f32 %v2084, %v2652
        %vm2654 = vcmp.eq.f32.partialorder %v2084, inf
        %v2655 = vsel %vm2654, %v2084, %v2653
        %vm2656 = vcmp.eq.f32.partialorder %v2084, 0.0
        %v2657 = vand.u32 %v2084, 2147483648
        %v2658 = vsel %vm2656, %v2657, %v2655
        %v2659 = vrsqrt.pop %v2085
        %v2660 = vmul.f32 %v2085, %v2659
        %vm2661 = vcmp.eq.f32.partialorder %v2085, inf
        %v2662 = vsel %vm2661, %v2085, %v2660
        %vm2663 = vcmp.eq.f32.partialorder %v2085, 0.0
        %v2664 = vand.u32 %v2085, 2147483648
        %v2665 = vsel %vm2663, %v2664, %v2662
        %v2666 = vrsqrt.pop %v2086
        %v2667 = vmul.f32 %v2086, %v2666
        %vm2668 = vcmp.eq.f32.partialorder %v2086, inf
        %v2669 = vsel %vm2668, %v2086, %v2667
        %vm2670 = vcmp.eq.f32.partialorder %v2086, 0.0
        %v2671 = vand.u32 %v2086, 2147483648
        %v2672 = vsel %vm2670, %v2671, %v2669
        %v2673 = vrsqrt.pop %v2087
        %v2674 = vmul.f32 %v2087, %v2673
        %vm2675 = vcmp.eq.f32.partialorder %v2087, inf
        %v2676 = vsel %vm2675, %v2087, %v2674
        %vm2677 = vcmp.eq.f32.partialorder %v2087, 0.0
        %v2678 = vand.u32 %v2087, 2147483648
        %v2679 = vsel %vm2677, %v2678, %v2676
        %v2680 = vrsqrt.pop %v2088
        %v2681 = vmul.f32 %v2088, %v2680
        %vm2682 = vcmp.eq.f32.partialorder %v2088, inf
        %v2683 = vsel %vm2682, %v2088, %v2681
        %vm2684 = vcmp.eq.f32.partialorder %v2088, 0.0
        %v2685 = vand.u32 %v2088, 2147483648
        %v2686 = vsel %vm2684, %v2685, %v2683
        %v2687 = vrsqrt.pop %v2089
        %v2688 = vmul.f32 %v2089, %v2687
        %vm2689 = vcmp.eq.f32.partialorder %v2089, inf
        %v2690 = vsel %vm2689, %v2089, %v2688
        %vm2691 = vcmp.eq.f32.partialorder %v2089, 0.0
        %v2692 = vand.u32 %v2089, 2147483648
        %v2693 = vsel %vm2691, %v2692, %v2690
        %v2694 = vrsqrt.pop %v2090
        %v2695 = vmul.f32 %v2090, %v2694
        %vm2696 = vcmp.eq.f32.partialorder %v2090, inf
        %v2697 = vsel %vm2696, %v2090, %v2695
        %vm2698 = vcmp.eq.f32.partialorder %v2090, 0.0
        %v2699 = vand.u32 %v2090, 2147483648
        %v2700 = vsel %vm2698, %v2699, %v2697
        %v2701 = vrsqrt.pop %v2091
        %v2702 = vmul.f32 %v2091, %v2701
        %vm2703 = vcmp.eq.f32.partialorder %v2091, inf
        %v2704 = vsel %vm2703, %v2091, %v2702
        %vm2705 = vcmp.eq.f32.partialorder %v2091, 0.0
        %v2706 = vand.u32 %v2091, 2147483648
        %v2707 = vsel %vm2705, %v2706, %v2704
        %v2708 = vrsqrt.pop %v2092
        %v2709 = vmul.f32 %v2092, %v2708
        %vm2710 = vcmp.eq.f32.partialorder %v2092, inf
        %v2711 = vsel %vm2710, %v2092, %v2709
        %vm2712 = vcmp.eq.f32.partialorder %v2092, 0.0
        %v2713 = vand.u32 %v2092, 2147483648
        %v2714 = vsel %vm2712, %v2713, %v2711
        %v2715 = vrsqrt.pop %v2093
        %v2716 = vmul.f32 %v2093, %v2715
        %vm2717 = vcmp.eq.f32.partialorder %v2093, inf
        %v2718 = vsel %vm2717, %v2093, %v2716
        %vm2719 = vcmp.eq.f32.partialorder %v2093, 0.0
        %v2720 = vand.u32 %v2093, 2147483648
        %v2721 = vsel %vm2719, %v2720, %v2718
        %v2722 = vrsqrt.pop %v2094
        %v2723 = vmul.f32 %v2094, %v2722
        %vm2724 = vcmp.eq.f32.partialorder %v2094, inf
        %v2725 = vsel %vm2724, %v2094, %v2723
        %vm2726 = vcmp.eq.f32.partialorder %v2094, 0.0
        %v2727 = vand.u32 %v2094, 2147483648
        %v2728 = vsel %vm2726, %v2727, %v2725
        %v2729 = vrsqrt.pop %v2095
        %v2730 = vmul.f32 %v2095, %v2729
        %vm2731 = vcmp.eq.f32.partialorder %v2095, inf
        %v2732 = vsel %vm2731, %v2095, %v2730
        %vm2733 = vcmp.eq.f32.partialorder %v2095, 0.0
        %v2734 = vand.u32 %v2095, 2147483648
        %v2735 = vsel %vm2733, %v2734, %v2732
        %v2736 = vrsqrt.pop %v2096
        %v2737 = vmul.f32 %v2096, %v2736
        %vm2738 = vcmp.eq.f32.partialorder %v2096, inf
        %v2739 = vsel %vm2738, %v2096, %v2737
        %vm2740 = vcmp.eq.f32.partialorder %v2096, 0.0
        %v2741 = vand.u32 %v2096, 2147483648
        %v2742 = vsel %vm2740, %v2741, %v2739
        %v2743 = vrsqrt.pop %v2097
        %v2744 = vmul.f32 %v2097, %v2743
        %vm2745 = vcmp.eq.f32.partialorder %v2097, inf
        %v2746 = vsel %vm2745, %v2097, %v2744
        %vm2747 = vcmp.eq.f32.partialorder %v2097, 0.0
        %v2748 = vand.u32 %v2097, 2147483648
        %v2749 = vsel %vm2747, %v2748, %v2746
        %v2750 = vrsqrt.pop %v2098
        %v2751 = vmul.f32 %v2098, %v2750
        %vm2752 = vcmp.eq.f32.partialorder %v2098, inf
        %v2753 = vsel %vm2752, %v2098, %v2751
        %vm2754 = vcmp.eq.f32.partialorder %v2098, 0.0
        %v2755 = vand.u32 %v2098, 2147483648
        %v2756 = vsel %vm2754, %v2755, %v2753
        %v2757 = vrsqrt.pop %v2099
        %v2758 = vmul.f32 %v2099, %v2757
        %vm2759 = vcmp.eq.f32.partialorder %v2099, inf
        %v2760 = vsel %vm2759, %v2099, %v2758
        %vm2761 = vcmp.eq.f32.partialorder %v2099, 0.0
        %v2762 = vand.u32 %v2099, 2147483648
        %v2763 = vsel %vm2761, %v2762, %v2760
        %v2764 = vrsqrt.pop %v2100
        %v2765 = vmul.f32 %v2100, %v2764
        %vm2766 = vcmp.eq.f32.partialorder %v2100, inf
        %v2767 = vsel %vm2766, %v2100, %v2765
        %vm2768 = vcmp.eq.f32.partialorder %v2100, 0.0
        %v2769 = vand.u32 %v2100, 2147483648
        %v2770 = vsel %vm2768, %v2769, %v2767
        %v2771 = vrsqrt.pop %v2101
        %v2772 = vmul.f32 %v2101, %v2771
        %vm2773 = vcmp.eq.f32.partialorder %v2101, inf
        %v2774 = vsel %vm2773, %v2101, %v2772
        %vm2775 = vcmp.eq.f32.partialorder %v2101, 0.0
        %v2776 = vand.u32 %v2101, 2147483648
        %v2777 = vsel %vm2775, %v2776, %v2774
        %v2778 = vrsqrt.pop %v2102
        %v2779 = vmul.f32 %v2102, %v2778
        %vm2780 = vcmp.eq.f32.partialorder %v2102, inf
        %v2781 = vsel %vm2780, %v2102, %v2779
        %vm2782 = vcmp.eq.f32.partialorder %v2102, 0.0
        %v2783 = vand.u32 %v2102, 2147483648
        %v2784 = vsel %vm2782, %v2783, %v2781
        %v2785 = vrsqrt.pop %v2103
        %v2786 = vmul.f32 %v2103, %v2785
        %vm2787 = vcmp.eq.f32.partialorder %v2103, inf
        %v2788 = vsel %vm2787, %v2103, %v2786
        %vm2789 = vcmp.eq.f32.partialorder %v2103, 0.0
        %v2790 = vand.u32 %v2103, 2147483648
        %v2791 = vsel %vm2789, %v2790, %v2788
        %v2792 = vrsqrt.pop %v2104
        %v2793 = vmul.f32 %v2104, %v2792
        %vm2794 = vcmp.eq.f32.partialorder %v2104, inf
        %v2795 = vsel %vm2794, %v2104, %v2793
        %vm2796 = vcmp.eq.f32.partialorder %v2104, 0.0
        %v2797 = vand.u32 %v2104, 2147483648
        %v2798 = vsel %vm2796, %v2797, %v2795
        %v2799 = vrsqrt.pop %v2105
        %v2800 = vmul.f32 %v2105, %v2799
        %vm2801 = vcmp.eq.f32.partialorder %v2105, inf
        %v2802 = vsel %vm2801, %v2105, %v2800
        %vm2803 = vcmp.eq.f32.partialorder %v2105, 0.0
        %v2804 = vand.u32 %v2105, 2147483648
        %v2805 = vsel %vm2803, %v2804, %v2802
        %v2806 = vrsqrt.pop %v2106
        %v2807 = vmul.f32 %v2106, %v2806
        %vm2808 = vcmp.eq.f32.partialorder %v2106, inf
        %v2809 = vsel %vm2808, %v2106, %v2807
        %vm2810 = vcmp.eq.f32.partialorder %v2106, 0.0
        %v2811 = vand.u32 %v2106, 2147483648
        %v2812 = vsel %vm2810, %v2811, %v2809
        %v2813 = vrsqrt.pop %v2107
        %v2814 = vmul.f32 %v2107, %v2813
        %vm2815 = vcmp.eq.f32.partialorder %v2107, inf
        %v2816 = vsel %vm2815, %v2107, %v2814
        %vm2817 = vcmp.eq.f32.partialorder %v2107, 0.0
        %v2818 = vand.u32 %v2107, 2147483648
        %v2819 = vsel %vm2817, %v2818, %v2816
        %v2820 = vrsqrt.pop %v2108
        %v2821 = vmul.f32 %v2108, %v2820
        %vm2822 = vcmp.eq.f32.partialorder %v2108, inf
        %v2823 = vsel %vm2822, %v2108, %v2821
        %vm2824 = vcmp.eq.f32.partialorder %v2108, 0.0
        %v2825 = vand.u32 %v2108, 2147483648
        %v2826 = vsel %vm2824, %v2825, %v2823
        %v2827 = vrsqrt.pop %v2109
        %v2828 = vmul.f32 %v2109, %v2827
        %vm2829 = vcmp.eq.f32.partialorder %v2109, inf
        %v2830 = vsel %vm2829, %v2109, %v2828
        %vm2831 = vcmp.eq.f32.partialorder %v2109, 0.0
        %v2832 = vand.u32 %v2109, 2147483648
        %v2833 = vsel %vm2831, %v2832, %v2830
        %v2834 = vrsqrt.pop %v2110
        %v2835 = vmul.f32 %v2110, %v2834
        %vm2836 = vcmp.eq.f32.partialorder %v2110, inf
        %v2837 = vsel %vm2836, %v2110, %v2835
        %vm2838 = vcmp.eq.f32.partialorder %v2110, 0.0
        %v2839 = vand.u32 %v2110, 2147483648
        %v2840 = vsel %vm2838, %v2839, %v2837
        %v2841 = vrsqrt.pop %v2111
        %v2842 = vmul.f32 %v2111, %v2841
        %vm2843 = vcmp.eq.f32.partialorder %v2111, inf
        %v2844 = vsel %vm2843, %v2111, %v2842
        %vm2845 = vcmp.eq.f32.partialorder %v2111, 0.0
        %v2846 = vand.u32 %v2111, 2147483648
        %v2847 = vsel %vm2845, %v2846, %v2844
        %v2848 = vrsqrt.pop %v2144
        %v2849 = vmul.f32 %v2144, %v2848
        %vm2850 = vcmp.eq.f32.partialorder %v2144, inf
        %v2851 = vsel %vm2850, %v2144, %v2849
        %vm2852 = vcmp.eq.f32.partialorder %v2144, 0.0
        %v2853 = vand.u32 %v2144, 2147483648
        %v2854 = vsel %vm2852, %v2853, %v2851
        %v2855 = vrsqrt.pop %v2145
        %v2856 = vmul.f32 %v2145, %v2855
        %vm2857 = vcmp.eq.f32.partialorder %v2145, inf
        %v2858 = vsel %vm2857, %v2145, %v2856
        %vm2859 = vcmp.eq.f32.partialorder %v2145, 0.0
        %v2860 = vand.u32 %v2145, 2147483648
        %v2861 = vsel %vm2859, %v2860, %v2858
        %v2862 = vrsqrt.pop %v2146
        %v2863 = vmul.f32 %v2146, %v2862
        %vm2864 = vcmp.eq.f32.partialorder %v2146, inf
        %v2865 = vsel %vm2864, %v2146, %v2863
        %vm2866 = vcmp.eq.f32.partialorder %v2146, 0.0
        %v2867 = vand.u32 %v2146, 2147483648
        %v2868 = vsel %vm2866, %v2867, %v2865
        %v2869 = vrsqrt.pop %v2147
        %v2870 = vmul.f32 %v2147, %v2869
        %vm2871 = vcmp.eq.f32.partialorder %v2147, inf
        %v2872 = vsel %vm2871, %v2147, %v2870
        %vm2873 = vcmp.eq.f32.partialorder %v2147, 0.0
        %v2874 = vand.u32 %v2147, 2147483648
        %v2875 = vsel %vm2873, %v2874, %v2872
        %v2876 = vrsqrt.pop %v2148
        %v2877 = vmul.f32 %v2148, %v2876
        %vm2878 = vcmp.eq.f32.partialorder %v2148, inf
        %v2879 = vsel %vm2878, %v2148, %v2877
        %vm2880 = vcmp.eq.f32.partialorder %v2148, 0.0
        %v2881 = vand.u32 %v2148, 2147483648
        %v2882 = vsel %vm2880, %v2881, %v2879
        %v2883 = vrsqrt.pop %v2149
        %v2884 = vmul.f32 %v2149, %v2883
        %vm2885 = vcmp.eq.f32.partialorder %v2149, inf
        %v2886 = vsel %vm2885, %v2149, %v2884
        %vm2887 = vcmp.eq.f32.partialorder %v2149, 0.0
        %v2888 = vand.u32 %v2149, 2147483648
        %v2889 = vsel %vm2887, %v2888, %v2886
        %v2890 = vrsqrt.pop %v2150
        %v2891 = vmul.f32 %v2150, %v2890
        %vm2892 = vcmp.eq.f32.partialorder %v2150, inf
        %v2893 = vsel %vm2892, %v2150, %v2891
        %vm2894 = vcmp.eq.f32.partialorder %v2150, 0.0
        %v2895 = vand.u32 %v2150, 2147483648
        %v2896 = vsel %vm2894, %v2895, %v2893
        %v2897 = vrsqrt.pop %v2151
        %v2898 = vmul.f32 %v2151, %v2897
        %vm2899 = vcmp.eq.f32.partialorder %v2151, inf
        %v2900 = vsel %vm2899, %v2151, %v2898
        %vm2901 = vcmp.eq.f32.partialorder %v2151, 0.0
        %v2902 = vand.u32 %v2151, 2147483648
        %v2903 = vsel %vm2901, %v2902, %v2900
        %v2904 = vrsqrt.pop %v2152
        %v2905 = vmul.f32 %v2152, %v2904
        %vm2906 = vcmp.eq.f32.partialorder %v2152, inf
        %v2907 = vsel %vm2906, %v2152, %v2905
        %vm2908 = vcmp.eq.f32.partialorder %v2152, 0.0
        %v2909 = vand.u32 %v2152, 2147483648
        %v2910 = vsel %vm2908, %v2909, %v2907
        %v2911 = vrsqrt.pop %v2153
        %v2912 = vmul.f32 %v2153, %v2911
        %vm2913 = vcmp.eq.f32.partialorder %v2153, inf
        %v2914 = vsel %vm2913, %v2153, %v2912
        %vm2915 = vcmp.eq.f32.partialorder %v2153, 0.0
        %v2916 = vand.u32 %v2153, 2147483648
        %v2917 = vsel %vm2915, %v2916, %v2914
        %v2918 = vrsqrt.pop %v2154
        %v2919 = vmul.f32 %v2154, %v2918
        %vm2920 = vcmp.eq.f32.partialorder %v2154, inf
        %v2921 = vsel %vm2920, %v2154, %v2919
        %vm2922 = vcmp.eq.f32.partialorder %v2154, 0.0
        %v2923 = vand.u32 %v2154, 2147483648
        %v2924 = vsel %vm2922, %v2923, %v2921
        %v2925 = vrsqrt.pop %v2155
        %v2926 = vmul.f32 %v2155, %v2925
        %vm2927 = vcmp.eq.f32.partialorder %v2155, inf
        %v2928 = vsel %vm2927, %v2155, %v2926
        %vm2929 = vcmp.eq.f32.partialorder %v2155, 0.0
        %v2930 = vand.u32 %v2155, 2147483648
        %v2931 = vsel %vm2929, %v2930, %v2928
        %v2932 = vrsqrt.pop %v2156
        %v2933 = vmul.f32 %v2156, %v2932
        %vm2934 = vcmp.eq.f32.partialorder %v2156, inf
        %v2935 = vsel %vm2934, %v2156, %v2933
        %vm2936 = vcmp.eq.f32.partialorder %v2156, 0.0
        %v2937 = vand.u32 %v2156, 2147483648
        %v2938 = vsel %vm2936, %v2937, %v2935
        %v2939 = vrsqrt.pop %v2157
        %v2940 = vmul.f32 %v2157, %v2939
        %vm2941 = vcmp.eq.f32.partialorder %v2157, inf
        %v2942 = vsel %vm2941, %v2157, %v2940
        %vm2943 = vcmp.eq.f32.partialorder %v2157, 0.0
        %v2944 = vand.u32 %v2157, 2147483648
        %v2945 = vsel %vm2943, %v2944, %v2942
        %v2946 = vrsqrt.pop %v2158
        %v2947 = vmul.f32 %v2158, %v2946
        %vm2948 = vcmp.eq.f32.partialorder %v2158, inf
        %v2949 = vsel %vm2948, %v2158, %v2947
        %vm2950 = vcmp.eq.f32.partialorder %v2158, 0.0
        %v2951 = vand.u32 %v2158, 2147483648
        %v2952 = vsel %vm2950, %v2951, %v2949
        %v2953 = vrsqrt.pop %v2159
        %v2954 = vmul.f32 %v2159, %v2953
        %vm2955 = vcmp.eq.f32.partialorder %v2159, inf
        %v2956 = vsel %vm2955, %v2159, %v2954
        %vm2957 = vcmp.eq.f32.partialorder %v2159, 0.0
        %v2958 = vand.u32 %v2159, 2147483648
        %v2959 = vsel %vm2957, %v2958, %v2956
        %v2960 = vrsqrt.pop %v2160
        %v2961 = vmul.f32 %v2160, %v2960
        %vm2962 = vcmp.eq.f32.partialorder %v2160, inf
        %v2963 = vsel %vm2962, %v2160, %v2961
        %vm2964 = vcmp.eq.f32.partialorder %v2160, 0.0
        %v2965 = vand.u32 %v2160, 2147483648
        %v2966 = vsel %vm2964, %v2965, %v2963
        %v2967 = vrsqrt.pop %v2161
        %v2968 = vmul.f32 %v2161, %v2967
        %vm2969 = vcmp.eq.f32.partialorder %v2161, inf
        %v2970 = vsel %vm2969, %v2161, %v2968
        %vm2971 = vcmp.eq.f32.partialorder %v2161, 0.0
        %v2972 = vand.u32 %v2161, 2147483648
        %v2973 = vsel %vm2971, %v2972, %v2970
        %v2974 = vrsqrt.pop %v2162
        %v2975 = vmul.f32 %v2162, %v2974
        %vm2976 = vcmp.eq.f32.partialorder %v2162, inf
        %v2977 = vsel %vm2976, %v2162, %v2975
        %vm2978 = vcmp.eq.f32.partialorder %v2162, 0.0
        %v2979 = vand.u32 %v2162, 2147483648
        %v2980 = vsel %vm2978, %v2979, %v2977
        %v2981 = vrsqrt.pop %v2163
        %v2982 = vmul.f32 %v2163, %v2981
        %vm2983 = vcmp.eq.f32.partialorder %v2163, inf
        %v2984 = vsel %vm2983, %v2163, %v2982
        %vm2985 = vcmp.eq.f32.partialorder %v2163, 0.0
        %v2986 = vand.u32 %v2163, 2147483648
        %v2987 = vsel %vm2985, %v2986, %v2984
        %v2988 = vrsqrt.pop %v2164
        %v2989 = vmul.f32 %v2164, %v2988
        %vm2990 = vcmp.eq.f32.partialorder %v2164, inf
        %v2991 = vsel %vm2990, %v2164, %v2989
        %vm2992 = vcmp.eq.f32.partialorder %v2164, 0.0
        %v2993 = vand.u32 %v2164, 2147483648
        %v2994 = vsel %vm2992, %v2993, %v2991
        %v2995 = vrsqrt.pop %v2165
        %v2996 = vmul.f32 %v2165, %v2995
        %vm2997 = vcmp.eq.f32.partialorder %v2165, inf
        %v2998 = vsel %vm2997, %v2165, %v2996
        %vm2999 = vcmp.eq.f32.partialorder %v2165, 0.0
        %v3000 = vand.u32 %v2165, 2147483648
        %v3001 = vsel %vm2999, %v3000, %v2998
        %v3002 = vrsqrt.pop %v2166
        %v3003 = vmul.f32 %v2166, %v3002
        %vm3004 = vcmp.eq.f32.partialorder %v2166, inf
        %v3005 = vsel %vm3004, %v2166, %v3003
        %vm3006 = vcmp.eq.f32.partialorder %v2166, 0.0
        %v3007 = vand.u32 %v2166, 2147483648
        %v3008 = vsel %vm3006, %v3007, %v3005
        %v3009 = vrsqrt.pop %v2167
        %v3010 = vmul.f32 %v2167, %v3009
        %vm3011 = vcmp.eq.f32.partialorder %v2167, inf
        %v3012 = vsel %vm3011, %v2167, %v3010
        %vm3013 = vcmp.eq.f32.partialorder %v2167, 0.0
        %v3014 = vand.u32 %v2167, 2147483648
        %v3015 = vsel %vm3013, %v3014, %v3012
        %v3016 = vrsqrt.pop %v2168
        %v3017 = vmul.f32 %v2168, %v3016
        %vm3018 = vcmp.eq.f32.partialorder %v2168, inf
        %v3019 = vsel %vm3018, %v2168, %v3017
        %vm3020 = vcmp.eq.f32.partialorder %v2168, 0.0
        %v3021 = vand.u32 %v2168, 2147483648
        %v3022 = vsel %vm3020, %v3021, %v3019
        %v3023 = vrsqrt.pop %v2169
        %v3024 = vmul.f32 %v2169, %v3023
        %vm3025 = vcmp.eq.f32.partialorder %v2169, inf
        %v3026 = vsel %vm3025, %v2169, %v3024
        %vm3027 = vcmp.eq.f32.partialorder %v2169, 0.0
        %v3028 = vand.u32 %v2169, 2147483648
        %v3029 = vsel %vm3027, %v3028, %v3026
        %v3030 = vrsqrt.pop %v2170
        %v3031 = vmul.f32 %v2170, %v3030
        %vm3032 = vcmp.eq.f32.partialorder %v2170, inf
        %v3033 = vsel %vm3032, %v2170, %v3031
        %vm3034 = vcmp.eq.f32.partialorder %v2170, 0.0
        %v3035 = vand.u32 %v2170, 2147483648
        %v3036 = vsel %vm3034, %v3035, %v3033
        %v3037 = vrsqrt.pop %v2171
        %v3038 = vmul.f32 %v2171, %v3037
        %vm3039 = vcmp.eq.f32.partialorder %v2171, inf
        %v3040 = vsel %vm3039, %v2171, %v3038
        %vm3041 = vcmp.eq.f32.partialorder %v2171, 0.0
        %v3042 = vand.u32 %v2171, 2147483648
        %v3043 = vsel %vm3041, %v3042, %v3040
        %v3044 = vrsqrt.pop %v2172
        %v3045 = vmul.f32 %v2172, %v3044
        %vm3046 = vcmp.eq.f32.partialorder %v2172, inf
        %v3047 = vsel %vm3046, %v2172, %v3045
        %vm3048 = vcmp.eq.f32.partialorder %v2172, 0.0
        %v3049 = vand.u32 %v2172, 2147483648
        %v3050 = vsel %vm3048, %v3049, %v3047
        %v3051 = vrsqrt.pop %v2173
        %v3052 = vmul.f32 %v2173, %v3051
        %vm3053 = vcmp.eq.f32.partialorder %v2173, inf
        %v3054 = vsel %vm3053, %v2173, %v3052
        %vm3055 = vcmp.eq.f32.partialorder %v2173, 0.0
        %v3056 = vand.u32 %v2173, 2147483648
        %v3057 = vsel %vm3055, %v3056, %v3054
        %v3058 = vrsqrt.pop %v2174
        %v3059 = vmul.f32 %v2174, %v3058
        %vm3060 = vcmp.eq.f32.partialorder %v2174, inf
        %v3061 = vsel %vm3060, %v2174, %v3059
        %vm3062 = vcmp.eq.f32.partialorder %v2174, 0.0
        %v3063 = vand.u32 %v2174, 2147483648
        %v3064 = vsel %vm3062, %v3063, %v3061
        %v3065 = vrsqrt.pop %v2175
        %v3066 = vmul.f32 %v2175, %v3065
        %vm3067 = vcmp.eq.f32.partialorder %v2175, inf
        %v3068 = vsel %vm3067, %v2175, %v3066
        %vm3069 = vcmp.eq.f32.partialorder %v2175, 0.0
        %v3070 = vand.u32 %v2175, 2147483648
        %v3071 = vsel %vm3069, %v3070, %v3068
        %v3072 = vlog2.pop %v2112
        %v3073 = vmul.f32 %v3072, 0.6931472
        %v3074 = vlog2.pop %v2113
        %v3075 = vmul.f32 %v3074, 0.6931472
        %v3076 = vlog2.pop %v2114
        %v3077 = vmul.f32 %v3076, 0.6931472
        %v3078 = vlog2.pop %v2115
        %v3079 = vmul.f32 %v3078, 0.6931472
        %v3080 = vlog2.pop %v2116
        %v3081 = vmul.f32 %v3080, 0.6931472
        %v3082 = vlog2.pop %v2117
        %v3083 = vmul.f32 %v3082, 0.6931472
        %v3084 = vlog2.pop %v2118
        %v3085 = vmul.f32 %v3084, 0.6931472
        %v3086 = vlog2.pop %v2119
        %v3087 = vmul.f32 %v3086, 0.6931472
        %v3088 = vlog2.pop %v2120
        %v3089 = vmul.f32 %v3088, 0.6931472
        %v3090 = vlog2.pop %v2121
        %v3091 = vmul.f32 %v3090, 0.6931472
        %v3092 = vlog2.pop %v2122
        %v3093 = vmul.f32 %v3092, 0.6931472
        %v3094 = vlog2.pop %v2123
        %v3095 = vmul.f32 %v3094, 0.6931472
        %v3096 = vlog2.pop %v2124
        %v3097 = vmul.f32 %v3096, 0.6931472
        %v3098 = vlog2.pop %v2125
        %v3099 = vmul.f32 %v3098, 0.6931472
        %v3100 = vlog2.pop %v2126
        %v3101 = vmul.f32 %v3100, 0.6931472
        %v3102 = vlog2.pop %v2127
        %v3103 = vmul.f32 %v3102, 0.6931472
        %v3104 = vlog2.pop %v2128
        %v3105 = vmul.f32 %v3104, 0.6931472
        %v3106 = vlog2.pop %v2129
        %v3107 = vmul.f32 %v3106, 0.6931472
        %v3108 = vlog2.pop %v2130
        %v3109 = vmul.f32 %v3108, 0.6931472
        %v3110 = vlog2.pop %v2131
        %v3111 = vmul.f32 %v3110, 0.6931472
        %v3112 = vlog2.pop %v2132
        %v3113 = vmul.f32 %v3112, 0.6931472
        %v3114 = vlog2.pop %v2133
        %v3115 = vmul.f32 %v3114, 0.6931472
        %v3116 = vlog2.pop %v2134
        %v3117 = vmul.f32 %v3116, 0.6931472
        %v3118 = vlog2.pop %v2135
        %v3119 = vmul.f32 %v3118, 0.6931472
        %v3120 = vlog2.pop %v2136
        %v3121 = vmul.f32 %v3120, 0.6931472
        %v3122 = vlog2.pop %v2137
        %v3123 = vmul.f32 %v3122, 0.6931472
        %v3124 = vlog2.pop %v2138
        %v3125 = vmul.f32 %v3124, 0.6931472
        %v3126 = vlog2.pop %v2139
        %v3127 = vmul.f32 %v3126, 0.6931472
        %v3128 = vlog2.pop %v2140
        %v3129 = vmul.f32 %v3128, 0.6931472
        %v3130 = vlog2.pop %v2141
        %v3131 = vmul.f32 %v3130, 0.6931472
        %v3132 = vlog2.pop %v2142
        %v3133 = vmul.f32 %v3132, 0.6931472
        %v3134 = vlog2.pop %v2143
        %v3135 = vmul.f32 %v3134, 0.6931472
        %v3136 = vlog2.pop %v2048
        %v3137 = vmul.f32 %v3136, 0.6931472
        %v3138 = vlog2.pop %v2049
        %v3139 = vmul.f32 %v3138, 0.6931472
        %v3140 = vlog2.pop %v2050
        %v3141 = vmul.f32 %v3140, 0.6931472
        %v3142 = vlog2.pop %v2051
        %v3143 = vmul.f32 %v3142, 0.6931472
        %v3144 = vlog2.pop %v2052
        %v3145 = vmul.f32 %v3144, 0.6931472
        %v3146 = vlog2.pop %v2053
        %v3147 = vmul.f32 %v3146, 0.6931472
        %v3148 = vlog2.pop %v2054
        %v3149 = vmul.f32 %v3148, 0.6931472
        %v3150 = vlog2.pop %v2055
        %v3151 = vmul.f32 %v3150, 0.6931472
        %v3152 = vlog2.pop %v2056
        %v3153 = vmul.f32 %v3152, 0.6931472
        %v3154 = vlog2.pop %v2057
        %v3155 = vmul.f32 %v3154, 0.6931472
        %v3156 = vlog2.pop %v2058
        %v3157 = vmul.f32 %v3156, 0.6931472
        %v3158 = vlog2.pop %v2059
        %v3159 = vmul.f32 %v3158, 0.6931472
        %v3160 = vlog2.pop %v2060
        %v3161 = vmul.f32 %v3160, 0.6931472
        %v3162 = vlog2.pop %v2061
        %v3163 = vmul.f32 %v3162, 0.6931472
        %v3164 = vlog2.pop %v2062
        %v3165 = vmul.f32 %v3164, 0.6931472
        %v3166 = vlog2.pop %v2063
        %v3167 = vmul.f32 %v3166, 0.6931472
        %v3168 = vlog2.pop %v2064
        %v3169 = vmul.f32 %v3168, 0.6931472
        %v3170 = vlog2.pop %v2065
        %v3171 = vmul.f32 %v3170, 0.6931472
        %v3172 = vlog2.pop %v2066
        %v3173 = vmul.f32 %v3172, 0.6931472
        %v3174 = vlog2.pop %v2067
        %v3175 = vmul.f32 %v3174, 0.6931472
        %v3176 = vlog2.pop %v2068
        %v3177 = vmul.f32 %v3176, 0.6931472
        %v3178 = vlog2.pop %v2069
        %v3179 = vmul.f32 %v3178, 0.6931472
        %v3180 = vlog2.pop %v2070
        %v3181 = vmul.f32 %v3180, 0.6931472
        %v3182 = vlog2.pop %v2071
        %v3183 = vmul.f32 %v3182, 0.6931472
        %v3184 = vlog2.pop %v2072
        %v3185 = vmul.f32 %v3184, 0.6931472
        %v3186 = vlog2.pop %v2073
        %v3187 = vmul.f32 %v3186, 0.6931472
        %v3188 = vlog2.pop %v2074
        %v3189 = vmul.f32 %v3188, 0.6931472
        %v3190 = vlog2.pop %v2075
        %v3191 = vmul.f32 %v3190, 0.6931472
        %v3192 = vlog2.pop %v2076
        %v3193 = vmul.f32 %v3192, 0.6931472
        %v3194 = vlog2.pop %v2077
        %v3195 = vmul.f32 %v3194, 0.6931472
        %v3196 = vlog2.pop %v2078
        %v3197 = vmul.f32 %v3196, 0.6931472
        %v3198 = vlog2.pop %v2079
        %v3199 = vmul.f32 %v3198, 0.6931472
        %v3200 = vsub.f32 %v3073, %v3137
        %v3201 = vsub.f32 %v3075, %v3139
        %v3202 = vsub.f32 %v3077, %v3141
        %v3203 = vsub.f32 %v3079, %v3143
        %v3204 = vsub.f32 %v3081, %v3145
        %v3205 = vsub.f32 %v3083, %v3147
        %v3206 = vsub.f32 %v3085, %v3149
        %v3207 = vsub.f32 %v3087, %v3151
        %v3208 = vsub.f32 %v3089, %v3153
        %v3209 = vsub.f32 %v3091, %v3155
        %v3210 = vsub.f32 %v3093, %v3157
        %v3211 = vsub.f32 %v3095, %v3159
        %v3212 = vsub.f32 %v3097, %v3161
        %v3213 = vsub.f32 %v3099, %v3163
        %v3214 = vsub.f32 %v3101, %v3165
        %v3215 = vsub.f32 %v3103, %v3167
        %v3216 = vsub.f32 %v3105, %v3169
        %v3217 = vsub.f32 %v3107, %v3171
        %v3218 = vsub.f32 %v3109, %v3173
        %v3219 = vsub.f32 %v3111, %v3175
        %v3220 = vsub.f32 %v3113, %v3177
        %v3221 = vsub.f32 %v3115, %v3179
        %v3222 = vsub.f32 %v3117, %v3181
        %v3223 = vsub.f32 %v3119, %v3183
        %v3224 = vsub.f32 %v3121, %v3185
        %v3225 = vsub.f32 %v3123, %v3187
        %v3226 = vsub.f32 %v3125, %v3189
        %v3227 = vsub.f32 %v3127, %v3191
        %v3228 = vsub.f32 %v3129, %v3193
        %v3229 = vsub.f32 %v3131, %v3195
        %v3230 = vsub.f32 %v3133, %v3197
        %v3231 = vsub.f32 %v3135, %v3199
        %v3232 = vand.u32 2147483647, %v3200
        %v3233 = vand.u32 2147483647, %v3201
        %v3234 = vand.u32 2147483647, %v3202
        %v3235 = vand.u32 2147483647, %v3203
        %v3236 = vand.u32 2147483647, %v3204
        %v3237 = vand.u32 2147483647, %v3205
        %v3238 = vand.u32 2147483647, %v3206
        %v3239 = vand.u32 2147483647, %v3207
        %v3240 = vand.u32 2147483647, %v3208
        %v3241 = vand.u32 2147483647, %v3209
        %v3242 = vand.u32 2147483647, %v3210
        %v3243 = vand.u32 2147483647, %v3211
        %v3244 = vand.u32 2147483647, %v3212
        %v3245 = vand.u32 2147483647, %v3213
        %v3246 = vand.u32 2147483647, %v3214
        %v3247 = vand.u32 2147483647, %v3215
        %v3248 = vand.u32 2147483647, %v3216
        %v3249 = vand.u32 2147483647, %v3217
        %v3250 = vand.u32 2147483647, %v3218
        %v3251 = vand.u32 2147483647, %v3219
        %v3252 = vand.u32 2147483647, %v3220
        %v3253 = vand.u32 2147483647, %v3221
        %v3254 = vand.u32 2147483647, %v3222
        %v3255 = vand.u32 2147483647, %v3223
        %v3256 = vand.u32 2147483647, %v3224
        %v3257 = vand.u32 2147483647, %v3225
        %v3258 = vand.u32 2147483647, %v3226
        %v3259 = vand.u32 2147483647, %v3227
        %v3260 = vand.u32 2147483647, %v3228
        %v3261 = vand.u32 2147483647, %v3229
        %v3262 = vand.u32 2147483647, %v3230
        %v3263 = vand.u32 2147483647, %v3231
        %v3264 = vlog2.pop %v2144
        %v3265 = vmul.f32 %v3264, 0.6931472
        %v3266 = vlog2.pop %v2145
        %v3267 = vmul.f32 %v3266, 0.6931472
        %v3268 = vlog2.pop %v2146
        %v3269 = vmul.f32 %v3268, 0.6931472
        %v3270 = vlog2.pop %v2147
        %v3271 = vmul.f32 %v3270, 0.6931472
        %v3272 = vlog2.pop %v2148
        %v3273 = vmul.f32 %v3272, 0.6931472
        %v3274 = vlog2.pop %v2149
        %v3275 = vmul.f32 %v3274, 0.6931472
        %v3276 = vlog2.pop %v2150
        %v3277 = vmul.f32 %v3276, 0.6931472
        %v3278 = vlog2.pop %v2151
        %v3279 = vmul.f32 %v3278, 0.6931472
        %v3280 = vlog2.pop %v2152
        %v3281 = vmul.f32 %v3280, 0.6931472
        %v3282 = vlog2.pop %v2153
        %v3283 = vmul.f32 %v3282, 0.6931472
        %v3284 = vlog2.pop %v2154
        %v3285 = vmul.f32 %v3284, 0.6931472
        %v3286 = vlog2.pop %v2155
        %v3287 = vmul.f32 %v3286, 0.6931472
        %v3288 = vlog2.pop %v2156
        %v3289 = vmul.f32 %v3288, 0.6931472
        %v3290 = vlog2.pop %v2157
        %v3291 = vmul.f32 %v3290, 0.6931472
        %v3292 = vlog2.pop %v2158
        %v3293 = vmul.f32 %v3292, 0.6931472
        %v3294 = vlog2.pop %v2159
        %v3295 = vmul.f32 %v3294, 0.6931472
        %v3296 = vlog2.pop %v2160
        %v3297 = vmul.f32 %v3296, 0.6931472
        %v3298 = vlog2.pop %v2161
        %v3299 = vmul.f32 %v3298, 0.6931472
        %v3300 = vlog2.pop %v2162
        %v3301 = vmul.f32 %v3300, 0.6931472
        %v3302 = vlog2.pop %v2163
        %v3303 = vmul.f32 %v3302, 0.6931472
        %v3304 = vlog2.pop %v2164
        %v3305 = vmul.f32 %v3304, 0.6931472
        %v3306 = vlog2.pop %v2165
        %v3307 = vmul.f32 %v3306, 0.6931472
        %v3308 = vlog2.pop %v2166
        %v3309 = vmul.f32 %v3308, 0.6931472
        %v3310 = vlog2.pop %v2167
        %v3311 = vmul.f32 %v3310, 0.6931472
        %v3312 = vlog2.pop %v2168
        %v3313 = vmul.f32 %v3312, 0.6931472
        %v3314 = vlog2.pop %v2169
        %v3315 = vmul.f32 %v3314, 0.6931472
        %v3316 = vlog2.pop %v2170
        %v3317 = vmul.f32 %v3316, 0.6931472
        %v3318 = vlog2.pop %v2171
        %v3319 = vmul.f32 %v3318, 0.6931472
        %v3320 = vlog2.pop %v2172
        %v3321 = vmul.f32 %v3320, 0.6931472
        %v3322 = vlog2.pop %v2173
        %v3323 = vmul.f32 %v3322, 0.6931472
        %v3324 = vlog2.pop %v2174
        %v3325 = vmul.f32 %v3324, 0.6931472
        %v3326 = vlog2.pop %v2175
        %v3327 = vmul.f32 %v3326, 0.6931472
        %v3328 = vlog2.pop %v2080
        %v3329 = vmul.f32 %v3328, 0.6931472
        %v3330 = vlog2.pop %v2081
        %v3331 = vmul.f32 %v3330, 0.6931472
        %v3332 = vlog2.pop %v2082
        %v3333 = vmul.f32 %v3332, 0.6931472
        %v3334 = vlog2.pop %v2083
        %v3335 = vmul.f32 %v3334, 0.6931472
        %v3336 = vlog2.pop %v2084
        %v3337 = vmul.f32 %v3336, 0.6931472
        %v3338 = vlog2.pop %v2085
        %v3339 = vmul.f32 %v3338, 0.6931472
        %v3340 = vlog2.pop %v2086
        %v3341 = vmul.f32 %v3340, 0.6931472
        %v3342 = vlog2.pop %v2087
        %v3343 = vmul.f32 %v3342, 0.6931472
        %v3344 = vlog2.pop %v2088
        %v3345 = vmul.f32 %v3344, 0.6931472
        %v3346 = vlog2.pop %v2089
        %v3347 = vmul.f32 %v3346, 0.6931472
        %v3348 = vlog2.pop %v2090
        %v3349 = vmul.f32 %v3348, 0.6931472
        %v3350 = vlog2.pop %v2091
        %v3351 = vmul.f32 %v3350, 0.6931472
        %v3352 = vlog2.pop %v2092
        %v3353 = vmul.f32 %v3352, 0.6931472
        %v3354 = vlog2.pop %v2093
        %v3355 = vmul.f32 %v3354, 0.6931472
        %v3356 = vlog2.pop %v2094
        %v3357 = vmul.f32 %v3356, 0.6931472
        %v3358 = vlog2.pop %v2095
        %v3359 = vmul.f32 %v3358, 0.6931472
        %v3360 = vlog2.pop %v2096
        %v3361 = vmul.f32 %v3360, 0.6931472
        %v3362 = vlog2.pop %v2097
        %v3363 = vmul.f32 %v3362, 0.6931472
        %v3364 = vlog2.pop %v2098
        %v3365 = vmul.f32 %v3364, 0.6931472
        %v3366 = vlog2.pop %v2099
        %v3367 = vmul.f32 %v3366, 0.6931472
        %v3368 = vlog2.pop %v2100
        %v3369 = vmul.f32 %v3368, 0.6931472
        %v3370 = vlog2.pop %v2101
        %v3371 = vmul.f32 %v3370, 0.6931472
        %v3372 = vlog2.pop %v2102
        %v3373 = vmul.f32 %v3372, 0.6931472
        %v3374 = vlog2.pop %v2103
        %v3375 = vmul.f32 %v3374, 0.6931472
        %v3376 = vlog2.pop %v2104
        %v3377 = vmul.f32 %v3376, 0.6931472
        %v3378 = vlog2.pop %v2105
        %v3379 = vmul.f32 %v3378, 0.6931472
        %v3380 = vlog2.pop %v2106
        %v3381 = vmul.f32 %v3380, 0.6931472
        %v3382 = vlog2.pop %v2107
        %v3383 = vmul.f32 %v3382, 0.6931472
        %v3384 = vlog2.pop %v2108
        %v3385 = vmul.f32 %v3384, 0.6931472
        %v3386 = vlog2.pop %v2109
        %v3387 = vmul.f32 %v3386, 0.6931472
        %v3388 = vlog2.pop %v2110
        %v3389 = vmul.f32 %v3388, 0.6931472
        %v3390 = vlog2.pop %v2111
        %v3391 = vmul.f32 %v3390, 0.6931472
        %v3392 = vsub.f32 %v3265, %v3329
        %v3393 = vsub.f32 %v3267, %v3331
        %v3394 = vsub.f32 %v3269, %v3333
        %v3395 = vsub.f32 %v3271, %v3335
        %v3396 = vsub.f32 %v3273, %v3337
        %v3397 = vsub.f32 %v3275, %v3339
        %v3398 = vsub.f32 %v3277, %v3341
        %v3399 = vsub.f32 %v3279, %v3343
        %v3400 = vsub.f32 %v3281, %v3345
        %v3401 = vsub.f32 %v3283, %v3347
        %v3402 = vsub.f32 %v3285, %v3349
        %v3403 = vsub.f32 %v3287, %v3351
        %v3404 = vsub.f32 %v3289, %v3353
        %v3405 = vsub.f32 %v3291, %v3355
        %v3406 = vsub.f32 %v3293, %v3357
        %v3407 = vsub.f32 %v3295, %v3359
        %v3408 = vsub.f32 %v3297, %v3361
        %v3409 = vsub.f32 %v3299, %v3363
        %v3410 = vsub.f32 %v3301, %v3365
        %v3411 = vsub.f32 %v3303, %v3367
        %v3412 = vsub.f32 %v3305, %v3369
        %v3413 = vsub.f32 %v3307, %v3371
        %v3414 = vsub.f32 %v3309, %v3373
        %v3415 = vsub.f32 %v3311, %v3375
        %v3416 = vsub.f32 %v3313, %v3377
        %v3417 = vsub.f32 %v3315, %v3379
        %v3418 = vsub.f32 %v3317, %v3381
        %v3419 = vsub.f32 %v3319, %v3383
        %v3420 = vsub.f32 %v3321, %v3385
        %v3421 = vsub.f32 %v3323, %v3387
        %v3422 = vsub.f32 %v3325, %v3389
        %v3423 = vsub.f32 %v3327, %v3391
        %v3424 = vand.u32 2147483647, %v3392
        %v3425 = vand.u32 2147483647, %v3393
        %v3426 = vand.u32 2147483647, %v3394
        %v3427 = vand.u32 2147483647, %v3395
        %v3428 = vand.u32 2147483647, %v3396
        %v3429 = vand.u32 2147483647, %v3397
        %v3430 = vand.u32 2147483647, %v3398
        %v3431 = vand.u32 2147483647, %v3399
        %v3432 = vand.u32 2147483647, %v3400
        %v3433 = vand.u32 2147483647, %v3401
        %v3434 = vand.u32 2147483647, %v3402
        %v3435 = vand.u32 2147483647, %v3403
        %v3436 = vand.u32 2147483647, %v3404
        %v3437 = vand.u32 2147483647, %v3405
        %v3438 = vand.u32 2147483647, %v3406
        %v3439 = vand.u32 2147483647, %v3407
        %v3440 = vand.u32 2147483647, %v3408
        %v3441 = vand.u32 2147483647, %v3409
        %v3442 = vand.u32 2147483647, %v3410
        %v3443 = vand.u32 2147483647, %v3411
        %v3444 = vand.u32 2147483647, %v3412
        %v3445 = vand.u32 2147483647, %v3413
        %v3446 = vand.u32 2147483647, %v3414
        %v3447 = vand.u32 2147483647, %v3415
        %v3448 = vand.u32 2147483647, %v3416
        %v3449 = vand.u32 2147483647, %v3417
        %v3450 = vand.u32 2147483647, %v3418
        %v3451 = vand.u32 2147483647, %v3419
        %v3452 = vand.u32 2147483647, %v3420
        %v3453 = vand.u32 2147483647, %v3421
        %v3454 = vand.u32 2147483647, %v3422
        %v3455 = vand.u32 2147483647, %v3423
        %v3456 = vadd.f32 %v3232, %v3424
        %v3457 = vadd.f32 %v3233, %v3425
        %v3458 = vadd.f32 %v3234, %v3426
        %v3459 = vadd.f32 %v3235, %v3427
        %v3460 = vadd.f32 %v3236, %v3428
        %v3461 = vadd.f32 %v3237, %v3429
        %v3462 = vadd.f32 %v3238, %v3430
        %v3463 = vadd.f32 %v3239, %v3431
        %v3464 = vadd.f32 %v3240, %v3432
        %v3465 = vadd.f32 %v3241, %v3433
        %v3466 = vadd.f32 %v3242, %v3434
        %v3467 = vadd.f32 %v3243, %v3435
        %v3468 = vadd.f32 %v3244, %v3436
        %v3469 = vadd.f32 %v3245, %v3437
        %v3470 = vadd.f32 %v3246, %v3438
        %v3471 = vadd.f32 %v3247, %v3439
        %v3472 = vadd.f32 %v3248, %v3440
        %v3473 = vadd.f32 %v3249, %v3441
        %v3474 = vadd.f32 %v3250, %v3442
        %v3475 = vadd.f32 %v3251, %v3443
        %v3476 = vadd.f32 %v3252, %v3444
        %v3477 = vadd.f32 %v3253, %v3445
        %v3478 = vadd.f32 %v3254, %v3446
        %v3479 = vadd.f32 %v3255, %v3447
        %v3480 = vadd.f32 %v3256, %v3448
        %v3481 = vadd.f32 %v3257, %v3449
        %v3482 = vadd.f32 %v3258, %v3450
        %v3483 = vadd.f32 %v3259, %v3451
        %v3484 = vadd.f32 %v3260, %v3452
        %v3485 = vadd.f32 %v3261, %v3453
        %v3486 = vadd.f32 %v3262, %v3454
        %v3487 = vadd.f32 %v3263, %v3455
        %v3488 = vsub.f32 %v3456, %v1850
        %v3489 = vsub.f32 %v3457, %v1851
        %v3490 = vsub.f32 %v3458, %v1852
        %v3491 = vsub.f32 %v3459, %v1853
        %v3492 = vsub.f32 %v3460, %v1854
        %v3493 = vsub.f32 %v3461, %v1855
        %v3494 = vsub.f32 %v3462, %v1856
        %v3495 = vsub.f32 %v3463, %v1857
        %v3496 = vsub.f32 %v3464, %v1858
        %v3497 = vsub.f32 %v3465, %v1859
        %v3498 = vsub.f32 %v3466, %v1860
        %v3499 = vsub.f32 %v3467, %v1861
        %v3500 = vsub.f32 %v3468, %v1862
        %v3501 = vsub.f32 %v3469, %v1863
        %v3502 = vsub.f32 %v3470, %v1864
        %v3503 = vsub.f32 %v3471, %v1865
        %v3504 = vsub.f32 %v3472, %v1866
        %v3505 = vsub.f32 %v3473, %v1867
        %v3506 = vsub.f32 %v3474, %v1868
        %v3507 = vsub.f32 %v3475, %v1869
        %v3508 = vsub.f32 %v3476, %v1870
        %v3509 = vsub.f32 %v3477, %v1871
        %v3510 = vsub.f32 %v3478, %v1872
        %v3511 = vsub.f32 %v3479, %v1873
        %v3512 = vsub.f32 %v3480, %v1874
        %v3513 = vsub.f32 %v3481, %v1875
        %v3514 = vsub.f32 %v3482, %v1876
        %v3515 = vsub.f32 %v3483, %v1877
        %v3516 = vsub.f32 %v3484, %v1878
        %v3517 = vsub.f32 %v3485, %v1879
        %v3518 = vsub.f32 %v3486, %v1880
        %v3519 = vsub.f32 %v3487, %v1881
        %v3520 = vsub.f32 %v2406, %v2182
        %v3521 = vsub.f32 %v2413, %v2189
        %v3522 = vsub.f32 %v2420, %v2196
        %v3523 = vsub.f32 %v2427, %v2203
        %v3524 = vsub.f32 %v2434, %v2210
        %v3525 = vsub.f32 %v2441, %v2217
        %v3526 = vsub.f32 %v2448, %v2224
        %v3527 = vsub.f32 %v2455, %v2231
        %v3528 = vsub.f32 %v2462, %v2238
        %v3529 = vsub.f32 %v2469, %v2245
        %v3530 = vsub.f32 %v2476, %v2252
        %v3531 = vsub.f32 %v2483, %v2259
        %v3532 = vsub.f32 %v2490, %v2266
        %v3533 = vsub.f32 %v2497, %v2273
        %v3534 = vsub.f32 %v2504, %v2280
        %v3535 = vsub.f32 %v2511, %v2287
        %v3536 = vsub.f32 %v2518, %v2294
        %v3537 = vsub.f32 %v2525, %v2301
        %v3538 = vsub.f32 %v2532, %v2308
        %v3539 = vsub.f32 %v2539, %v2315
        %v3540 = vsub.f32 %v2546, %v2322
        %v3541 = vsub.f32 %v2553, %v2329
        %v3542 = vsub.f32 %v2560, %v2336
        %v3543 = vsub.f32 %v2567, %v2343
        %v3544 = vsub.f32 %v2574, %v2350
        %v3545 = vsub.f32 %v2581, %v2357
        %v3546 = vsub.f32 %v2588, %v2364
        %v3547 = vsub.f32 %v2595, %v2371
        %v3548 = vsub.f32 %v2602, %v2378
        %v3549 = vsub.f32 %v2609, %v2385
        %v3550 = vsub.f32 %v2616, %v2392
        %v3551 = vsub.f32 %v2623, %v2399
        %v3552 = vmul.f32 %v3520, %v3520
        %v3553 = vmul.f32 %v3521, %v3521
        %v3554 = vmul.f32 %v3522, %v3522
        %v3555 = vmul.f32 %v3523, %v3523
        %v3556 = vmul.f32 %v3524, %v3524
        %v3557 = vmul.f32 %v3525, %v3525
        %v3558 = vmul.f32 %v3526, %v3526
        %v3559 = vmul.f32 %v3527, %v3527
        %v3560 = vmul.f32 %v3528, %v3528
        %v3561 = vmul.f32 %v3529, %v3529
        %v3562 = vmul.f32 %v3530, %v3530
        %v3563 = vmul.f32 %v3531, %v3531
        %v3564 = vmul.f32 %v3532, %v3532
        %v3565 = vmul.f32 %v3533, %v3533
        %v3566 = vmul.f32 %v3534, %v3534
        %v3567 = vmul.f32 %v3535, %v3535
        %v3568 = vmul.f32 %v3536, %v3536
        %v3569 = vmul.f32 %v3537, %v3537
        %v3570 = vmul.f32 %v3538, %v3538
        %v3571 = vmul.f32 %v3539, %v3539
        %v3572 = vmul.f32 %v3540, %v3540
        %v3573 = vmul.f32 %v3541, %v3541
        %v3574 = vmul.f32 %v3542, %v3542
        %v3575 = vmul.f32 %v3543, %v3543
        %v3576 = vmul.f32 %v3544, %v3544
        %v3577 = vmul.f32 %v3545, %v3545
        %v3578 = vmul.f32 %v3546, %v3546
        %v3579 = vmul.f32 %v3547, %v3547
        %v3580 = vmul.f32 %v3548, %v3548
        %v3581 = vmul.f32 %v3549, %v3549
        %v3582 = vmul.f32 %v3550, %v3550
        %v3583 = vmul.f32 %v3551, %v3551
        %v3584 = vsub.f32 %v2854, %v2630
        %v3585 = vsub.f32 %v2861, %v2637
        %v3586 = vsub.f32 %v2868, %v2644
        %v3587 = vsub.f32 %v2875, %v2651
        %v3588 = vsub.f32 %v2882, %v2658
        %v3589 = vsub.f32 %v2889, %v2665
        %v3590 = vsub.f32 %v2896, %v2672
        %v3591 = vsub.f32 %v2903, %v2679
        %v3592 = vsub.f32 %v2910, %v2686
        %v3593 = vsub.f32 %v2917, %v2693
        %v3594 = vsub.f32 %v2924, %v2700
        %v3595 = vsub.f32 %v2931, %v2707
        %v3596 = vsub.f32 %v2938, %v2714
        %v3597 = vsub.f32 %v2945, %v2721
        %v3598 = vsub.f32 %v2952, %v2728
        %v3599 = vsub.f32 %v2959, %v2735
        %v3600 = vsub.f32 %v2966, %v2742
        %v3601 = vsub.f32 %v2973, %v2749
        %v3602 = vsub.f32 %v2980, %v2756
        %v3603 = vsub.f32 %v2987, %v2763
        %v3604 = vsub.f32 %v2994, %v2770
        %v3605 = vsub.f32 %v3001, %v2777
        %v3606 = vsub.f32 %v3008, %v2784
        %v3607 = vsub.f32 %v3015, %v2791
        %v3608 = vsub.f32 %v3022, %v2798
        %v3609 = vsub.f32 %v3029, %v2805
        %v3610 = vsub.f32 %v3036, %v2812
        %v3611 = vsub.f32 %v3043, %v2819
        %v3612 = vsub.f32 %v3050, %v2826
        %v3613 = vsub.f32 %v3057, %v2833
        %v3614 = vsub.f32 %v3064, %v2840
        %v3615 = vsub.f32 %v3071, %v2847
        %v3616 = vmul.f32 %v3584, %v3584
        %v3617 = vmul.f32 %v3585, %v3585
        %v3618 = vmul.f32 %v3586, %v3586
        %v3619 = vmul.f32 %v3587, %v3587
        %v3620 = vmul.f32 %v3588, %v3588
        %v3621 = vmul.f32 %v3589, %v3589
        %v3622 = vmul.f32 %v3590, %v3590
        %v3623 = vmul.f32 %v3591, %v3591
        %v3624 = vmul.f32 %v3592, %v3592
        %v3625 = vmul.f32 %v3593, %v3593
        %v3626 = vmul.f32 %v3594, %v3594
        %v3627 = vmul.f32 %v3595, %v3595
        %v3628 = vmul.f32 %v3596, %v3596
        %v3629 = vmul.f32 %v3597, %v3597
        %v3630 = vmul.f32 %v3598, %v3598
        %v3631 = vmul.f32 %v3599, %v3599
        %v3632 = vmul.f32 %v3600, %v3600
        %v3633 = vmul.f32 %v3601, %v3601
        %v3634 = vmul.f32 %v3602, %v3602
        %v3635 = vmul.f32 %v3603, %v3603
        %v3636 = vmul.f32 %v3604, %v3604
        %v3637 = vmul.f32 %v3605, %v3605
        %v3638 = vmul.f32 %v3606, %v3606
        %v3639 = vmul.f32 %v3607, %v3607
        %v3640 = vmul.f32 %v3608, %v3608
        %v3641 = vmul.f32 %v3609, %v3609
        %v3642 = vmul.f32 %v3610, %v3610
        %v3643 = vmul.f32 %v3611, %v3611
        %v3644 = vmul.f32 %v3612, %v3612
        %v3645 = vmul.f32 %v3613, %v3613
        %v3646 = vmul.f32 %v3614, %v3614
        %v3647 = vmul.f32 %v3615, %v3615
        %v3648 = vadd.f32 %v3552, %v3616
        %v3649 = vadd.f32 %v3553, %v3617
        %v3650 = vadd.f32 %v3554, %v3618
        %v3651 = vadd.f32 %v3555, %v3619
        %v3652 = vadd.f32 %v3556, %v3620
        %v3653 = vadd.f32 %v3557, %v3621
        %v3654 = vadd.f32 %v3558, %v3622
        %v3655 = vadd.f32 %v3559, %v3623
        %v3656 = vadd.f32 %v3560, %v3624
        %v3657 = vadd.f32 %v3561, %v3625
        %v3658 = vadd.f32 %v3562, %v3626
        %v3659 = vadd.f32 %v3563, %v3627
        %v3660 = vadd.f32 %v3564, %v3628
        %v3661 = vadd.f32 %v3565, %v3629
        %v3662 = vadd.f32 %v3566, %v3630
        %v3663 = vadd.f32 %v3567, %v3631
        %v3664 = vadd.f32 %v3568, %v3632
        %v3665 = vadd.f32 %v3569, %v3633
        %v3666 = vadd.f32 %v3570, %v3634
        %v3667 = vadd.f32 %v3571, %v3635
        %v3668 = vadd.f32 %v3572, %v3636
        %v3669 = vadd.f32 %v3573, %v3637
        %v3670 = vadd.f32 %v3574, %v3638
        %v3671 = vadd.f32 %v3575, %v3639
        %v3672 = vadd.f32 %v3576, %v3640
        %v3673 = vadd.f32 %v3577, %v3641
        %v3674 = vadd.f32 %v3578, %v3642
        %v3675 = vadd.f32 %v3579, %v3643
        %v3676 = vadd.f32 %v3580, %v3644
        %v3677 = vadd.f32 %v3581, %v3645
        %v3678 = vadd.f32 %v3582, %v3646
        %v3679 = vadd.f32 %v3583, %v3647
        %v3680 = vsub.f32 %v3648, %v1914
        %v3681 = vsub.f32 %v3649, %v1915
        %v3682 = vsub.f32 %v3650, %v1916
        %v3683 = vsub.f32 %v3651, %v1917
        %v3684 = vsub.f32 %v3652, %v1918
        %v3685 = vsub.f32 %v3653, %v1919
        %v3686 = vsub.f32 %v3654, %v1920
        %v3687 = vsub.f32 %v3655, %v1921
        %v3688 = vsub.f32 %v3656, %v1922
        %v3689 = vsub.f32 %v3657, %v1923
        %v3690 = vsub.f32 %v3658, %v1924
        %v3691 = vsub.f32 %v3659, %v1925
        %v3692 = vsub.f32 %v3660, %v1926
        %v3693 = vsub.f32 %v3661, %v1927
        %v3694 = vsub.f32 %v3662, %v1928
        %v3695 = vsub.f32 %v3663, %v1929
        %v3696 = vsub.f32 %v3664, %v1930
        %v3697 = vsub.f32 %v3665, %v1931
        %v3698 = vsub.f32 %v3666, %v1932
        %v3699 = vsub.f32 %v3667, %v1933
        %v3700 = vsub.f32 %v3668, %v1934
        %v3701 = vsub.f32 %v3669, %v1935
        %v3702 = vsub.f32 %v3670, %v1936
        %v3703 = vsub.f32 %v3671, %v1937
        %v3704 = vsub.f32 %v3672, %v1938
        %v3705 = vsub.f32 %v3673, %v1939
        %v3706 = vsub.f32 %v3674, %v1940
        %v3707 = vsub.f32 %v3675, %v1941
        %v3708 = vsub.f32 %v3676, %v1942
        %v3709 = vsub.f32 %v3677, %v1943
        %v3710 = vsub.f32 %v3678, %v1944
        %v3711 = vsub.f32 %v3679, %v1945
        %v3712 = vadd.f32 %v2112, %v2144
        %v3713 = vadd.f32 %v2113, %v2145
        %v3714 = vadd.f32 %v2114, %v2146
        %v3715 = vadd.f32 %v2115, %v2147
        %v3716 = vadd.f32 %v2116, %v2148
        %v3717 = vadd.f32 %v2117, %v2149
        %v3718 = vadd.f32 %v2118, %v2150
        %v3719 = vadd.f32 %v2119, %v2151
        %v3720 = vadd.f32 %v2120, %v2152
        %v3721 = vadd.f32 %v2121, %v2153
        %v3722 = vadd.f32 %v2122, %v2154
        %v3723 = vadd.f32 %v2123, %v2155
        %v3724 = vadd.f32 %v2124, %v2156
        %v3725 = vadd.f32 %v2125, %v2157
        %v3726 = vadd.f32 %v2126, %v2158
        %v3727 = vadd.f32 %v2127, %v2159
        %v3728 = vadd.f32 %v2128, %v2160
        %v3729 = vadd.f32 %v2129, %v2161
        %v3730 = vadd.f32 %v2130, %v2162
        %v3731 = vadd.f32 %v2131, %v2163
        %v3732 = vadd.f32 %v2132, %v2164
        %v3733 = vadd.f32 %v2133, %v2165
        %v3734 = vadd.f32 %v2134, %v2166
        %v3735 = vadd.f32 %v2135, %v2167
        %v3736 = vadd.f32 %v2136, %v2168
        %v3737 = vadd.f32 %v2137, %v2169
        %v3738 = vadd.f32 %v2138, %v2170
        %v3739 = vadd.f32 %v2139, %v2171
        %v3740 = vadd.f32 %v2140, %v2172
        %v3741 = vadd.f32 %v2141, %v2173
        %v3742 = vadd.f32 %v2142, %v2174
        %v3743 = vadd.f32 %v2143, %v2175
        %v3744 = vsub.f32 %v3712, %v1210
        %v3745 = vsub.f32 %v3713, %v1211
        %v3746 = vsub.f32 %v3714, %v1212
        %v3747 = vsub.f32 %v3715, %v1213
        %v3748 = vsub.f32 %v3716, %v1214
        %v3749 = vsub.f32 %v3717, %v1215
        %v3750 = vsub.f32 %v3718, %v1216
        %v3751 = vsub.f32 %v3719, %v1217
        %v3752 = vsub.f32 %v3720, %v1218
        %v3753 = vsub.f32 %v3721, %v1219
        %v3754 = vsub.f32 %v3722, %v1220
        %v3755 = vsub.f32 %v3723, %v1221
        %v3756 = vsub.f32 %v3724, %v1222
        %v3757 = vsub.f32 %v3725, %v1223
        %v3758 = vsub.f32 %v3726, %v1224
        %v3759 = vsub.f32 %v3727, %v1225
        %v3760 = vsub.f32 %v3728, %v1226
        %v3761 = vsub.f32 %v3729, %v1227
        %v3762 = vsub.f32 %v3730, %v1228
        %v3763 = vsub.f32 %v3731, %v1229
        %v3764 = vsub.f32 %v3732, %v1230
        %v3765 = vsub.f32 %v3733, %v1231
        %v3766 = vsub.f32 %v3734, %v1232
        %v3767 = vsub.f32 %v3735, %v1233
        %v3768 = vsub.f32 %v3736, %v1234
        %v3769 = vsub.f32 %v3737, %v1235
        %v3770 = vsub.f32 %v3738, %v1236
        %v3771 = vsub.f32 %v3739, %v1237
        %v3772 = vsub.f32 %v3740, %v1238
        %v3773 = vsub.f32 %v3741, %v1239
        %v3774 = vsub.f32 %v3742, %v1240
        %v3775 = vsub.f32 %v3743, %v1241
        %v3776 = vld [vmem:[#allocation3] sm:$0xff]
        %vm3777 = vcmask 7168
        %v3778 = vsel %vm3777, %v3488, 0.0
        %v3779 = vsel %vm3777, %v3489, 0.0
        %v3780 = vadd.f32 %v3778, %v3779
        %v3781 = vsel %vm3777, %v3490, 0.0
        %v3782 = vadd.f32 %v3780, %v3781
        %v3783 = vsel %vm3777, %v3491, 0.0
        %v3784 = vadd.f32 %v3782, %v3783
        %v3785 = vsel %vm3777, %v3492, 0.0
        %v3786 = vadd.f32 %v3784, %v3785
        %v3787 = vsel %vm3777, %v3493, 0.0
        %v3788 = vadd.f32 %v3786, %v3787
        %v3789 = vsel %vm3777, %v3494, 0.0
        %v3790 = vadd.f32 %v3788, %v3789
        %v3791 = vsel %vm3777, %v3495, 0.0
        %v3792 = vadd.f32 %v3790, %v3791
        %v3793 = vsel %vm3777, %v3496, 0.0
        %v3794 = vadd.f32 %v3792, %v3793
        %v3795 = vsel %vm3777, %v3497, 0.0
        %v3796 = vadd.f32 %v3794, %v3795
        %v3797 = vsel %vm3777, %v3498, 0.0
        %v3798 = vadd.f32 %v3796, %v3797
        %v3799 = vsel %vm3777, %v3499, 0.0
        %v3800 = vadd.f32 %v3798, %v3799
        %v3801 = vsel %vm3777, %v3500, 0.0
        %v3802 = vadd.f32 %v3800, %v3801
        %v3803 = vsel %vm3777, %v3501, 0.0
        %v3804 = vadd.f32 %v3802, %v3803
        %v3805 = vsel %vm3777, %v3502, 0.0
        %v3806 = vadd.f32 %v3804, %v3805
        %v3807 = vsel %vm3777, %v3503, 0.0
        %v3808 = vadd.f32 %v3806, %v3807
        %v3809 = vsel %vm3777, %v3504, 0.0
        %v3810 = vadd.f32 %v3808, %v3809
        %v3811 = vsel %vm3777, %v3505, 0.0
        %v3812 = vadd.f32 %v3810, %v3811
        %v3813 = vsel %vm3777, %v3506, 0.0
        %v3814 = vadd.f32 %v3812, %v3813
        %v3815 = vsel %vm3777, %v3507, 0.0
        %v3816 = vadd.f32 %v3814, %v3815
        %v3817 = vsel %vm3777, %v3508, 0.0
        %v3818 = vadd.f32 %v3816, %v3817
        %v3819 = vsel %vm3777, %v3509, 0.0
        %v3820 = vadd.f32 %v3818, %v3819
        %v3821 = vsel %vm3777, %v3510, 0.0
        %v3822 = vadd.f32 %v3820, %v3821
        %v3823 = vsel %vm3777, %v3511, 0.0
        %v3824 = vadd.f32 %v3822, %v3823
        %v3825 = vsel %vm3777, %v3512, 0.0
        %v3826 = vadd.f32 %v3824, %v3825
        %v3827 = vsel %vm3777, %v3513, 0.0
        %v3828 = vadd.f32 %v3826, %v3827
        %v3829 = vsel %vm3777, %v3514, 0.0
        %v3830 = vadd.f32 %v3828, %v3829
        %v3831 = vsel %vm3777, %v3515, 0.0
        %v3832 = vadd.f32 %v3830, %v3831
        %v3833 = vsel %vm3777, %v3516, 0.0
        %v3834 = vadd.f32 %v3832, %v3833
        %v3835 = vsel %vm3777, %v3517, 0.0
        %v3836 = vadd.f32 %v3834, %v3835
        %v3837 = vsel %vm3777, %v3518, 0.0
        %v3838 = vadd.f32 %v3836, %v3837
        %v3839 = vsel %vm3777, %v3519, 0.0
        %v3840 = vadd.f32 %v3838, %v3839
        %v3841 = vadd.f32 %v3776, %v3840
        %3842 = vst.msk [vmem:[#allocation3] sm:$0xff] %vm3777, %v3841
        %v3843 = vld [vmem:[#allocation4] sm:$0xff]
        %v3844 = vsel %vm3777, %v3680, 0.0
        %v3845 = vsel %vm3777, %v3681, 0.0
        %v3846 = vadd.f32 %v3844, %v3845
        %v3847 = vsel %vm3777, %v3682, 0.0
        %v3848 = vadd.f32 %v3846, %v3847
        %v3849 = vsel %vm3777, %v3683, 0.0
        %v3850 = vadd.f32 %v3848, %v3849
        %v3851 = vsel %vm3777, %v3684, 0.0
        %v3852 = vadd.f32 %v3850, %v3851
        %v3853 = vsel %vm3777, %v3685, 0.0
        %v3854 = vadd.f32 %v3852, %v3853
        %v3855 = vsel %vm3777, %v3686, 0.0
        %v3856 = vadd.f32 %v3854, %v3855
        %v3857 = vsel %vm3777, %v3687, 0.0
        %v3858 = vadd.f32 %v3856, %v3857
        %v3859 = vsel %vm3777, %v3688, 0.0
        %v3860 = vadd.f32 %v3858, %v3859
        %v3861 = vsel %vm3777, %v3689, 0.0
        %v3862 = vadd.f32 %v3860, %v3861
        %v3863 = vsel %vm3777, %v3690, 0.0
        %v3864 = vadd.f32 %v3862, %v3863
        %v3865 = vsel %vm3777, %v3691, 0.0
        %v3866 = vadd.f32 %v3864, %v3865
        %v3867 = vsel %vm3777, %v3692, 0.0
        %v3868 = vadd.f32 %v3866, %v3867
        %v3869 = vsel %vm3777, %v3693, 0.0
        %v3870 = vadd.f32 %v3868, %v3869
        %v3871 = vsel %vm3777, %v3694, 0.0
        %v3872 = vadd.f32 %v3870, %v3871
        %v3873 = vsel %vm3777, %v3695, 0.0
        %v3874 = vadd.f32 %v3872, %v3873
        %v3875 = vsel %vm3777, %v3696, 0.0
        %v3876 = vadd.f32 %v3874, %v3875
        %v3877 = vsel %vm3777, %v3697, 0.0
        %v3878 = vadd.f32 %v3876, %v3877
        %v3879 = vsel %vm3777, %v3698, 0.0
        %v3880 = vadd.f32 %v3878, %v3879
        %v3881 = vsel %vm3777, %v3699, 0.0
        %v3882 = vadd.f32 %v3880, %v3881
        %v3883 = vsel %vm3777, %v3700, 0.0
        %v3884 = vadd.f32 %v3882, %v3883
        %v3885 = vsel %vm3777, %v3701, 0.0
        %v3886 = vadd.f32 %v3884, %v3885
        %v3887 = vsel %vm3777, %v3702, 0.0
        %v3888 = vadd.f32 %v3886, %v3887
        %v3889 = vsel %vm3777, %v3703, 0.0
        %v3890 = vadd.f32 %v3888, %v3889
        %v3891 = vsel %vm3777, %v3704, 0.0
        %v3892 = vadd.f32 %v3890, %v3891
        %v3893 = vsel %vm3777, %v3705, 0.0
        %v3894 = vadd.f32 %v3892, %v3893
        %v3895 = vsel %vm3777, %v3706, 0.0
        %v3896 = vadd.f32 %v3894, %v3895
        %v3897 = vsel %vm3777, %v3707, 0.0
        %v3898 = vadd.f32 %v3896, %v3897
        %v3899 = vsel %vm3777, %v3708, 0.0
        %v3900 = vadd.f32 %v3898, %v3899
        %v3901 = vsel %vm3777, %v3709, 0.0
        %v3902 = vadd.f32 %v3900, %v3901
        %v3903 = vsel %vm3777, %v3710, 0.0
        %v3904 = vadd.f32 %v3902, %v3903
        %v3905 = vsel %vm3777, %v3711, 0.0
        %v3906 = vadd.f32 %v3904, %v3905
        %v3907 = vadd.f32 %v3843, %v3906
        %3908 = vst.msk [vmem:[#allocation4] sm:$0xff] %vm3777, %v3907
        %v3909 = vld [vmem:[#allocation5] sm:$0xff]
        %v3910 = vsel %vm3777, %v3744, 0.0
        %v3911 = vsel %vm3777, %v3745, 0.0
        %v3912 = vadd.f32 %v3910, %v3911
        %v3913 = vsel %vm3777, %v3746, 0.0
        %v3914 = vadd.f32 %v3912, %v3913
        %v3915 = vsel %vm3777, %v3747, 0.0
        %v3916 = vadd.f32 %v3914, %v3915
        %v3917 = vsel %vm3777, %v3748, 0.0
        %v3918 = vadd.f32 %v3916, %v3917
        %v3919 = vsel %vm3777, %v3749, 0.0
        %v3920 = vadd.f32 %v3918, %v3919
        %v3921 = vsel %vm3777, %v3750, 0.0
        %v3922 = vadd.f32 %v3920, %v3921
        %v3923 = vsel %vm3777, %v3751, 0.0
        %v3924 = vadd.f32 %v3922, %v3923
        %v3925 = vsel %vm3777, %v3752, 0.0
        %v3926 = vadd.f32 %v3924, %v3925
        %v3927 = vsel %vm3777, %v3753, 0.0
        %v3928 = vadd.f32 %v3926, %v3927
        %v3929 = vsel %vm3777, %v3754, 0.0
        %v3930 = vadd.f32 %v3928, %v3929
        %v3931 = vsel %vm3777, %v3755, 0.0
        %v3932 = vadd.f32 %v3930, %v3931
        %v3933 = vsel %vm3777, %v3756, 0.0
        %v3934 = vadd.f32 %v3932, %v3933
        %v3935 = vsel %vm3777, %v3757, 0.0
        %v3936 = vadd.f32 %v3934, %v3935
        %v3937 = vsel %vm3777, %v3758, 0.0
        %v3938 = vadd.f32 %v3936, %v3937
        %v3939 = vsel %vm3777, %v3759, 0.0
        %v3940 = vadd.f32 %v3938, %v3939
        %v3941 = vsel %vm3777, %v3760, 0.0
        %v3942 = vadd.f32 %v3940, %v3941
        %v3943 = vsel %vm3777, %v3761, 0.0
        %v3944 = vadd.f32 %v3942, %v3943
        %v3945 = vsel %vm3777, %v3762, 0.0
        %v3946 = vadd.f32 %v3944, %v3945
        %v3947 = vsel %vm3777, %v3763, 0.0
        %v3948 = vadd.f32 %v3946, %v3947
        %v3949 = vsel %vm3777, %v3764, 0.0
        %v3950 = vadd.f32 %v3948, %v3949
        %v3951 = vsel %vm3777, %v3765, 0.0
        %v3952 = vadd.f32 %v3950, %v3951
        %v3953 = vsel %vm3777, %v3766, 0.0
        %v3954 = vadd.f32 %v3952, %v3953
        %v3955 = vsel %vm3777, %v3767, 0.0
        %v3956 = vadd.f32 %v3954, %v3955
        %v3957 = vsel %vm3777, %v3768, 0.0
        %v3958 = vadd.f32 %v3956, %v3957
        %v3959 = vsel %vm3777, %v3769, 0.0
        %v3960 = vadd.f32 %v3958, %v3959
        %v3961 = vsel %vm3777, %v3770, 0.0
        %v3962 = vadd.f32 %v3960, %v3961
        %v3963 = vsel %vm3777, %v3771, 0.0
        %v3964 = vadd.f32 %v3962, %v3963
        %v3965 = vsel %vm3777, %v3772, 0.0
        %v3966 = vadd.f32 %v3964, %v3965
        %v3967 = vsel %vm3777, %v3773, 0.0
        %v3968 = vadd.f32 %v3966, %v3967
        %v3969 = vsel %vm3777, %v3774, 0.0
        %v3970 = vadd.f32 %v3968, %v3969
        %v3971 = vsel %vm3777, %v3775, 0.0
        %v3972 = vadd.f32 %v3970, %v3971
        %v3973 = vadd.f32 %v3909, %v3972
        %3974 = vst.msk [vmem:[#allocation5] sm:$0xff] %vm3777, %v3973
        // Predicated region
        $region46: #{tpu_custom_call.1} parent=27 // pred_check
          %p3975 = pneg %p226
        $region47: #{tpu_custom_call.1} parent=27 // pred_check_branch
          %3977 = sbr.rel (%p3975) target = $region49
        $region48: #{tpu_custom_call.1} parent=27 // pred_region
          %v3978 = vld [vmem:[#allocation3] sm:$0xff]
          %3979 = vadd.xlane.f32.xlu0 %v3978
          %v3980 = vpop.xlane.xlu0 %3979
          %v3981 = vrot.slane %v3980, 4
          %v3982 = vadd.f32 %v3980, %v3981
          %v3983 = vrot.slane %v3982, 2
          %v3984 = vadd.f32 %v3982, %v3983
          %v3985 = vrot.slane %v3984, 1
          %v3986 = vadd.f32 %v3984, %v3985
          %s3987 = vtos %v3986
          %v3988 = vld [vmem:[#allocation4] sm:$0xff]
          %3989 = vadd.xlane.f32.xlu0 %v3988
          %v3990 = vpop.xlane.xlu0 %3989
          %v3991 = vrot.slane %v3990, 4
          %v3992 = vadd.f32 %v3990, %v3991
          %v3993 = vrot.slane %v3992, 2
          %v3994 = vadd.f32 %v3992, %v3993
          %v3995 = vrot.slane %v3994, 1
          %v3996 = vadd.f32 %v3994, %v3995
          %s3997 = vtos %v3996
          %v3998 = vld [vmem:[#allocation5] sm:$0xff]
          %3999 = vadd.xlane.f32.xlu0 %v3998
          %v4000 = vpop.xlane.xlu0 %3999
          %v4001 = vrot.slane %v4000, 4
          %v4002 = vadd.f32 %v4000, %v4001
          %v4003 = vrot.slane %v4002, 2
          %v4004 = vadd.f32 %v4002, %v4003
          %v4005 = vrot.slane %v4004, 1
          %v4006 = vadd.f32 %v4004, %v4005
          %s4007 = vtos %v4006
          %v4008 = vlaneseq
          %v4009 = vshrl.u32 %v4008, 7
          %vm4010 = vcmp.eq.s32.totalorder %v4009, 0
          %vm4011 = vcmp.eq.s32.totalorder %v4009, 1
          %vm4012 = vcmp.eq.s32.totalorder %v4009, 2
          %v4013 = vstv %s4007
          %v4014 = vsel %vm4012, %v4013, 0.0
          %v4015 = vstv %s3997
          %v4016 = vsel %vm4011, %v4015, %v4014
          %v4017 = vstv %s3987
          %v4018 = vsel %vm4010, %v4017, %v4016
          %4019 = vst [vmem:[%s220] sm:$0xff] %v4018
        $region49: #{tpu_custom_call.1} parent=27 // pred_fallthru
          _
        %s4020 = sand.u32 %s99, 1
        %s4021 = scalar_lea.sflag [#allocation8], %s4020
        %s4022 = sand.u32 %s99, 1
        %s4023 = smul.addr %s4022, 8
        %s4024 = scalar_lea.vmem [#allocation11], %s4023
        // Predicated region
        $region50: #{tpu_custom_call.1} parent=27 // pred_check
          %p4025 = pneg %p109
        $region51: #{tpu_custom_call.1} parent=27 // pred_check_branch
          %4027 = sbr.rel (%p4025) target = $region53
        $region52: #{tpu_custom_call.1} parent=27 // pred_region
          %s4029 = ssub.s32 128, 128
          %4030 = vsyncadd %s4021, %s4029
          %s4031 = smul.addr %s27, 128
          %s4032 = scalar_lea.hbm %s3, %s4031
          %s4034 = sshll.u32 %s4024, 4
          %s4035 = int_to_ptr.vmem [resolvable:$true] %s4034
          %4037 = dma.vmem_to_hbm [thread:$0]  %s4035, 128, %s4032, %s4021
        $region53: #{tpu_custom_call.1} parent=27 // pred_fallthru
          _
      $region28: #{tpu_custom_call.1} parent=5 // pred_fallthru
        _
      %p4038 = scmp.le.s32.totalorder 2, %s18
      // Predicated region
      $region54: #{tpu_custom_call.1} parent=5 // pred_check
        %p4039 = pneg %p4038
      $region55: #{tpu_custom_call.1} parent=5 // pred_check_branch
        %4041 = sbr.rel (%p4039) target = $region57
      $region56: #{tpu_custom_call.1} parent=5 // pred_region
        %s4042 = ssub.s32 %s18, 2
        // Predicated region
        $region58: #{tpu_custom_call.1} parent=56 // pred_check
          %p4043 = pneg %p115
        $region59: #{tpu_custom_call.1} parent=56 // pred_check_branch
          %4045 = sbr.rel (%p4043) target = $region61
        $region60: #{tpu_custom_call.1} parent=56 // pred_region
          %s4046 = sand.u32 %s100, 1
          %s4047 = scalar_lea.sflag [#allocation8], %s4046
          %s4048 = sand.u32 %s100, 1
          %s4049 = smul.addr %s4048, 8
          %s4050 = scalar_lea.vmem [#allocation11], %s4049
          %4051 = dma.done %s4047, 128
        $region61: #{tpu_custom_call.1} parent=56 // pred_fallthru
          _
      $region57: #{tpu_custom_call.1} parent=5 // pred_fallthru
        _
    $region6: #{tpu_custom_call.1} parent=1 // loop_footer
      %s22 = sadd.s32 1, %s18
    $region7: #{tpu_custom_call.1} parent=1 // loop_footer_branch
      %17 = sbr.rel target = $region3
    $region8: #{tpu_custom_call.1} parent=1 // loop_exit
      _
    %4052 = vsyncpa [#allocation7], 1
    %s4053 = scalar_lea.sflag [#allocation7], 1
    %4054 = vsyncpa %s4053, 1
    %4055 = vsyncpa [#allocation10], 1
    %s4056 = scalar_lea.sflag [#allocation10], 1
    %4057 = vsyncpa %s4056, 1
    %4058 = vsyncpa [#allocation8], 1
    %s4059 = scalar_lea.sflag [#allocation8], 1
    %4060 = vsyncpa %s4059, 1

</llo_original>
